<compile_context>
chip_gen: v6e
topology: v6e:2x2x1
jax: 0.10.0
libtpu: 0.0.40
codegen_flags: <defaults>
</compile_context>

<pallas_src>
import functools
import math

import jax
import jax.numpy as jnp
from jax.experimental import pallas as pl
from jax.experimental.pallas import tpu as pltpu


NEG_SLOPE = 0.01  # PyTorch LeakyReLU default negative_slope


def _round_up(n, m):
    return ((n + m - 1) // m) * m


def _leaky_relu(x):
    return jnp.where(x > 0, x, NEG_SLOPE * x)


# ---------------------------------------------------------------------------
# Fused forward kernel
# ---------------------------------------------------------------------------
def _fused_kernel(x_ref, w1_ref, b1_ref, wc_ref, bc_ref,
                  fc1w_hbm, fc1b_ref, fc2w_ref, fc2b_ref,
                  o_ref,
                  fc1w_vmem, act_ref, dma_sem,
                  *, B, L, C, n_conv):
    """Whole Conv_PO_NSC forward in one kernel invocation.

    x_ref     : (B*L, 1)           raw trajectory samples, row = b*L + t
    w1_ref    : (3, C)             layer-1 taps (cin = 1); row k multiplies x[t+k-1]
    b1_ref    : (1, C)
    wc_ref    : (n_conv, 3, C, C)  layers 2..4, [layer, tap, cin, cout]
    bc_ref    : (n_conv, 1, C)
    fc1w_hbm  : (L, C, H1p)        fc1 weight; stays in HBM (pl.ANY), DMA'd manually
    fc1b_ref  : (1, H1p)
    fc2w_ref  : (H1p, H2p)
    fc2b_ref  : (1, H2p)
    o_ref     : (B, H2p)
    fc1w_vmem : VMEM scratch (L, C, H1p)   prefetch target for fc1w_hbm
    act_ref   : VMEM scratch (B, L, C)     staging buffer for the conv output
    dma_sem   : DMA semaphore
    """
    BL = B * L
    H1p = fc1w_vmem.shape[-1]

    # Kick off the fc1 weight transfer immediately; it streams HBM -> VMEM
    # while the conv stack runs and is awaited right before the fc1 dots.
    fc1_copy = pltpu.make_async_copy(fc1w_hbm, fc1w_vmem, dma_sem)
    fc1_copy.start()

    # Trajectory-boundary masks (Conv1d padding=1 semantics), built once at
    # full (BL, C) width so no per-layer lane broadcasts are needed.
    row = jax.lax.broadcasted_iota(jnp.int32, (BL, C), 0)
    if (L & (L - 1)) == 0:
        t_in_traj = row & (L - 1)
    else:
        t_in_traj = row % L
    keep_m1 = t_in_traj != 0          # row has a valid left neighbour
    keep_p1 = t_in_traj != (L - 1)    # row has a valid right neighbour

    # ---- layer 1: Conv1d(1 -> C, k=3, pad=1) + LeakyReLU (pure VPU) -------
    x = x_ref[...].astype(jnp.float32)                       # (BL, 1)
    w1 = w1_ref[...].astype(jnp.float32)                     # (3, C)
    tap0 = x * w1[0:1, :]            # weight of x[t-1], currently sitting at row t
    tap1 = x * w1[1:2, :]
    tap2 = x * w1[2:3, :]
    y = tap1 + b1_ref[...]
    y = y + jnp.where(keep_m1, pltpu.roll(tap0, shift=1, axis=0), 0.0)
    y = y + jnp.where(keep_p1, pltpu.roll(tap2, shift=BL - 1, axis=0), 0.0)
    act = _leaky_relu(y)                                      # (BL, C)

    # ---- layers 2..4: three accumulating per-tap MXU matmuls + LeakyReLU --
    for li in range(n_conv):
        x_m1 = jnp.where(keep_m1, pltpu.roll(act, shift=1, axis=0), 0.0)
        x_p1 = jnp.where(keep_p1, pltpu.roll(act, shift=BL - 1, axis=0), 0.0)
        y = jnp.dot(act, wc_ref[li, 1].astype(jnp.float32),
                    preferred_element_type=jnp.float32)
        y = y + jnp.dot(x_m1, wc_ref[li, 0].astype(jnp.float32),
                        preferred_element_type=jnp.float32)
        y = y + jnp.dot(x_p1, wc_ref[li, 2].astype(jnp.float32),
                        preferred_element_type=jnp.float32)
        y = y + bc_ref[li]
        act = _leaky_relu(y)

    # Stage the conv output in VMEM as (B, L, C) via tile-aligned row slices
    # (L is a multiple of 8) — no (B, L*C) flatten / VMEM relayout.
    for b in range(B):
        act_ref[b] = act[b * L:(b + 1) * L, :]

    # ---- fc1 + LeakyReLU: unrolled contraction over trajectory position ---
    fc1_copy.wait()
    h = jnp.zeros((B, H1p), dtype=jnp.float32)
    for t in range(L):
        a_t = act_ref[:, t, :]                                # (B, C)
        h = h + jnp.dot(a_t, fc1w_vmem[t].astype(jnp.float32),
                        preferred_element_type=jnp.float32)
    h = _leaky_relu(h + fc1b_ref[...])

    # ---- fc2 + ReLU --------------------------------------------------------
    y2 = jnp.dot(h, fc2w_ref[...].astype(jnp.float32),
                 preferred_element_type=jnp.float32) + fc2b_ref[...]
    o_ref[...] = jnp.maximum(y2, 0.0).astype(o_ref.dtype)


# ---------------------------------------------------------------------------
# Parameter construction (deterministic; matches module shapes / init dists)
# ---------------------------------------------------------------------------
def init_params(key, y_dim=1, traj_len=32, n_filters=128, output_size=2,
                param_dtype=jnp.float32):
    """TPU-native weight layouts:
      w1    : (3, C)         layer-1 Conv1d taps, [k, cout]      (cin = 1)
      wc    : (3, 3, C, C)   layers 2..4, [layer, k, cin, cout]
      fc1_w : (L, C, H1p)    fc1_w[t, c, h] = W_pt[h, c*L + t]  (channel-major
                             view(B,-1) folded in), lanes padded 100 -> 128
      fc2_w : (H1p, H2p)     transposed + zero-padded
    TODO(synk): loading real PyTorch checkpoints requires the corresponding
    (Cout, Cin, K) -> (K, Cin, Cout) and (H, C*L) -> (L, C, H) permutations.
    """
    if y_dim != 1:
        raise NotImplementedError("y_dim != 1 not supported")
    C, L, h1 = n_filters, traj_len, 100
    H1p = _round_up(h1, 128)
    H2p = _round_up(output_size, 128)
    ks = jax.random.split(key, 12)

    def u(k, shape, bound):
        return jax.random.uniform(k, shape, jnp.float32, -bound, bound)

    # Conv1d default init: U(-1/sqrt(fan_in), +), fan_in = cin * kernel_size.
    b1w = 1.0 / math.sqrt(y_dim * 3.0)
    w1 = u(ks[0], (3, C), b1w)
    b1 = u(ks[1], (1, C), b1w)

    bcw = 1.0 / math.sqrt(C * 3.0)
    wc = jnp.stack([u(ks[2 + i], (3, C, C), bcw) for i in range(3)])   # (3,3,C,C)
    bc = jnp.stack([u(ks[5 + i], (1, C), bcw) for i in range(3)])      # (3,1,C)

    # fc1: xavier_uniform_ over the (100, L*C) matrix; sampled directly in the
    # folded (L, C, h1) layout (iid uniform, distribution unchanged).
    fin1 = L * C
    lim1 = math.sqrt(6.0 / (fin1 + h1))
    fc1_w = jnp.pad(u(ks[8], (L, C, h1), lim1),
                    ((0, 0), (0, 0), (0, H1p - h1)))
    fc1_b = jnp.pad(u(ks[9], (1, h1), 1.0 / math.sqrt(fin1)),
                    ((0, 0), (0, H1p - h1)))

    # fc2: the module also applies xavier_uniform_ to fc2.weight.
    lim2 = math.sqrt(6.0 / (h1 + output_size))
    fc2_w = jnp.pad(u(ks[10], (h1, output_size), lim2),
                    ((0, H1p - h1), (0, H2p - output_size)))
    fc2_b = jnp.pad(u(ks[11], (1, output_size), 1.0 / math.sqrt(h1)),
                    ((0, 0), (0, H2p - output_size)))

    wd = lambda a: a.astype(param_dtype)
    return {"w1": wd(w1), "b1": b1, "wc": wd(wc), "bc": bc,
            "fc1_w": wd(fc1_w), "fc1_b": fc1_b,
            "fc2_w": wd(fc2_w), "fc2_b": fc2_b}


# ---------------------------------------------------------------------------
# Forward pass wrapper
# ---------------------------------------------------------------------------
def conv_po_nsc_forward(x_ncl, params, output_size):
    """x_ncl: (B, y_dim, traj_len) — same layout as the PyTorch module input."""
    B, cin, L = x_ncl.shape
    if cin != 1:
        # TODO(synk): y_dim > 1 would need a matmul path for layer 1; the
        # module's default config (y_dim = 1) is the only one implemented.
        raise NotImplementedError("layer-1 special case assumes y_dim == 1")

    w1, b1 = params["w1"], params["b1"]
    wc, bc = params["wc"], params["bc"]
    fc1_w, fc1_b = params["fc1_w"], params["fc1_b"]
    fc2_w, fc2_b = params["fc2_w"], params["fc2_b"]

    n_conv, _, _, C = wc.shape
    H1p = fc1_w.shape[-1]
    H2p = fc2_w.shape[-1]
    assert fc1_w.shape[0] == L, "fc1 weight traj_len mismatch"

    # (B, 1, L) -> (B*L, 1); a pure reshape (no transpose needed for cin == 1).
    x2d = x_ncl.reshape(B * L, 1).astype(jnp.float32)

    flops = (
        6 * B * L * C                                  # layer 1 (VPU)
        + n_conv * 2 * (B * L) * C * (3 * C)           # conv layers 2..4
        + 2 * B * (L * C) * H1p                        # fc1
        + 2 * B * H1p * H2p                            # fc2
    )
    bytes_accessed = sum(int(a.size) * a.dtype.itemsize for a in
                         (x2d, w1, b1, wc, bc, fc1_w, fc1_b, fc2_w, fc2_b))
    bytes_accessed += B * H2p * 4                      # output

    kernel = functools.partial(_fused_kernel, B=B, L=L, C=C, n_conv=n_conv)

    def vmem_spec():
        return pl.BlockSpec(memory_space=pltpu.MemorySpace.VMEM)

    out = pl.pallas_call(
        kernel,
        out_shape=jax.ShapeDtypeStruct((B, H2p), jnp.float32),
        in_specs=[
            vmem_spec(),                               # x2d
            vmem_spec(),                               # w1
            vmem_spec(),                               # b1
            vmem_spec(),                               # wc
            vmem_spec(),                               # bc
            pl.BlockSpec(memory_space=pl.ANY),         # fc1_w: stays in HBM
            vmem_spec(),                               # fc1_b
            vmem_spec(),                               # fc2_w
            vmem_spec(),                               # fc2_b
        ],
        out_specs=vmem_spec(),
        scratch_shapes=[
            pltpu.VMEM((L, C, H1p), fc1_w.dtype),      # fc1 weight prefetch target
            pltpu.VMEM((B, L, C), jnp.float32),        # conv-output staging buffer
            pltpu.SemaphoreType.DMA(()),               # fc1 weight DMA semaphore
        ],
        cost_estimate=pl.CostEstimate(flops=int(flops), transcendentals=0,
                                      bytes_accessed=int(bytes_accessed)),
    )(x2d, w1, b1, wc, bc, fc1_w, fc1_b, fc2_w, fc2_b)

    return out[:, :output_size]


# ---------------------------------------------------------------------------
if __name__ == "__main__":
    Y_DIM, TRAJ_LEN, N_FILTERS, OUTPUT_SIZE = 1, 32, 128, 2
    BATCH = 2

    key = jax.random.PRNGKey(0)
    k_params, k_x = jax.random.split(key)
    params = init_params(k_params, Y_DIM, TRAJ_LEN, N_FILTERS, OUTPUT_SIZE)
    x = jax.random.normal(k_x, (BATCH, Y_DIM, TRAJ_LEN), jnp.float32)

    fwd = jax.jit(functools.partial(conv_po_nsc_forward, output_size=OUTPUT_SIZE))
    out = fwd(x, params)
    jax.block_until_ready(out)

    assert out.shape == (BATCH, OUTPUT_SIZE), out.shape
    assert bool(jnp.all(jnp.isfinite(out)))
    assert bool(jnp.all(out >= 0.0))  # final ReLU
    print("KERNEL_OK")
</pallas_src>

<mosaic_0001>
module attributes {stable_mosaic.version = 11 : i64} {
  func.func @_fused_kernel(%arg0: memref<64x1xf32, #tpu.memory_space<vmem>>, %arg1: memref<3x128xf32, #tpu.memory_space<vmem>>, %arg2: memref<1x128xf32, #tpu.memory_space<vmem>>, %arg3: memref<3x3x128x128xf32, #tpu.memory_space<vmem>>, %arg4: memref<3x1x128xf32, #tpu.memory_space<vmem>>, %arg5: memref<32x128x128xf32, #tpu.memory_space<any>>, %arg6: memref<1x128xf32, #tpu.memory_space<vmem>>, %arg7: memref<128x128xf32, #tpu.memory_space<vmem>>, %arg8: memref<1x128xf32, #tpu.memory_space<vmem>>, %arg9: memref<2x128xf32, #tpu.memory_space<vmem>>, %arg10: memref<32x128x128xf32, #tpu.memory_space<vmem>>, %arg11: memref<2x32x128xf32, #tpu.memory_space<vmem>>, %arg12: memref<!tpu.dma_semaphore, #tpu.memory_space<semaphore_mem>>) attributes {dimension_semantics = [], scalar_prefetch = 0 : i64, scratch_operands = 3 : i64, tpu.core_type = #tpu.core_type<tc>} {
    tpu.enqueue_dma source(%arg5 : memref<32x128x128xf32, #tpu.memory_space<any>>) target(%arg10 : memref<32x128x128xf32, #tpu.memory_space<vmem>>) target_semaphore(%arg12 : memref<!tpu.dma_semaphore, #tpu.memory_space<semaphore_mem>>)
    %0 = tpu.iota {dimensions = array<i32: 0>} : vector<64x128xi32>
    %c31_i32 = arith.constant 31 : i32
    %1 = vector.broadcast %c31_i32 : i32 to vector<64x128xi32>
    %2 = arith.andi %0, %1 : vector<64x128xi32>
    %c0_i32 = arith.constant 0 : i32
    %3 = vector.broadcast %c0_i32 : i32 to vector<64x128xi32>
    %4 = arith.cmpi ne, %2, %3 : vector<64x128xi32>
    %c31_i32_0 = arith.constant 31 : i32
    %5 = vector.broadcast %c31_i32_0 : i32 to vector<64x128xi32>
    %6 = arith.cmpi ne, %2, %5 : vector<64x128xi32>
    %c0 = arith.constant 0 : index
    %c0_1 = arith.constant 0 : index
    %7 = vector.load %arg0[%c0, %c0_1] : memref<64x1xf32, #tpu.memory_space<vmem>>, vector<64x1xf32>
    %c0_2 = arith.constant 0 : index
    %c0_3 = arith.constant 0 : index
    %8 = vector.load %arg1[%c0_2, %c0_3] : memref<3x128xf32, #tpu.memory_space<vmem>>, vector<3x128xf32>
    %9 = vector.extract_strided_slice %8 {offsets = [0, 0], sizes = [1, 128], strides = [1, 1]} : vector<3x128xf32> to vector<1x128xf32>
    %10 = vector.broadcast %7 : vector<64x1xf32> to vector<64x128xf32>
    %11 = vector.broadcast %9 : vector<1x128xf32> to vector<64x128xf32>
    %12 = arith.mulf %10, %11 : vector<64x128xf32>
    %13 = vector.extract_strided_slice %8 {offsets = [1, 0], sizes = [1, 128], strides = [1, 1]} : vector<3x128xf32> to vector<1x128xf32>
    %14 = vector.broadcast %7 : vector<64x1xf32> to vector<64x128xf32>
    %15 = vector.broadcast %13 : vector<1x128xf32> to vector<64x128xf32>
    %16 = arith.mulf %14, %15 : vector<64x128xf32>
    %17 = vector.extract_strided_slice %8 {offsets = [2, 0], sizes = [1, 128], strides = [1, 1]} : vector<3x128xf32> to vector<1x128xf32>
    %18 = vector.broadcast %7 : vector<64x1xf32> to vector<64x128xf32>
    %19 = vector.broadcast %17 : vector<1x128xf32> to vector<64x128xf32>
    %20 = arith.mulf %18, %19 : vector<64x128xf32>
    %c0_4 = arith.constant 0 : index
    %c0_5 = arith.constant 0 : index
    %21 = vector.load %arg2[%c0_4, %c0_5] : memref<1x128xf32, #tpu.memory_space<vmem>>, vector<1x128xf32>
    %22 = vector.broadcast %21 : vector<1x128xf32> to vector<64x128xf32>
    %23 = arith.addf %16, %22 : vector<64x128xf32>
    %c1_i32 = arith.constant 1 : i32
    %24 = tpu.dynamic_rotate %12 by %c1_i32 dim 0 : vector<64x128xf32>, i32 -> vector<64x128xf32>
    %cst = arith.constant 0.000000e+00 : f32
    %25 = vector.broadcast %cst : f32 to vector<64x128xf32>
    %26 = arith.select %4, %24, %25 : vector<64x128xi1>, vector<64x128xf32>
    %27 = arith.addf %23, %26 : vector<64x128xf32>
    %c63_i32 = arith.constant 63 : i32
    %28 = tpu.dynamic_rotate %20 by %c63_i32 dim 0 : vector<64x128xf32>, i32 -> vector<64x128xf32>
    %cst_6 = arith.constant 0.000000e+00 : f32
    %29 = vector.broadcast %cst_6 : f32 to vector<64x128xf32>
    %30 = arith.select %6, %28, %29 : vector<64x128xi1>, vector<64x128xf32>
    %31 = arith.addf %27, %30 : vector<64x128xf32>
    %cst_7 = arith.constant 0.000000e+00 : f32
    %32 = vector.broadcast %cst_7 : f32 to vector<64x128xf32>
    %33 = arith.cmpf ogt, %31, %32 : vector<64x128xf32>
    %cst_8 = arith.constant 0.00999999977 : f32
    %34 = vector.broadcast %cst_8 : f32 to vector<64x128xf32>
    %35 = arith.mulf %34, %31 : vector<64x128xf32>
    %36 = arith.select %33, %31, %35 : vector<64x128xi1>, vector<64x128xf32>
    %c1_i32_9 = arith.constant 1 : i32
    %37 = tpu.dynamic_rotate %36 by %c1_i32_9 dim 0 : vector<64x128xf32>, i32 -> vector<64x128xf32>
    %cst_10 = arith.constant 0.000000e+00 : f32
    %38 = vector.broadcast %cst_10 : f32 to vector<64x128xf32>
    %39 = arith.select %4, %37, %38 : vector<64x128xi1>, vector<64x128xf32>
    %c63_i32_11 = arith.constant 63 : i32
    %40 = tpu.dynamic_rotate %36 by %c63_i32_11 dim 0 : vector<64x128xf32>, i32 -> vector<64x128xf32>
    %cst_12 = arith.constant 0.000000e+00 : f32
    %41 = vector.broadcast %cst_12 : f32 to vector<64x128xf32>
    %42 = arith.select %6, %40, %41 : vector<64x128xi1>, vector<64x128xf32>
    %c0_13 = arith.constant 0 : index
    %c1 = arith.constant 1 : index
    %c0_14 = arith.constant 0 : index
    %c0_15 = arith.constant 0 : index
    %43 = vector.load %arg3[%c0_13, %c1, %c0_14, %c0_15] : memref<3x3x128x128xf32, #tpu.memory_space<vmem>>, vector<1x1x128x128xf32>
    %44 = vector.shape_cast %43 : vector<1x1x128x128xf32> to vector<128x128xf32>
    %cst_16 = arith.constant dense<0.000000e+00> : vector<64x128xf32>
    %45 = tpu.matmul %36, %44, %cst_16 {dimension_numbers = #tpu.dot_dimension_numbers<[1], [0], [0], [1], [0, 0, 1, 1], [], []>} : vector<64x128xf32>, vector<128x128xf32>, vector<64x128xf32> -> vector<64x128xf32>
    %c0_17 = arith.constant 0 : index
    %c0_18 = arith.constant 0 : index
    %c0_19 = arith.constant 0 : index
    %c0_20 = arith.constant 0 : index
    %46 = vector.load %arg3[%c0_17, %c0_18, %c0_19, %c0_20] : memref<3x3x128x128xf32, #tpu.memory_space<vmem>>, vector<1x1x128x128xf32>
    %47 = vector.shape_cast %46 : vector<1x1x128x128xf32> to vector<128x128xf32>
    %cst_21 = arith.constant dense<0.000000e+00> : vector<64x128xf32>
    %48 = tpu.matmul %39, %47, %cst_21 {dimension_numbers = #tpu.dot_dimension_numbers<[1], [0], [0], [1], [0, 0, 1, 1], [], []>} : vector<64x128xf32>, vector<128x128xf32>, vector<64x128xf32> -> vector<64x128xf32>
    %49 = arith.addf %45, %48 : vector<64x128xf32>
    %c0_22 = arith.constant 0 : index
    %c2 = arith.constant 2 : index
    %c0_23 = arith.constant 0 : index
    %c0_24 = arith.constant 0 : index
    %50 = vector.load %arg3[%c0_22, %c2, %c0_23, %c0_24] : memref<3x3x128x128xf32, #tpu.memory_space<vmem>>, vector<1x1x128x128xf32>
    %51 = vector.shape_cast %50 : vector<1x1x128x128xf32> to vector<128x128xf32>
    %cst_25 = arith.constant dense<0.000000e+00> : vector<64x128xf32>
    %52 = tpu.matmul %42, %51, %cst_25 {dimension_numbers = #tpu.dot_dimension_numbers<[1], [0], [0], [1], [0, 0, 1, 1], [], []>} : vector<64x128xf32>, vector<128x128xf32>, vector<64x128xf32> -> vector<64x128xf32>
    %53 = arith.addf %49, %52 : vector<64x128xf32>
    %c0_26 = arith.constant 0 : index
    %c0_27 = arith.constant 0 : index
    %c0_28 = arith.constant 0 : index
    %54 = vector.load %arg4[%c0_26, %c0_27, %c0_28] : memref<3x1x128xf32, #tpu.memory_space<vmem>>, vector<1x1x128xf32>
    %55 = vector.shape_cast %54 : vector<1x1x128xf32> to vector<1x128xf32>
    %56 = vector.broadcast %55 : vector<1x128xf32> to vector<64x128xf32>
    %57 = arith.addf %53, %56 : vector<64x128xf32>
    %cst_29 = arith.constant 0.000000e+00 : f32
    %58 = vector.broadcast %cst_29 : f32 to vector<64x128xf32>
    %59 = arith.cmpf ogt, %57, %58 : vector<64x128xf32>
    %cst_30 = arith.constant 0.00999999977 : f32
    %60 = vector.broadcast %cst_30 : f32 to vector<64x128xf32>
    %61 = arith.mulf %60, %57 : vector<64x128xf32>
    %62 = arith.select %59, %57, %61 : vector<64x128xi1>, vector<64x128xf32>
    %c1_i32_31 = arith.constant 1 : i32
    %63 = tpu.dynamic_rotate %62 by %c1_i32_31 dim 0 : vector<64x128xf32>, i32 -> vector<64x128xf32>
    %cst_32 = arith.constant 0.000000e+00 : f32
    %64 = vector.broadcast %cst_32 : f32 to vector<64x128xf32>
    %65 = arith.select %4, %63, %64 : vector<64x128xi1>, vector<64x128xf32>
    %c63_i32_33 = arith.constant 63 : i32
    %66 = tpu.dynamic_rotate %62 by %c63_i32_33 dim 0 : vector<64x128xf32>, i32 -> vector<64x128xf32>
    %cst_34 = arith.constant 0.000000e+00 : f32
    %67 = vector.broadcast %cst_34 : f32 to vector<64x128xf32>
    %68 = arith.select %6, %66, %67 : vector<64x128xi1>, vector<64x128xf32>
    %c1_35 = arith.constant 1 : index
    %c1_36 = arith.constant 1 : index
    %c0_37 = arith.constant 0 : index
    %c0_38 = arith.constant 0 : index
    %69 = vector.load %arg3[%c1_35, %c1_36, %c0_37, %c0_38] : memref<3x3x128x128xf32, #tpu.memory_space<vmem>>, vector<1x1x128x128xf32>
    %70 = vector.shape_cast %69 : vector<1x1x128x128xf32> to vector<128x128xf32>
    %cst_39 = arith.constant dense<0.000000e+00> : vector<64x128xf32>
    %71 = tpu.matmul %62, %70, %cst_39 {dimension_numbers = #tpu.dot_dimension_numbers<[1], [0], [0], [1], [0, 0, 1, 1], [], []>} : vector<64x128xf32>, vector<128x128xf32>, vector<64x128xf32> -> vector<64x128xf32>
    %c1_40 = arith.constant 1 : index
    %c0_41 = arith.constant 0 : index
    %c0_42 = arith.constant 0 : index
    %c0_43 = arith.constant 0 : index
    %72 = vector.load %arg3[%c1_40, %c0_41, %c0_42, %c0_43] : memref<3x3x128x128xf32, #tpu.memory_space<vmem>>, vector<1x1x128x128xf32>
    %73 = vector.shape_cast %72 : vector<1x1x128x128xf32> to vector<128x128xf32>
    %cst_44 = arith.constant dense<0.000000e+00> : vector<64x128xf32>
    %74 = tpu.matmul %65, %73, %cst_44 {dimension_numbers = #tpu.dot_dimension_numbers<[1], [0], [0], [1], [0, 0, 1, 1], [], []>} : vector<64x128xf32>, vector<128x128xf32>, vector<64x128xf32> -> vector<64x128xf32>
    %75 = arith.addf %71, %74 : vector<64x128xf32>
    %c1_45 = arith.constant 1 : index
    %c2_46 = arith.constant 2 : index
    %c0_47 = arith.constant 0 : index
    %c0_48 = arith.constant 0 : index
    %76 = vector.load %arg3[%c1_45, %c2_46, %c0_47, %c0_48] : memref<3x3x128x128xf32, #tpu.memory_space<vmem>>, vector<1x1x128x128xf32>
    %77 = vector.shape_cast %76 : vector<1x1x128x128xf32> to vector<128x128xf32>
    %cst_49 = arith.constant dense<0.000000e+00> : vector<64x128xf32>
    %78 = tpu.matmul %68, %77, %cst_49 {dimension_numbers = #tpu.dot_dimension_numbers<[1], [0], [0], [1], [0, 0, 1, 1], [], []>} : vector<64x128xf32>, vector<128x128xf32>, vector<64x128xf32> -> vector<64x128xf32>
    %79 = arith.addf %75, %78 : vector<64x128xf32>
    %c1_50 = arith.constant 1 : index
    %c0_51 = arith.constant 0 : index
    %c0_52 = arith.constant 0 : index
    %80 = vector.load %arg4[%c1_50, %c0_51, %c0_52] : memref<3x1x128xf32, #tpu.memory_space<vmem>>, vector<1x1x128xf32>
    %81 = vector.shape_cast %80 : vector<1x1x128xf32> to vector<1x128xf32>
    %82 = vector.broadcast %81 : vector<1x128xf32> to vector<64x128xf32>
    %83 = arith.addf %79, %82 : vector<64x128xf32>
    %cst_53 = arith.constant 0.000000e+00 : f32
    %84 = vector.broadcast %cst_53 : f32 to vector<64x128xf32>
    %85 = arith.cmpf ogt, %83, %84 : vector<64x128xf32>
    %cst_54 = arith.constant 0.00999999977 : f32
    %86 = vector.broadcast %cst_54 : f32 to vector<64x128xf32>
    %87 = arith.mulf %86, %83 : vector<64x128xf32>
    %88 = arith.select %85, %83, %87 : vector<64x128xi1>, vector<64x128xf32>
    %c1_i32_55 = arith.constant 1 : i32
    %89 = tpu.dynamic_rotate %88 by %c1_i32_55 dim 0 : vector<64x128xf32>, i32 -> vector<64x128xf32>
    %cst_56 = arith.constant 0.000000e+00 : f32
    %90 = vector.broadcast %cst_56 : f32 to vector<64x128xf32>
    %91 = arith.select %4, %89, %90 : vector<64x128xi1>, vector<64x128xf32>
    %c63_i32_57 = arith.constant 63 : i32
    %92 = tpu.dynamic_rotate %88 by %c63_i32_57 dim 0 : vector<64x128xf32>, i32 -> vector<64x128xf32>
    %cst_58 = arith.constant 0.000000e+00 : f32
    %93 = vector.broadcast %cst_58 : f32 to vector<64x128xf32>
    %94 = arith.select %6, %92, %93 : vector<64x128xi1>, vector<64x128xf32>
    %c2_59 = arith.constant 2 : index
    %c1_60 = arith.constant 1 : index
    %c0_61 = arith.constant 0 : index
    %c0_62 = arith.constant 0 : index
    %95 = vector.load %arg3[%c2_59, %c1_60, %c0_61, %c0_62] : memref<3x3x128x128xf32, #tpu.memory_space<vmem>>, vector<1x1x128x128xf32>
    %96 = vector.shape_cast %95 : vector<1x1x128x128xf32> to vector<128x128xf32>
    %cst_63 = arith.constant dense<0.000000e+00> : vector<64x128xf32>
    %97 = tpu.matmul %88, %96, %cst_63 {dimension_numbers = #tpu.dot_dimension_numbers<[1], [0], [0], [1], [0, 0, 1, 1], [], []>} : vector<64x128xf32>, vector<128x128xf32>, vector<64x128xf32> -> vector<64x128xf32>
    %c2_64 = arith.constant 2 : index
    %c0_65 = arith.constant 0 : index
    %c0_66 = arith.constant 0 : index
    %c0_67 = arith.constant 0 : index
    %98 = vector.load %arg3[%c2_64, %c0_65, %c0_66, %c0_67] : memref<3x3x128x128xf32, #tpu.memory_space<vmem>>, vector<1x1x128x128xf32>
    %99 = vector.shape_cast %98 : vector<1x1x128x128xf32> to vector<128x128xf32>
    %cst_68 = arith.constant dense<0.000000e+00> : vector<64x128xf32>
    %100 = tpu.matmul %91, %99, %cst_68 {dimension_numbers = #tpu.dot_dimension_numbers<[1], [0], [0], [1], [0, 0, 1, 1], [], []>} : vector<64x128xf32>, vector<128x128xf32>, vector<64x128xf32> -> vector<64x128xf32>
    %101 = arith.addf %97, %100 : vector<64x128xf32>
    %c2_69 = arith.constant 2 : index
    %c2_70 = arith.constant 2 : index
    %c0_71 = arith.constant 0 : index
    %c0_72 = arith.constant 0 : index
    %102 = vector.load %arg3[%c2_69, %c2_70, %c0_71, %c0_72] : memref<3x3x128x128xf32, #tpu.memory_space<vmem>>, vector<1x1x128x128xf32>
    %103 = vector.shape_cast %102 : vector<1x1x128x128xf32> to vector<128x128xf32>
    %cst_73 = arith.constant dense<0.000000e+00> : vector<64x128xf32>
    %104 = tpu.matmul %94, %103, %cst_73 {dimension_numbers = #tpu.dot_dimension_numbers<[1], [0], [0], [1], [0, 0, 1, 1], [], []>} : vector<64x128xf32>, vector<128x128xf32>, vector<64x128xf32> -> vector<64x128xf32>
    %105 = arith.addf %101, %104 : vector<64x128xf32>
    %c2_74 = arith.constant 2 : index
    %c0_75 = arith.constant 0 : index
    %c0_76 = arith.constant 0 : index
    %106 = vector.load %arg4[%c2_74, %c0_75, %c0_76] : memref<3x1x128xf32, #tpu.memory_space<vmem>>, vector<1x1x128xf32>
    %107 = vector.shape_cast %106 : vector<1x1x128xf32> to vector<1x128xf32>
    %108 = vector.broadcast %107 : vector<1x128xf32> to vector<64x128xf32>
    %109 = arith.addf %105, %108 : vector<64x128xf32>
    %cst_77 = arith.constant 0.000000e+00 : f32
    %110 = vector.broadcast %cst_77 : f32 to vector<64x128xf32>
    %111 = arith.cmpf ogt, %109, %110 : vector<64x128xf32>
    %cst_78 = arith.constant 0.00999999977 : f32
    %112 = vector.broadcast %cst_78 : f32 to vector<64x128xf32>
    %113 = arith.mulf %112, %109 : vector<64x128xf32>
    %114 = arith.select %111, %109, %113 : vector<64x128xi1>, vector<64x128xf32>
    %115 = vector.extract_strided_slice %114 {offsets = [0, 0], sizes = [32, 128], strides = [1, 1]} : vector<64x128xf32> to vector<32x128xf32>
    %c0_79 = arith.constant 0 : index
    %c0_80 = arith.constant 0 : index
    %c0_81 = arith.constant 0 : index
    %116 = vector.load %arg11[%c0_79, %c0_80, %c0_81] : memref<2x32x128xf32, #tpu.memory_space<vmem>>, vector<1x32x128xf32>
    %117 = vector.shape_cast %116 : vector<1x32x128xf32> to vector<32x128xf32>
    %118 = vector.shape_cast %115 : vector<32x128xf32> to vector<1x32x128xf32>
    tpu.vector_store %arg11[%c0_79, %c0_80, %c0_81], %118 {strides = array<i32>} : memref<2x32x128xf32, #tpu.memory_space<vmem>>, vector<1x32x128xf32>,
    %119 = vector.extract_strided_slice %114 {offsets = [32, 0], sizes = [32, 128], strides = [1, 1]} : vector<64x128xf32> to vector<32x128xf32>
    %c1_82 = arith.constant 1 : index
    %c0_83 = arith.constant 0 : index
    %c0_84 = arith.constant 0 : index
    %120 = vector.load %arg11[%c1_82, %c0_83, %c0_84] : memref<2x32x128xf32, #tpu.memory_space<vmem>>, vector<1x32x128xf32>
    %121 = vector.shape_cast %120 : vector<1x32x128xf32> to vector<32x128xf32>
    %122 = vector.shape_cast %119 : vector<32x128xf32> to vector<1x32x128xf32>
    tpu.vector_store %arg11[%c1_82, %c0_83, %c0_84], %122 {strides = array<i32>} : memref<2x32x128xf32, #tpu.memory_space<vmem>>, vector<1x32x128xf32>,
    tpu.wait_dma2 semaphore(%arg12 : memref<!tpu.dma_semaphore, #tpu.memory_space<semaphore_mem>>) src(%arg5 : memref<32x128x128xf32, #tpu.memory_space<any>>) dst(%arg10 : memref<32x128x128xf32, #tpu.memory_space<vmem>>)
    %cst_85 = arith.constant 0.000000e+00 : f32
    %123 = vector.broadcast %cst_85 : f32 to vector<2x128xf32>
    %c0_86 = arith.constant 0 : index
    %c0_87 = arith.constant 0 : index
    %c0_88 = arith.constant 0 : index
    %124 = vector.load %arg11[%c0_86, %c0_87, %c0_88] : memref<2x32x128xf32, #tpu.memory_space<vmem>>, vector<2x1x128xf32>
    %125 = vector.shape_cast %124 : vector<2x1x128xf32> to vector<2x128xf32>
    %c0_89 = arith.constant 0 : index
    %c0_90 = arith.constant 0 : index
    %c0_91 = arith.constant 0 : index
    %126 = vector.load %arg10[%c0_89, %c0_90, %c0_91] : memref<32x128x128xf32, #tpu.memory_space<vmem>>, vector<1x128x128xf32>
    %127 = vector.shape_cast %126 : vector<1x128x128xf32> to vector<128x128xf32>
    %cst_92 = arith.constant dense<0.000000e+00> : vector<2x128xf32>
    %128 = tpu.matmul %125, %127, %cst_92 {dimension_numbers = #tpu.dot_dimension_numbers<[1], [0], [0], [1], [0, 0, 1, 1], [], []>} : vector<2x128xf32>, vector<128x128xf32>, vector<2x128xf32> -> vector<2x128xf32>
    %129 = arith.addf %123, %128 : vector<2x128xf32>
    %c0_93 = arith.constant 0 : index
    %c1_94 = arith.constant 1 : index
    %c0_95 = arith.constant 0 : index
    %130 = vector.load %arg11[%c0_93, %c1_94, %c0_95] : memref<2x32x128xf32, #tpu.memory_space<vmem>>, vector<2x1x128xf32>
    %131 = vector.shape_cast %130 : vector<2x1x128xf32> to vector<2x128xf32>
    %c1_96 = arith.constant 1 : index
    %c0_97 = arith.constant 0 : index
    %c0_98 = arith.constant 0 : index
    %132 = vector.load %arg10[%c1_96, %c0_97, %c0_98] : memref<32x128x128xf32, #tpu.memory_space<vmem>>, vector<1x128x128xf32>
    %133 = vector.shape_cast %132 : vector<1x128x128xf32> to vector<128x128xf32>
    %cst_99 = arith.constant dense<0.000000e+00> : vector<2x128xf32>
    %134 = tpu.matmul %131, %133, %cst_99 {dimension_numbers = #tpu.dot_dimension_numbers<[1], [0], [0], [1], [0, 0, 1, 1], [], []>} : vector<2x128xf32>, vector<128x128xf32>, vector<2x128xf32> -> vector<2x128xf32>
    %135 = arith.addf %129, %134 : vector<2x128xf32>
    %c0_100 = arith.constant 0 : index
    %c2_101 = arith.constant 2 : index
    %c0_102 = arith.constant 0 : index
    %136 = vector.load %arg11[%c0_100, %c2_101, %c0_102] : memref<2x32x128xf32, #tpu.memory_space<vmem>>, vector<2x1x128xf32>
    %137 = vector.shape_cast %136 : vector<2x1x128xf32> to vector<2x128xf32>
    %c2_103 = arith.constant 2 : index
    %c0_104 = arith.constant 0 : index
    %c0_105 = arith.constant 0 : index
    %138 = vector.load %arg10[%c2_103, %c0_104, %c0_105] : memref<32x128x128xf32, #tpu.memory_space<vmem>>, vector<1x128x128xf32>
    %139 = vector.shape_cast %138 : vector<1x128x128xf32> to vector<128x128xf32>
    %cst_106 = arith.constant dense<0.000000e+00> : vector<2x128xf32>
    %140 = tpu.matmul %137, %139, %cst_106 {dimension_numbers = #tpu.dot_dimension_numbers<[1], [0], [0], [1], [0, 0, 1, 1], [], []>} : vector<2x128xf32>, vector<128x128xf32>, vector<2x128xf32> -> vector<2x128xf32>
    %141 = arith.addf %135, %140 : vector<2x128xf32>
    %c0_107 = arith.constant 0 : index
    %c3 = arith.constant 3 : index
    %c0_108 = arith.constant 0 : index
    %142 = vector.load %arg11[%c0_107, %c3, %c0_108] : memref<2x32x128xf32, #tpu.memory_space<vmem>>, vector<2x1x128xf32>
    %143 = vector.shape_cast %142 : vector<2x1x128xf32> to vector<2x128xf32>
    %c3_109 = arith.constant 3 : index
    %c0_110 = arith.constant 0 : index
    %c0_111 = arith.constant 0 : index
    %144 = vector.load %arg10[%c3_109, %c0_110, %c0_111] : memref<32x128x128xf32, #tpu.memory_space<vmem>>, vector<1x128x128xf32>
    %145 = vector.shape_cast %144 : vector<1x128x128xf32> to vector<128x128xf32>
    %cst_112 = arith.constant dense<0.000000e+00> : vector<2x128xf32>
    %146 = tpu.matmul %143, %145, %cst_112 {dimension_numbers = #tpu.dot_dimension_numbers<[1], [0], [0], [1], [0, 0, 1, 1], [], []>} : vector<2x128xf32>, vector<128x128xf32>, vector<2x128xf32> -> vector<2x128xf32>
    %147 = arith.addf %141, %146 : vector<2x128xf32>
    %c0_113 = arith.constant 0 : index
    %c4 = arith.constant 4 : index
    %c0_114 = arith.constant 0 : index
    %148 = vector.load %arg11[%c0_113, %c4, %c0_114] : memref<2x32x128xf32, #tpu.memory_space<vmem>>, vector<2x1x128xf32>
    %149 = vector.shape_cast %148 : vector<2x1x128xf32> to vector<2x128xf32>
    %c4_115 = arith.constant 4 : index
    %c0_116 = arith.constant 0 : index
    %c0_117 = arith.constant 0 : index
    %150 = vector.load %arg10[%c4_115, %c0_116, %c0_117] : memref<32x128x128xf32, #tpu.memory_space<vmem>>, vector<1x128x128xf32>
    %151 = vector.shape_cast %150 : vector<1x128x128xf32> to vector<128x128xf32>
    %cst_118 = arith.constant dense<0.000000e+00> : vector<2x128xf32>
    %152 = tpu.matmul %149, %151, %cst_118 {dimension_numbers = #tpu.dot_dimension_numbers<[1], [0], [0], [1], [0, 0, 1, 1], [], []>} : vector<2x128xf32>, vector<128x128xf32>, vector<2x128xf32> -> vector<2x128xf32>
    %153 = arith.addf %147, %152 : vector<2x128xf32>
    %c0_119 = arith.constant 0 : index
    %c5 = arith.constant 5 : index
    %c0_120 = arith.constant 0 : index
    %154 = vector.load %arg11[%c0_119, %c5, %c0_120] : memref<2x32x128xf32, #tpu.memory_space<vmem>>, vector<2x1x128xf32>
    %155 = vector.shape_cast %154 : vector<2x1x128xf32> to vector<2x128xf32>
    %c5_121 = arith.constant 5 : index
    %c0_122 = arith.constant 0 : index
    %c0_123 = arith.constant 0 : index
    %156 = vector.load %arg10[%c5_121, %c0_122, %c0_123] : memref<32x128x128xf32, #tpu.memory_space<vmem>>, vector<1x128x128xf32>
    %157 = vector.shape_cast %156 : vector<1x128x128xf32> to vector<128x128xf32>
    %cst_124 = arith.constant dense<0.000000e+00> : vector<2x128xf32>
    %158 = tpu.matmul %155, %157, %cst_124 {dimension_numbers = #tpu.dot_dimension_numbers<[1], [0], [0], [1], [0, 0, 1, 1], [], []>} : vector<2x128xf32>, vector<128x128xf32>, vector<2x128xf32> -> vector<2x128xf32>
    %159 = arith.addf %153, %158 : vector<2x128xf32>
    %c0_125 = arith.constant 0 : index
    %c6 = arith.constant 6 : index
    %c0_126 = arith.constant 0 : index
    %160 = vector.load %arg11[%c0_125, %c6, %c0_126] : memref<2x32x128xf32, #tpu.memory_space<vmem>>, vector<2x1x128xf32>
    %161 = vector.shape_cast %160 : vector<2x1x128xf32> to vector<2x128xf32>
    %c6_127 = arith.constant 6 : index
    %c0_128 = arith.constant 0 : index
    %c0_129 = arith.constant 0 : index
    %162 = vector.load %arg10[%c6_127, %c0_128, %c0_129] : memref<32x128x128xf32, #tpu.memory_space<vmem>>, vector<1x128x128xf32>
    %163 = vector.shape_cast %162 : vector<1x128x128xf32> to vector<128x128xf32>
    %cst_130 = arith.constant dense<0.000000e+00> : vector<2x128xf32>
    %164 = tpu.matmul %161, %163, %cst_130 {dimension_numbers = #tpu.dot_dimension_numbers<[1], [0], [0], [1], [0, 0, 1, 1], [], []>} : vector<2x128xf32>, vector<128x128xf32>, vector<2x128xf32> -> vector<2x128xf32>
    %165 = arith.addf %159, %164 : vector<2x128xf32>
    %c0_131 = arith.constant 0 : index
    %c7 = arith.constant 7 : index
    %c0_132 = arith.constant 0 : index
    %166 = vector.load %arg11[%c0_131, %c7, %c0_132] : memref<2x32x128xf32, #tpu.memory_space<vmem>>, vector<2x1x128xf32>
    %167 = vector.shape_cast %166 : vector<2x1x128xf32> to vector<2x128xf32>
    %c7_133 = arith.constant 7 : index
    %c0_134 = arith.constant 0 : index
    %c0_135 = arith.constant 0 : index
    %168 = vector.load %arg10[%c7_133, %c0_134, %c0_135] : memref<32x128x128xf32, #tpu.memory_space<vmem>>, vector<1x128x128xf32>
    %169 = vector.shape_cast %168 : vector<1x128x128xf32> to vector<128x128xf32>
    %cst_136 = arith.constant dense<0.000000e+00> : vector<2x128xf32>
    %170 = tpu.matmul %167, %169, %cst_136 {dimension_numbers = #tpu.dot_dimension_numbers<[1], [0], [0], [1], [0, 0, 1, 1], [], []>} : vector<2x128xf32>, vector<128x128xf32>, vector<2x128xf32> -> vector<2x128xf32>
    %171 = arith.addf %165, %170 : vector<2x128xf32>
    %c0_137 = arith.constant 0 : index
    %c8 = arith.constant 8 : index
    %c0_138 = arith.constant 0 : index
    %172 = vector.load %arg11[%c0_137, %c8, %c0_138] : memref<2x32x128xf32, #tpu.memory_space<vmem>>, vector<2x1x128xf32>
    %173 = vector.shape_cast %172 : vector<2x1x128xf32> to vector<2x128xf32>
    %c8_139 = arith.constant 8 : index
    %c0_140 = arith.constant 0 : index
    %c0_141 = arith.constant 0 : index
    %174 = vector.load %arg10[%c8_139, %c0_140, %c0_141] : memref<32x128x128xf32, #tpu.memory_space<vmem>>, vector<1x128x128xf32>
    %175 = vector.shape_cast %174 : vector<1x128x128xf32> to vector<128x128xf32>
    %cst_142 = arith.constant dense<0.000000e+00> : vector<2x128xf32>
    %176 = tpu.matmul %173, %175, %cst_142 {dimension_numbers = #tpu.dot_dimension_numbers<[1], [0], [0], [1], [0, 0, 1, 1], [], []>} : vector<2x128xf32>, vector<128x128xf32>, vector<2x128xf32> -> vector<2x128xf32>
    %177 = arith.addf %171, %176 : vector<2x128xf32>
    %c0_143 = arith.constant 0 : index
    %c9 = arith.constant 9 : index
    %c0_144 = arith.constant 0 : index
    %178 = vector.load %arg11[%c0_143, %c9, %c0_144] : memref<2x32x128xf32, #tpu.memory_space<vmem>>, vector<2x1x128xf32>
    %179 = vector.shape_cast %178 : vector<2x1x128xf32> to vector<2x128xf32>
    %c9_145 = arith.constant 9 : index
    %c0_146 = arith.constant 0 : index
    %c0_147 = arith.constant 0 : index
    %180 = vector.load %arg10[%c9_145, %c0_146, %c0_147] : memref<32x128x128xf32, #tpu.memory_space<vmem>>, vector<1x128x128xf32>
    %181 = vector.shape_cast %180 : vector<1x128x128xf32> to vector<128x128xf32>
    %cst_148 = arith.constant dense<0.000000e+00> : vector<2x128xf32>
    %182 = tpu.matmul %179, %181, %cst_148 {dimension_numbers = #tpu.dot_dimension_numbers<[1], [0], [0], [1], [0, 0, 1, 1], [], []>} : vector<2x128xf32>, vector<128x128xf32>, vector<2x128xf32> -> vector<2x128xf32>
    %183 = arith.addf %177, %182 : vector<2x128xf32>
    %c0_149 = arith.constant 0 : index
    %c10 = arith.constant 10 : index
    %c0_150 = arith.constant 0 : index
    %184 = vector.load %arg11[%c0_149, %c10, %c0_150] : memref<2x32x128xf32, #tpu.memory_space<vmem>>, vector<2x1x128xf32>
    %185 = vector.shape_cast %184 : vector<2x1x128xf32> to vector<2x128xf32>
    %c10_151 = arith.constant 10 : index
    %c0_152 = arith.constant 0 : index
    %c0_153 = arith.constant 0 : index
    %186 = vector.load %arg10[%c10_151, %c0_152, %c0_153] : memref<32x128x128xf32, #tpu.memory_space<vmem>>, vector<1x128x128xf32>
    %187 = vector.shape_cast %186 : vector<1x128x128xf32> to vector<128x128xf32>
    %cst_154 = arith.constant dense<0.000000e+00> : vector<2x128xf32>
    %188 = tpu.matmul %185, %187, %cst_154 {dimension_numbers = #tpu.dot_dimension_numbers<[1], [0], [0], [1], [0, 0, 1, 1], [], []>} : vector<2x128xf32>, vector<128x128xf32>, vector<2x128xf32> -> vector<2x128xf32>
    %189 = arith.addf %183, %188 : vector<2x128xf32>
    %c0_155 = arith.constant 0 : index
    %c11 = arith.constant 11 : index
    %c0_156 = arith.constant 0 : index
    %190 = vector.load %arg11[%c0_155, %c11, %c0_156] : memref<2x32x128xf32, #tpu.memory_space<vmem>>, vector<2x1x128xf32>
    %191 = vector.shape_cast %190 : vector<2x1x128xf32> to vector<2x128xf32>
    %c11_157 = arith.constant 11 : index
    %c0_158 = arith.constant 0 : index
    %c0_159 = arith.constant 0 : index
    %192 = vector.load %arg10[%c11_157, %c0_158, %c0_159] : memref<32x128x128xf32, #tpu.memory_space<vmem>>, vector<1x128x128xf32>
    %193 = vector.shape_cast %192 : vector<1x128x128xf32> to vector<128x128xf32>
    %cst_160 = arith.constant dense<0.000000e+00> : vector<2x128xf32>
    %194 = tpu.matmul %191, %193, %cst_160 {dimension_numbers = #tpu.dot_dimension_numbers<[1], [0], [0], [1], [0, 0, 1, 1], [], []>} : vector<2x128xf32>, vector<128x128xf32>, vector<2x128xf32> -> vector<2x128xf32>
    %195 = arith.addf %189, %194 : vector<2x128xf32>
    %c0_161 = arith.constant 0 : index
    %c12 = arith.constant 12 : index
    %c0_162 = arith.constant 0 : index
    %196 = vector.load %arg11[%c0_161, %c12, %c0_162] : memref<2x32x128xf32, #tpu.memory_space<vmem>>, vector<2x1x128xf32>
    %197 = vector.shape_cast %196 : vector<2x1x128xf32> to vector<2x128xf32>
    %c12_163 = arith.constant 12 : index
    %c0_164 = arith.constant 0 : index
    %c0_165 = arith.constant 0 : index
    %198 = vector.load %arg10[%c12_163, %c0_164, %c0_165] : memref<32x128x128xf32, #tpu.memory_space<vmem>>, vector<1x128x128xf32>
    %199 = vector.shape_cast %198 : vector<1x128x128xf32> to vector<128x128xf32>
    %cst_166 = arith.constant dense<0.000000e+00> : vector<2x128xf32>
    %200 = tpu.matmul %197, %199, %cst_166 {dimension_numbers = #tpu.dot_dimension_numbers<[1], [0], [0], [1], [0, 0, 1, 1], [], []>} : vector<2x128xf32>, vector<128x128xf32>, vector<2x128xf32> -> vector<2x128xf32>
    %201 = arith.addf %195, %200 : vector<2x128xf32>
    %c0_167 = arith.constant 0 : index
    %c13 = arith.constant 13 : index
    %c0_168 = arith.constant 0 : index
    %202 = vector.load %arg11[%c0_167, %c13, %c0_168] : memref<2x32x128xf32, #tpu.memory_space<vmem>>, vector<2x1x128xf32>
    %203 = vector.shape_cast %202 : vector<2x1x128xf32> to vector<2x128xf32>
    %c13_169 = arith.constant 13 : index
    %c0_170 = arith.constant 0 : index
    %c0_171 = arith.constant 0 : index
    %204 = vector.load %arg10[%c13_169, %c0_170, %c0_171] : memref<32x128x128xf32, #tpu.memory_space<vmem>>, vector<1x128x128xf32>
    %205 = vector.shape_cast %204 : vector<1x128x128xf32> to vector<128x128xf32>
    %cst_172 = arith.constant dense<0.000000e+00> : vector<2x128xf32>
    %206 = tpu.matmul %203, %205, %cst_172 {dimension_numbers = #tpu.dot_dimension_numbers<[1], [0], [0], [1], [0, 0, 1, 1], [], []>} : vector<2x128xf32>, vector<128x128xf32>, vector<2x128xf32> -> vector<2x128xf32>
    %207 = arith.addf %201, %206 : vector<2x128xf32>
    %c0_173 = arith.constant 0 : index
    %c14 = arith.constant 14 : index
    %c0_174 = arith.constant 0 : index
    %208 = vector.load %arg11[%c0_173, %c14, %c0_174] : memref<2x32x128xf32, #tpu.memory_space<vmem>>, vector<2x1x128xf32>
    %209 = vector.shape_cast %208 : vector<2x1x128xf32> to vector<2x128xf32>
    %c14_175 = arith.constant 14 : index
    %c0_176 = arith.constant 0 : index
    %c0_177 = arith.constant 0 : index
    %210 = vector.load %arg10[%c14_175, %c0_176, %c0_177] : memref<32x128x128xf32, #tpu.memory_space<vmem>>, vector<1x128x128xf32>
    %211 = vector.shape_cast %210 : vector<1x128x128xf32> to vector<128x128xf32>
    %cst_178 = arith.constant dense<0.000000e+00> : vector<2x128xf32>
    %212 = tpu.matmul %209, %211, %cst_178 {dimension_numbers = #tpu.dot_dimension_numbers<[1], [0], [0], [1], [0, 0, 1, 1], [], []>} : vector<2x128xf32>, vector<128x128xf32>, vector<2x128xf32> -> vector<2x128xf32>
    %213 = arith.addf %207, %212 : vector<2x128xf32>
    %c0_179 = arith.constant 0 : index
    %c15 = arith.constant 15 : index
    %c0_180 = arith.constant 0 : index
    %214 = vector.load %arg11[%c0_179, %c15, %c0_180] : memref<2x32x128xf32, #tpu.memory_space<vmem>>, vector<2x1x128xf32>
    %215 = vector.shape_cast %214 : vector<2x1x128xf32> to vector<2x128xf32>
    %c15_181 = arith.constant 15 : index
    %c0_182 = arith.constant 0 : index
    %c0_183 = arith.constant 0 : index
    %216 = vector.load %arg10[%c15_181, %c0_182, %c0_183] : memref<32x128x128xf32, #tpu.memory_space<vmem>>, vector<1x128x128xf32>
    %217 = vector.shape_cast %216 : vector<1x128x128xf32> to vector<128x128xf32>
    %cst_184 = arith.constant dense<0.000000e+00> : vector<2x128xf32>
    %218 = tpu.matmul %215, %217, %cst_184 {dimension_numbers = #tpu.dot_dimension_numbers<[1], [0], [0], [1], [0, 0, 1, 1], [], []>} : vector<2x128xf32>, vector<128x128xf32>, vector<2x128xf32> -> vector<2x128xf32>
    %219 = arith.addf %213, %218 : vector<2x128xf32>
    %c0_185 = arith.constant 0 : index
    %c16 = arith.constant 16 : index
    %c0_186 = arith.constant 0 : index
    %220 = vector.load %arg11[%c0_185, %c16, %c0_186] : memref<2x32x128xf32, #tpu.memory_space<vmem>>, vector<2x1x128xf32>
    %221 = vector.shape_cast %220 : vector<2x1x128xf32> to vector<2x128xf32>
    %c16_187 = arith.constant 16 : index
    %c0_188 = arith.constant 0 : index
    %c0_189 = arith.constant 0 : index
    %222 = vector.load %arg10[%c16_187, %c0_188, %c0_189] : memref<32x128x128xf32, #tpu.memory_space<vmem>>, vector<1x128x128xf32>
    %223 = vector.shape_cast %222 : vector<1x128x128xf32> to vector<128x128xf32>
    %cst_190 = arith.constant dense<0.000000e+00> : vector<2x128xf32>
    %224 = tpu.matmul %221, %223, %cst_190 {dimension_numbers = #tpu.dot_dimension_numbers<[1], [0], [0], [1], [0, 0, 1, 1], [], []>} : vector<2x128xf32>, vector<128x128xf32>, vector<2x128xf32> -> vector<2x128xf32>
    %225 = arith.addf %219, %224 : vector<2x128xf32>
    %c0_191 = arith.constant 0 : index
    %c17 = arith.constant 17 : index
    %c0_192 = arith.constant 0 : index
    %226 = vector.load %arg11[%c0_191, %c17, %c0_192] : memref<2x32x128xf32, #tpu.memory_space<vmem>>, vector<2x1x128xf32>
    %227 = vector.shape_cast %226 : vector<2x1x128xf32> to vector<2x128xf32>
    %c17_193 = arith.constant 17 : index
    %c0_194 = arith.constant 0 : index
    %c0_195 = arith.constant 0 : index
    %228 = vector.load %arg10[%c17_193, %c0_194, %c0_195] : memref<32x128x128xf32, #tpu.memory_space<vmem>>, vector<1x128x128xf32>
    %229 = vector.shape_cast %228 : vector<1x128x128xf32> to vector<128x128xf32>
    %cst_196 = arith.constant dense<0.000000e+00> : vector<2x128xf32>
    %230 = tpu.matmul %227, %229, %cst_196 {dimension_numbers = #tpu.dot_dimension_numbers<[1], [0], [0], [1], [0, 0, 1, 1], [], []>} : vector<2x128xf32>, vector<128x128xf32>, vector<2x128xf32> -> vector<2x128xf32>
    %231 = arith.addf %225, %230 : vector<2x128xf32>
    %c0_197 = arith.constant 0 : index
    %c18 = arith.constant 18 : index
    %c0_198 = arith.constant 0 : index
    %232 = vector.load %arg11[%c0_197, %c18, %c0_198] : memref<2x32x128xf32, #tpu.memory_space<vmem>>, vector<2x1x128xf32>
    %233 = vector.shape_cast %232 : vector<2x1x128xf32> to vector<2x128xf32>
    %c18_199 = arith.constant 18 : index
    %c0_200 = arith.constant 0 : index
    %c0_201 = arith.constant 0 : index
    %234 = vector.load %arg10[%c18_199, %c0_200, %c0_201] : memref<32x128x128xf32, #tpu.memory_space<vmem>>, vector<1x128x128xf32>
    %235 = vector.shape_cast %234 : vector<1x128x128xf32> to vector<128x128xf32>
    %cst_202 = arith.constant dense<0.000000e+00> : vector<2x128xf32>
    %236 = tpu.matmul %233, %235, %cst_202 {dimension_numbers = #tpu.dot_dimension_numbers<[1], [0], [0], [1], [0, 0, 1, 1], [], []>} : vector<2x128xf32>, vector<128x128xf32>, vector<2x128xf32> -> vector<2x128xf32>
    %237 = arith.addf %231, %236 : vector<2x128xf32>
    %c0_203 = arith.constant 0 : index
    %c19 = arith.constant 19 : index
    %c0_204 = arith.constant 0 : index
    %238 = vector.load %arg11[%c0_203, %c19, %c0_204] : memref<2x32x128xf32, #tpu.memory_space<vmem>>, vector<2x1x128xf32>
    %239 = vector.shape_cast %238 : vector<2x1x128xf32> to vector<2x128xf32>
    %c19_205 = arith.constant 19 : index
    %c0_206 = arith.constant 0 : index
    %c0_207 = arith.constant 0 : index
    %240 = vector.load %arg10[%c19_205, %c0_206, %c0_207] : memref<32x128x128xf32, #tpu.memory_space<vmem>>, vector<1x128x128xf32>
    %241 = vector.shape_cast %240 : vector<1x128x128xf32> to vector<128x128xf32>
    %cst_208 = arith.constant dense<0.000000e+00> : vector<2x128xf32>
    %242 = tpu.matmul %239, %241, %cst_208 {dimension_numbers = #tpu.dot_dimension_numbers<[1], [0], [0], [1], [0, 0, 1, 1], [], []>} : vector<2x128xf32>, vector<128x128xf32>, vector<2x128xf32> -> vector<2x128xf32>
    %243 = arith.addf %237, %242 : vector<2x128xf32>
    %c0_209 = arith.constant 0 : index
    %c20 = arith.constant 20 : index
    %c0_210 = arith.constant 0 : index
    %244 = vector.load %arg11[%c0_209, %c20, %c0_210] : memref<2x32x128xf32, #tpu.memory_space<vmem>>, vector<2x1x128xf32>
    %245 = vector.shape_cast %244 : vector<2x1x128xf32> to vector<2x128xf32>
    %c20_211 = arith.constant 20 : index
    %c0_212 = arith.constant 0 : index
    %c0_213 = arith.constant 0 : index
    %246 = vector.load %arg10[%c20_211, %c0_212, %c0_213] : memref<32x128x128xf32, #tpu.memory_space<vmem>>, vector<1x128x128xf32>
    %247 = vector.shape_cast %246 : vector<1x128x128xf32> to vector<128x128xf32>
    %cst_214 = arith.constant dense<0.000000e+00> : vector<2x128xf32>
    %248 = tpu.matmul %245, %247, %cst_214 {dimension_numbers = #tpu.dot_dimension_numbers<[1], [0], [0], [1], [0, 0, 1, 1], [], []>} : vector<2x128xf32>, vector<128x128xf32>, vector<2x128xf32> -> vector<2x128xf32>
    %249 = arith.addf %243, %248 : vector<2x128xf32>
    %c0_215 = arith.constant 0 : index
    %c21 = arith.constant 21 : index
    %c0_216 = arith.constant 0 : index
    %250 = vector.load %arg11[%c0_215, %c21, %c0_216] : memref<2x32x128xf32, #tpu.memory_space<vmem>>, vector<2x1x128xf32>
    %251 = vector.shape_cast %250 : vector<2x1x128xf32> to vector<2x128xf32>
    %c21_217 = arith.constant 21 : index
    %c0_218 = arith.constant 0 : index
    %c0_219 = arith.constant 0 : index
    %252 = vector.load %arg10[%c21_217, %c0_218, %c0_219] : memref<32x128x128xf32, #tpu.memory_space<vmem>>, vector<1x128x128xf32>
    %253 = vector.shape_cast %252 : vector<1x128x128xf32> to vector<128x128xf32>
    %cst_220 = arith.constant dense<0.000000e+00> : vector<2x128xf32>
    %254 = tpu.matmul %251, %253, %cst_220 {dimension_numbers = #tpu.dot_dimension_numbers<[1], [0], [0], [1], [0, 0, 1, 1], [], []>} : vector<2x128xf32>, vector<128x128xf32>, vector<2x128xf32> -> vector<2x128xf32>
    %255 = arith.addf %249, %254 : vector<2x128xf32>
    %c0_221 = arith.constant 0 : index
    %c22 = arith.constant 22 : index
    %c0_222 = arith.constant 0 : index
    %256 = vector.load %arg11[%c0_221, %c22, %c0_222] : memref<2x32x128xf32, #tpu.memory_space<vmem>>, vector<2x1x128xf32>
    %257 = vector.shape_cast %256 : vector<2x1x128xf32> to vector<2x128xf32>
    %c22_223 = arith.constant 22 : index
    %c0_224 = arith.constant 0 : index
    %c0_225 = arith.constant 0 : index
    %258 = vector.load %arg10[%c22_223, %c0_224, %c0_225] : memref<32x128x128xf32, #tpu.memory_space<vmem>>, vector<1x128x128xf32>
    %259 = vector.shape_cast %258 : vector<1x128x128xf32> to vector<128x128xf32>
    %cst_226 = arith.constant dense<0.000000e+00> : vector<2x128xf32>
    %260 = tpu.matmul %257, %259, %cst_226 {dimension_numbers = #tpu.dot_dimension_numbers<[1], [0], [0], [1], [0, 0, 1, 1], [], []>} : vector<2x128xf32>, vector<128x128xf32>, vector<2x128xf32> -> vector<2x128xf32>
    %261 = arith.addf %255, %260 : vector<2x128xf32>
    %c0_227 = arith.constant 0 : index
    %c23 = arith.constant 23 : index
    %c0_228 = arith.constant 0 : index
    %262 = vector.load %arg11[%c0_227, %c23, %c0_228] : memref<2x32x128xf32, #tpu.memory_space<vmem>>, vector<2x1x128xf32>
    %263 = vector.shape_cast %262 : vector<2x1x128xf32> to vector<2x128xf32>
    %c23_229 = arith.constant 23 : index
    %c0_230 = arith.constant 0 : index
    %c0_231 = arith.constant 0 : index
    %264 = vector.load %arg10[%c23_229, %c0_230, %c0_231] : memref<32x128x128xf32, #tpu.memory_space<vmem>>, vector<1x128x128xf32>
    %265 = vector.shape_cast %264 : vector<1x128x128xf32> to vector<128x128xf32>
    %cst_232 = arith.constant dense<0.000000e+00> : vector<2x128xf32>
    %266 = tpu.matmul %263, %265, %cst_232 {dimension_numbers = #tpu.dot_dimension_numbers<[1], [0], [0], [1], [0, 0, 1, 1], [], []>} : vector<2x128xf32>, vector<128x128xf32>, vector<2x128xf32> -> vector<2x128xf32>
    %267 = arith.addf %261, %266 : vector<2x128xf32>
    %c0_233 = arith.constant 0 : index
    %c24 = arith.constant 24 : index
    %c0_234 = arith.constant 0 : index
    %268 = vector.load %arg11[%c0_233, %c24, %c0_234] : memref<2x32x128xf32, #tpu.memory_space<vmem>>, vector<2x1x128xf32>
    %269 = vector.shape_cast %268 : vector<2x1x128xf32> to vector<2x128xf32>
    %c24_235 = arith.constant 24 : index
    %c0_236 = arith.constant 0 : index
    %c0_237 = arith.constant 0 : index
    %270 = vector.load %arg10[%c24_235, %c0_236, %c0_237] : memref<32x128x128xf32, #tpu.memory_space<vmem>>, vector<1x128x128xf32>
    %271 = vector.shape_cast %270 : vector<1x128x128xf32> to vector<128x128xf32>
    %cst_238 = arith.constant dense<0.000000e+00> : vector<2x128xf32>
    %272 = tpu.matmul %269, %271, %cst_238 {dimension_numbers = #tpu.dot_dimension_numbers<[1], [0], [0], [1], [0, 0, 1, 1], [], []>} : vector<2x128xf32>, vector<128x128xf32>, vector<2x128xf32> -> vector<2x128xf32>
    %273 = arith.addf %267, %272 : vector<2x128xf32>
    %c0_239 = arith.constant 0 : index
    %c25 = arith.constant 25 : index
    %c0_240 = arith.constant 0 : index
    %274 = vector.load %arg11[%c0_239, %c25, %c0_240] : memref<2x32x128xf32, #tpu.memory_space<vmem>>, vector<2x1x128xf32>
    %275 = vector.shape_cast %274 : vector<2x1x128xf32> to vector<2x128xf32>
    %c25_241 = arith.constant 25 : index
    %c0_242 = arith.constant 0 : index
    %c0_243 = arith.constant 0 : index
    %276 = vector.load %arg10[%c25_241, %c0_242, %c0_243] : memref<32x128x128xf32, #tpu.memory_space<vmem>>, vector<1x128x128xf32>
    %277 = vector.shape_cast %276 : vector<1x128x128xf32> to vector<128x128xf32>
    %cst_244 = arith.constant dense<0.000000e+00> : vector<2x128xf32>
    %278 = tpu.matmul %275, %277, %cst_244 {dimension_numbers = #tpu.dot_dimension_numbers<[1], [0], [0], [1], [0, 0, 1, 1], [], []>} : vector<2x128xf32>, vector<128x128xf32>, vector<2x128xf32> -> vector<2x128xf32>
    %279 = arith.addf %273, %278 : vector<2x128xf32>
    %c0_245 = arith.constant 0 : index
    %c26 = arith.constant 26 : index
    %c0_246 = arith.constant 0 : index
    %280 = vector.load %arg11[%c0_245, %c26, %c0_246] : memref<2x32x128xf32, #tpu.memory_space<vmem>>, vector<2x1x128xf32>
    %281 = vector.shape_cast %280 : vector<2x1x128xf32> to vector<2x128xf32>
    %c26_247 = arith.constant 26 : index
    %c0_248 = arith.constant 0 : index
    %c0_249 = arith.constant 0 : index
    %282 = vector.load %arg10[%c26_247, %c0_248, %c0_249] : memref<32x128x128xf32, #tpu.memory_space<vmem>>, vector<1x128x128xf32>
    %283 = vector.shape_cast %282 : vector<1x128x128xf32> to vector<128x128xf32>
    %cst_250 = arith.constant dense<0.000000e+00> : vector<2x128xf32>
    %284 = tpu.matmul %281, %283, %cst_250 {dimension_numbers = #tpu.dot_dimension_numbers<[1], [0], [0], [1], [0, 0, 1, 1], [], []>} : vector<2x128xf32>, vector<128x128xf32>, vector<2x128xf32> -> vector<2x128xf32>
    %285 = arith.addf %279, %284 : vector<2x128xf32>
    %c0_251 = arith.constant 0 : index
    %c27 = arith.constant 27 : index
    %c0_252 = arith.constant 0 : index
    %286 = vector.load %arg11[%c0_251, %c27, %c0_252] : memref<2x32x128xf32, #tpu.memory_space<vmem>>, vector<2x1x128xf32>
    %287 = vector.shape_cast %286 : vector<2x1x128xf32> to vector<2x128xf32>
    %c27_253 = arith.constant 27 : index
    %c0_254 = arith.constant 0 : index
    %c0_255 = arith.constant 0 : index
    %288 = vector.load %arg10[%c27_253, %c0_254, %c0_255] : memref<32x128x128xf32, #tpu.memory_space<vmem>>, vector<1x128x128xf32>
    %289 = vector.shape_cast %288 : vector<1x128x128xf32> to vector<128x128xf32>
    %cst_256 = arith.constant dense<0.000000e+00> : vector<2x128xf32>
    %290 = tpu.matmul %287, %289, %cst_256 {dimension_numbers = #tpu.dot_dimension_numbers<[1], [0], [0], [1], [0, 0, 1, 1], [], []>} : vector<2x128xf32>, vector<128x128xf32>, vector<2x128xf32> -> vector<2x128xf32>
    %291 = arith.addf %285, %290 : vector<2x128xf32>
    %c0_257 = arith.constant 0 : index
    %c28 = arith.constant 28 : index
    %c0_258 = arith.constant 0 : index
    %292 = vector.load %arg11[%c0_257, %c28, %c0_258] : memref<2x32x128xf32, #tpu.memory_space<vmem>>, vector<2x1x128xf32>
    %293 = vector.shape_cast %292 : vector<2x1x128xf32> to vector<2x128xf32>
    %c28_259 = arith.constant 28 : index
    %c0_260 = arith.constant 0 : index
    %c0_261 = arith.constant 0 : index
    %294 = vector.load %arg10[%c28_259, %c0_260, %c0_261] : memref<32x128x128xf32, #tpu.memory_space<vmem>>, vector<1x128x128xf32>
    %295 = vector.shape_cast %294 : vector<1x128x128xf32> to vector<128x128xf32>
    %cst_262 = arith.constant dense<0.000000e+00> : vector<2x128xf32>
    %296 = tpu.matmul %293, %295, %cst_262 {dimension_numbers = #tpu.dot_dimension_numbers<[1], [0], [0], [1], [0, 0, 1, 1], [], []>} : vector<2x128xf32>, vector<128x128xf32>, vector<2x128xf32> -> vector<2x128xf32>
    %297 = arith.addf %291, %296 : vector<2x128xf32>
    %c0_263 = arith.constant 0 : index
    %c29 = arith.constant 29 : index
    %c0_264 = arith.constant 0 : index
    %298 = vector.load %arg11[%c0_263, %c29, %c0_264] : memref<2x32x128xf32, #tpu.memory_space<vmem>>, vector<2x1x128xf32>
    %299 = vector.shape_cast %298 : vector<2x1x128xf32> to vector<2x128xf32>
    %c29_265 = arith.constant 29 : index
    %c0_266 = arith.constant 0 : index
    %c0_267 = arith.constant 0 : index
    %300 = vector.load %arg10[%c29_265, %c0_266, %c0_267] : memref<32x128x128xf32, #tpu.memory_space<vmem>>, vector<1x128x128xf32>
    %301 = vector.shape_cast %300 : vector<1x128x128xf32> to vector<128x128xf32>
    %cst_268 = arith.constant dense<0.000000e+00> : vector<2x128xf32>
    %302 = tpu.matmul %299, %301, %cst_268 {dimension_numbers = #tpu.dot_dimension_numbers<[1], [0], [0], [1], [0, 0, 1, 1], [], []>} : vector<2x128xf32>, vector<128x128xf32>, vector<2x128xf32> -> vector<2x128xf32>
    %303 = arith.addf %297, %302 : vector<2x128xf32>
    %c0_269 = arith.constant 0 : index
    %c30 = arith.constant 30 : index
    %c0_270 = arith.constant 0 : index
    %304 = vector.load %arg11[%c0_269, %c30, %c0_270] : memref<2x32x128xf32, #tpu.memory_space<vmem>>, vector<2x1x128xf32>
    %305 = vector.shape_cast %304 : vector<2x1x128xf32> to vector<2x128xf32>
    %c30_271 = arith.constant 30 : index
    %c0_272 = arith.constant 0 : index
    %c0_273 = arith.constant 0 : index
    %306 = vector.load %arg10[%c30_271, %c0_272, %c0_273] : memref<32x128x128xf32, #tpu.memory_space<vmem>>, vector<1x128x128xf32>
    %307 = vector.shape_cast %306 : vector<1x128x128xf32> to vector<128x128xf32>
    %cst_274 = arith.constant dense<0.000000e+00> : vector<2x128xf32>
    %308 = tpu.matmul %305, %307, %cst_274 {dimension_numbers = #tpu.dot_dimension_numbers<[1], [0], [0], [1], [0, 0, 1, 1], [], []>} : vector<2x128xf32>, vector<128x128xf32>, vector<2x128xf32> -> vector<2x128xf32>
    %309 = arith.addf %303, %308 : vector<2x128xf32>
    %c0_275 = arith.constant 0 : index
    %c31 = arith.constant 31 : index
    %c0_276 = arith.constant 0 : index
    %310 = vector.load %arg11[%c0_275, %c31, %c0_276] : memref<2x32x128xf32, #tpu.memory_space<vmem>>, vector<2x1x128xf32>
    %311 = vector.shape_cast %310 : vector<2x1x128xf32> to vector<2x128xf32>
    %c31_277 = arith.constant 31 : index
    %c0_278 = arith.constant 0 : index
    %c0_279 = arith.constant 0 : index
    %312 = vector.load %arg10[%c31_277, %c0_278, %c0_279] : memref<32x128x128xf32, #tpu.memory_space<vmem>>, vector<1x128x128xf32>
    %313 = vector.shape_cast %312 : vector<1x128x128xf32> to vector<128x128xf32>
    %cst_280 = arith.constant dense<0.000000e+00> : vector<2x128xf32>
    %314 = tpu.matmul %311, %313, %cst_280 {dimension_numbers = #tpu.dot_dimension_numbers<[1], [0], [0], [1], [0, 0, 1, 1], [], []>} : vector<2x128xf32>, vector<128x128xf32>, vector<2x128xf32> -> vector<2x128xf32>
    %315 = arith.addf %309, %314 : vector<2x128xf32>
    %c0_281 = arith.constant 0 : index
    %c0_282 = arith.constant 0 : index
    %316 = vector.load %arg6[%c0_281, %c0_282] : memref<1x128xf32, #tpu.memory_space<vmem>>, vector<1x128xf32>
    %317 = vector.broadcast %316 : vector<1x128xf32> to vector<2x128xf32>
    %318 = arith.addf %315, %317 : vector<2x128xf32>
    %cst_283 = arith.constant 0.000000e+00 : f32
    %319 = vector.broadcast %cst_283 : f32 to vector<2x128xf32>
    %320 = arith.cmpf ogt, %318, %319 : vector<2x128xf32>
    %cst_284 = arith.constant 0.00999999977 : f32
    %321 = vector.broadcast %cst_284 : f32 to vector<2x128xf32>
    %322 = arith.mulf %321, %318 : vector<2x128xf32>
    %323 = arith.select %320, %318, %322 : vector<2x128xi1>, vector<2x128xf32>
    %c0_285 = arith.constant 0 : index
    %c0_286 = arith.constant 0 : index
    %324 = vector.load %arg7[%c0_285, %c0_286] : memref<128x128xf32, #tpu.memory_space<vmem>>, vector<128x128xf32>
    %cst_287 = arith.constant dense<0.000000e+00> : vector<2x128xf32>
    %325 = tpu.matmul %323, %324, %cst_287 {dimension_numbers = #tpu.dot_dimension_numbers<[1], [0], [0], [1], [0, 0, 1, 1], [], []>} : vector<2x128xf32>, vector<128x128xf32>, vector<2x128xf32> -> vector<2x128xf32>
    %c0_288 = arith.constant 0 : index
    %c0_289 = arith.constant 0 : index
    %326 = vector.load %arg8[%c0_288, %c0_289] : memref<1x128xf32, #tpu.memory_space<vmem>>, vector<1x128xf32>
    %327 = vector.broadcast %326 : vector<1x128xf32> to vector<2x128xf32>
    %328 = arith.addf %325, %327 : vector<2x128xf32>
    %cst_290 = arith.constant 0.000000e+00 : f32
    %329 = vector.broadcast %cst_290 : f32 to vector<2x128xf32>
    %330 = arith.maximumf %328, %329 : vector<2x128xf32>
    %c0_291 = arith.constant 0 : index
    %c0_292 = arith.constant 0 : index
    %331 = vector.load %arg9[%c0_291, %c0_292] : memref<2x128xf32, #tpu.memory_space<vmem>>, vector<2x128xf32>
    tpu.vector_store %arg9[%c0_291, %c0_292], %330 {strides = array<i32>} : memref<2x128xf32, #tpu.memory_space<vmem>>, vector<2x128xf32>,
    return
  }
}

</mosaic_0001>

<llo_original>
// kernel: conv_po_nsc_forward.1
$region0: #{conv_po_nsc_forward.1}
  #allocation0 [shape = 'u32[]', space=smem, size = 0x4, offset = 0x4, fixed_abs, tag = 'smem constant byte address 0x4 - core index']
  #allocation1 [shape = 'u32[144,128]{1,0:T(1,128)}', space=vmem, size = 0x12000, scoped, tag = 'internal scratch']
  #allocation2 [shape = 'f32[32,128,128]{2,1,0:T(8,128)}', space=vmem, size = 0x200000, scoped, tag = 'scratch operand']
  #allocation3 [shape = 'f32[2,32,128]{2,1,0:T(8,128)}', space=vmem, size = 0x8000, scoped, tag = 'scratch operand']
  #allocation4 [shape = 's32[1]{0}', space=sflag, size = 0x4, scoped, tag = 'scratch operand']
  #allocation18 [shape = 's32[]', space=sflag, size = 0x4, offset = 0, fixed_abs, tag = 'sflag constant byte address 0x0 - dummy sync flag']
  #allocation19 [shape = 's32[]', space=sflag, size = 0x4, offset = 0, fixed_abs, tag = 'sflag constant byte address 0x0 - dummy sync flag']
  #allocation20 [shape = 'u32[]', space=smem, size = 0x4, offset = 0x44, fixed_abs, tag = 'smem constant byte address 0x44 - assertion arg 0']
  #allocation21 [shape = 'u32[]', space=smem, size = 0x4, offset = 0x48, fixed_abs, tag = 'smem constant byte address 0x48 - assertion arg 1']
  %s0 = inlined_call_operand.vmem [shape: f32[64,1], index: 0, kind: input, shape index: {}]
  %s1 = inlined_call_operand.hbm [shape: f32[3,128], index: 1, kind: input, shape index: {}]
  %s2 = inlined_call_operand.hbm [shape: f32[1,128], index: 2, kind: input, shape index: {}]
  %s3 = inlined_call_operand.hbm [shape: f32[3,3,128,128], index: 3, kind: input, shape index: {}]
  %s4 = inlined_call_operand.hbm [shape: f32[3,1,128], index: 4, kind: input, shape index: {}]
  %s5 = inlined_call_operand.hbm [shape: f32[32,128,128], index: 5, kind: input, shape index: {}]
  %s6 = inlined_call_operand.hbm [shape: f32[1,128], index: 6, kind: input, shape index: {}]
  %s7 = inlined_call_operand.hbm [shape: f32[128,128], index: 7, kind: input, shape index: {}]
  %s8 = inlined_call_operand.hbm [shape: f32[1,128], index: 8, kind: input, shape index: {}]
  %s9 = inlined_call_operand.hbm [shape: f32[2,128], index: 9, kind: output, shape index: {}]
  %s10 = sld [smem:[#allocation0]]
  $region74: #{conv_po_nsc_forward.1} parent=0
    _
  %s12 = ssub.s32 1, %s10
  %s13 = scalar_select 0, %s12, %s10
  $region1: #{conv_po_nsc_forward.1} parent=0
    #allocation5 [shape = 'u8[2048]{0}', space=vmem, size = 0x800, scoped, tag = 'input window, operand 1, single buffered']
    #allocation6 [shape = 's32[1]{0}', space=sflag, size = 0x4, scoped, tag = 'scoped memory for conv_po_nsc_forward.1']
    #allocation7 [shape = 's32[1]{0}', space=sflag, size = 0x4, scoped, tag = 'scoped memory for conv_po_nsc_forward.1']
    #allocation8 [shape = 'u8[512]{0}', space=vmem, size = 0x400, scoped, tag = 'input window, operand 2, single buffered']
    #allocation9 [shape = 's32[1]{0}', space=sflag, size = 0x4, scoped, tag = 'scoped memory for conv_po_nsc_forward.1']
    #allocation10 [shape = 'u8[589824]{0}', space=vmem, size = 0x90000, scoped, tag = 'input window, operand 3, single buffered']
    #allocation11 [shape = 'u8[1536]{0}', space=vmem, size = 0x800, scoped, tag = 'input window, operand 4, single buffered']
    #allocation12 [shape = 's32[1]{0}', space=sflag, size = 0x4, scoped, tag = 'scoped memory for conv_po_nsc_forward.1']
    #allocation13 [shape = 'u8[512]{0}', space=vmem, size = 0x400, scoped, tag = 'input window, operand 6, single buffered']
    #allocation14 [shape = 'u8[65536]{0}', space=vmem, size = 0x10000, scoped, tag = 'input window, operand 7, single buffered']
    #allocation15 [shape = 's32[1]{0}', space=sflag, size = 0x4, scoped, tag = 'scoped memory for conv_po_nsc_forward.1']
    #allocation16 [shape = 'u8[512]{0}', space=vmem, size = 0x400, scoped, tag = 'input window, operand 8, single buffered']
    #allocation17 [shape = 'u8[1024]{0}', space=vmem, size = 0x400, scoped, tag = 'output window, operand 0, single buffered']
    %14 = vsyncpa [#allocation6], 0
    %15 = vsyncpa [#allocation9], 0
    %16 = vsyncpa [#allocation12], 0
    %17 = vsyncpa [#allocation15], 0
    %18 = vsyncpa [#allocation7], 0
    // Predicated region
    $region2: #{conv_po_nsc_forward.1} parent=1 // pred_check
      _
    $region3: #{conv_po_nsc_forward.1} parent=1 // pred_check_branch
      %20 = sbr.rel (0) target = $region5
    $region4: #{conv_po_nsc_forward.1} parent=1 // pred_region
      _
    $region5: #{conv_po_nsc_forward.1} parent=1 // pred_fallthru
      _
    // Predicated region
    $region6: #{conv_po_nsc_forward.1} parent=1 // pred_check
      _
    $region7: #{conv_po_nsc_forward.1} parent=1 // pred_check_branch
      %22 = sbr.rel (0) target = $region9
    $region8: #{conv_po_nsc_forward.1} parent=1 // pred_region
      %s24 = ssub.s32 64, 64
      %25 = vsyncadd [#allocation6], %s24
      %s27 = sshll.u32 [#allocation5], 4
      %s28 = int_to_ptr.vmem [resolvable:$true] %s27
      %30 = dma.hbm_to_vmem [thread:$0]  %s1, 64, %s28, [#allocation6]
    $region9: #{conv_po_nsc_forward.1} parent=1 // pred_fallthru
      _
    // Predicated region
    $region10: #{conv_po_nsc_forward.1} parent=1 // pred_check
      _
    $region11: #{conv_po_nsc_forward.1} parent=1 // pred_check_branch
      %32 = sbr.rel (0) target = $region13
    $region12: #{conv_po_nsc_forward.1} parent=1 // pred_region
      %s34 = ssub.s32 16, 16
      %35 = vsyncadd [#allocation9], %s34
      %s37 = sshll.u32 [#allocation8], 4
      %s38 = int_to_ptr.vmem [resolvable:$true] %s37
      %40 = dma.hbm_to_vmem [thread:$0]  %s2, 16, %s38, [#allocation9]
    $region13: #{conv_po_nsc_forward.1} parent=1 // pred_fallthru
      _
    // Predicated region
    $region14: #{conv_po_nsc_forward.1} parent=1 // pred_check
      _
    $region15: #{conv_po_nsc_forward.1} parent=1 // pred_check_branch
      %42 = sbr.rel (0) target = $region17
    $region16: #{conv_po_nsc_forward.1} parent=1 // pred_region
      %s44 = ssub.s32 18432, 18432
      %45 = vsyncadd [#allocation9], %s44
      %s46 = sshll.u32 [#allocation10], 4
      %s47 = int_to_ptr.vmem [resolvable:$true] %s46
      %52 = dma.hbm_to_vmem [thread:$0]  %s3, 18432, %s47, [#allocation9], 128, 128, 8
    $region17: #{conv_po_nsc_forward.1} parent=1 // pred_fallthru
      _
    // Predicated region
    $region18: #{conv_po_nsc_forward.1} parent=1 // pred_check
      _
    $region19: #{conv_po_nsc_forward.1} parent=1 // pred_check_branch
      %54 = sbr.rel (0) target = $region21
    $region20: #{conv_po_nsc_forward.1} parent=1 // pred_region
      %s56 = ssub.s32 48, 48
      %57 = vsyncadd [#allocation12], %s56
      %s58 = sshll.u32 [#allocation11], 4
      %s59 = int_to_ptr.vmem [resolvable:$true] %s58
      %64 = dma.hbm_to_vmem [thread:$0]  %s4, 48, %s59, [#allocation12], 16, 16, 1
    $region21: #{conv_po_nsc_forward.1} parent=1 // pred_fallthru
      _
    // Predicated region
    $region22: #{conv_po_nsc_forward.1} parent=1 // pred_check
      _
    $region23: #{conv_po_nsc_forward.1} parent=1 // pred_check_branch
      %66 = sbr.rel (0) target = $region25
    $region24: #{conv_po_nsc_forward.1} parent=1 // pred_region
      %s68 = ssub.s32 16, 16
      %69 = vsyncadd [#allocation12], %s68
      %s71 = sshll.u32 [#allocation13], 4
      %s72 = int_to_ptr.vmem [resolvable:$true] %s71
      %74 = dma.hbm_to_vmem [thread:$0]  %s6, 16, %s72, [#allocation12]
    $region25: #{conv_po_nsc_forward.1} parent=1 // pred_fallthru
      _
    // Predicated region
    $region26: #{conv_po_nsc_forward.1} parent=1 // pred_check
      _
    $region27: #{conv_po_nsc_forward.1} parent=1 // pred_check_branch
      %76 = sbr.rel (0) target = $region29
    $region28: #{conv_po_nsc_forward.1} parent=1 // pred_region
      %s78 = ssub.s32 2048, 2048
      %79 = vsyncadd [#allocation15], %s78
      %s80 = sshll.u32 [#allocation14], 4
      %s81 = int_to_ptr.vmem [resolvable:$true] %s80
      %86 = dma.hbm_to_vmem [thread:$0]  %s7, 2048, %s81, [#allocation15], 128, 128, 8
    $region29: #{conv_po_nsc_forward.1} parent=1 // pred_fallthru
      _
    // Predicated region
    $region30: #{conv_po_nsc_forward.1} parent=1 // pred_check
      _
    $region31: #{conv_po_nsc_forward.1} parent=1 // pred_check_branch
      %88 = sbr.rel (0) target = $region33
    $region32: #{conv_po_nsc_forward.1} parent=1 // pred_region
      %s90 = ssub.s32 16, 16
      %91 = vsyncadd [#allocation15], %s90
      %s93 = sshll.u32 [#allocation16], 4
      %s94 = int_to_ptr.vmem [resolvable:$true] %s93
      %96 = dma.hbm_to_vmem [thread:$0]  %s8, 16, %s94, [#allocation15]
    $region33: #{conv_po_nsc_forward.1} parent=1 // pred_fallthru
      _
    // Predicated region
    $region34: #{conv_po_nsc_forward.1} parent=1 // pred_check
      _
    $region35: #{conv_po_nsc_forward.1} parent=1 // pred_check_branch
      %98 = sbr.rel (0) target = $region37
    $region36: #{conv_po_nsc_forward.1} parent=1 // pred_region
      %99 = dma.done [#allocation6], 64
    $region37: #{conv_po_nsc_forward.1} parent=1 // pred_fallthru
      _
    // Predicated region
    $region38: #{conv_po_nsc_forward.1} parent=1 // pred_check
      _
    $region39: #{conv_po_nsc_forward.1} parent=1 // pred_check_branch
      %101 = sbr.rel (0) target = $region41
    $region40: #{conv_po_nsc_forward.1} parent=1 // pred_region
      %102 = dma.done [#allocation9], 16
    $region41: #{conv_po_nsc_forward.1} parent=1 // pred_fallthru
      _
    // Predicated region
    $region42: #{conv_po_nsc_forward.1} parent=1 // pred_check
      _
    $region43: #{conv_po_nsc_forward.1} parent=1 // pred_check_branch
      %104 = sbr.rel (0) target = $region45
    $region44: #{conv_po_nsc_forward.1} parent=1 // pred_region
      %105 = dma.done [#allocation9], 18432
    $region45: #{conv_po_nsc_forward.1} parent=1 // pred_fallthru
      _
    // Predicated region
    $region46: #{conv_po_nsc_forward.1} parent=1 // pred_check
      _
    $region47: #{conv_po_nsc_forward.1} parent=1 // pred_check_branch
      %107 = sbr.rel (0) target = $region49
    $region48: #{conv_po_nsc_forward.1} parent=1 // pred_region
      %108 = dma.done [#allocation12], 48
    $region49: #{conv_po_nsc_forward.1} parent=1 // pred_fallthru
      _
    // Predicated region
    $region50: #{conv_po_nsc_forward.1} parent=1 // pred_check
      _
    $region51: #{conv_po_nsc_forward.1} parent=1 // pred_check_branch
      %110 = sbr.rel (0) target = $region53
    $region52: #{conv_po_nsc_forward.1} parent=1 // pred_region
      %111 = dma.done [#allocation12], 16
    $region53: #{conv_po_nsc_forward.1} parent=1 // pred_fallthru
      _
    // Predicated region
    $region54: #{conv_po_nsc_forward.1} parent=1 // pred_check
      _
    $region55: #{conv_po_nsc_forward.1} parent=1 // pred_check_branch
      %113 = sbr.rel (0) target = $region57
    $region56: #{conv_po_nsc_forward.1} parent=1 // pred_region
      %114 = dma.done [#allocation15], 2048
    $region57: #{conv_po_nsc_forward.1} parent=1 // pred_fallthru
      _
    // Predicated region
    $region58: #{conv_po_nsc_forward.1} parent=1 // pred_check
      _
    $region59: #{conv_po_nsc_forward.1} parent=1 // pred_check_branch
      %116 = sbr.rel (0) target = $region61
    $region60: #{conv_po_nsc_forward.1} parent=1 // pred_region
      %117 = dma.done [#allocation15], 16
    $region61: #{conv_po_nsc_forward.1} parent=1 // pred_fallthru
      _
    // Predicated region
    $region62: #{conv_po_nsc_forward.1} parent=1 // pred_check
      _
    $region63: #{conv_po_nsc_forward.1} parent=1 // pred_check_branch
      %119 = sbr.rel target = $region65
    $region64: #{conv_po_nsc_forward.1} parent=1 // pred_region
      %120 = sst [smem:[#allocation20]] [#allocation19]
      %121 = sst [smem:[#allocation21]] [#allocation18]
    $region65: #{conv_po_nsc_forward.1} parent=1 // pred_fallthru
      _
    %123 = shalt.err (0)
    %s125 = sshll.u32 [#allocation2], 4
    %s126 = int_to_ptr.vmem [resolvable:$true] %s125
    %128 = dma.hbm_to_vmem [thread:$0]  %s5, 65536, %s126, [#allocation4]
    %v129 = vlaneseq
    %v130 = vshrl.u32 %v129, 7
    %v131 = vadd.s32 %v130, 8
    %v132 = vadd.s32 %v130, 16
    %v133 = vadd.s32 %v130, 24
    %v134 = vadd.s32 %v130, 32
    %v135 = vadd.s32 %v130, 40
    %v136 = vadd.s32 %v130, 48
    %v137 = vadd.s32 %v130, 56
    %v138 = vand.u32 %v130, 31
    %v139 = vand.u32 %v131, 31
    %v140 = vand.u32 %v132, 31
    %v141 = vand.u32 %v133, 31
    %v142 = vand.u32 %v134, 31
    %v143 = vand.u32 %v135, 31
    %v144 = vand.u32 %v136, 31
    %v145 = vand.u32 %v137, 31
    %vm146 = vcmp.ne.s32.totalorder %v138, 0
    %vm147 = vcmp.ne.s32.totalorder %v139, 0
    %vm148 = vcmp.ne.s32.totalorder %v140, 0
    %vm149 = vcmp.ne.s32.totalorder %v141, 0
    %vm150 = vcmp.ne.s32.totalorder %v142, 0
    %vm151 = vcmp.ne.s32.totalorder %v143, 0
    %vm152 = vcmp.ne.s32.totalorder %v144, 0
    %vm153 = vcmp.ne.s32.totalorder %v145, 0
    %vm154 = vcmp.ne.s32.totalorder %v138, 31
    %vm155 = vcmp.ne.s32.totalorder %v139, 31
    %vm156 = vcmp.ne.s32.totalorder %v140, 31
    %vm157 = vcmp.ne.s32.totalorder %v141, 31
    %vm158 = vcmp.ne.s32.totalorder %v142, 31
    %vm159 = vcmp.ne.s32.totalorder %v143, 31
    %vm160 = vcmp.ne.s32.totalorder %v144, 31
    %vm161 = vcmp.ne.s32.totalorder %v145, 31
    %v162 = vld [vmem:[%s0] sm:$0xff]
    %v163 = vld [vmem:[%s0 + $0x8] sm:$0xff]
    %v164 = vld [vmem:[%s0 + $0x10] sm:$0xff]
    %v165 = vld [vmem:[%s0 + $0x18] sm:$0xff]
    %v166 = vld [vmem:[%s0 + $0x20] sm:$0xff]
    %v167 = vld [vmem:[%s0 + $0x28] sm:$0xff]
    %v168 = vld [vmem:[%s0 + $0x30] sm:$0xff]
    %v169 = vld [vmem:[%s0 + $0x38] sm:$0xff]
    %v170 = vld [vmem:[#allocation5] sm:$0x7]
    %172 = vset.pattern.permute.xlu0 0
    %173 = vperm.xlu0 %172, %v162
    %v174 = vpop.permute.xlu0 %173
    %177 = vset.pattern.permute.xlu0 0
    %178 = vperm.xlu0 %177, %v163
    %v179 = vpop.permute.xlu0 %178
    %182 = vset.pattern.permute.xlu0 0
    %183 = vperm.xlu0 %182, %v164
    %v184 = vpop.permute.xlu0 %183
    %187 = vset.pattern.permute.xlu0 0
    %188 = vperm.xlu0 %187, %v165
    %v189 = vpop.permute.xlu0 %188
    %192 = vset.pattern.permute.xlu0 0
    %193 = vperm.xlu0 %192, %v166
    %v194 = vpop.permute.xlu0 %193
    %197 = vset.pattern.permute.xlu0 0
    %198 = vperm.xlu0 %197, %v167
    %v199 = vpop.permute.xlu0 %198
    %202 = vset.pattern.permute.xlu0 0
    %203 = vperm.xlu0 %202, %v168
    %v204 = vpop.permute.xlu0 %203
    %207 = vset.pattern.permute.xlu0 0
    %208 = vperm.xlu0 %207, %v169
    %v209 = vpop.permute.xlu0 %208
    %v211 = vlaneseq
    %v212 = vshrl.u32 %v211, 7
    %v213 = vsub.s32 0, %v212
    %v214 = vrot.slane %v170, %v213
    %v215 = vmul.f32 %v174, %v214
    %v216 = vmul.f32 %v179, %v214
    %v217 = vmul.f32 %v184, %v214
    %v218 = vmul.f32 %v189, %v214
    %v219 = vmul.f32 %v194, %v214
    %v220 = vmul.f32 %v199, %v214
    %v221 = vmul.f32 %v204, %v214
    %v222 = vmul.f32 %v209, %v214
    %v223 = vlaneseq
    %v224 = vshrl.u32 %v223, 7
    %v225 = vsub.s32 1, %v224
    %v226 = vrot.slane %v170, %v225
    %v227 = vmul.f32 %v174, %v226
    %v228 = vmul.f32 %v179, %v226
    %v229 = vmul.f32 %v184, %v226
    %v230 = vmul.f32 %v189, %v226
    %v231 = vmul.f32 %v194, %v226
    %v232 = vmul.f32 %v199, %v226
    %v233 = vmul.f32 %v204, %v226
    %v234 = vmul.f32 %v209, %v226
    %v235 = vlaneseq
    %v236 = vshrl.u32 %v235, 7
    %v237 = vsub.s32 2, %v236
    %v238 = vrot.slane %v170, %v237
    %v239 = vmul.f32 %v174, %v238
    %v240 = vmul.f32 %v179, %v238
    %v241 = vmul.f32 %v184, %v238
    %v242 = vmul.f32 %v189, %v238
    %v243 = vmul.f32 %v194, %v238
    %v244 = vmul.f32 %v199, %v238
    %v245 = vmul.f32 %v204, %v238
    %v246 = vmul.f32 %v209, %v238
    %v247 = vld [vmem:[#allocation8] sm:$0x1]
    %v249 = vlaneseq
    %v250 = vshrl.u32 %v249, 7
    %v251 = vsub.s32 0, %v250
    %v252 = vrot.slane %v247, %v251
    %v254 = vadd.f32 %v227, %v252
    %v255 = vadd.f32 %v228, %v252
    %v256 = vadd.f32 %v229, %v252
    %v257 = vadd.f32 %v230, %v252
    %v258 = vadd.f32 %v231, %v252
    %v259 = vadd.f32 %v232, %v252
    %v260 = vadd.f32 %v233, %v252
    %v261 = vadd.f32 %v234, %v252
    %v262 = vrot.slane %v215, 7
    %v263 = vrot.slane %v216, 7
    %v264 = vrot.slane %v217, 7
    %v265 = vrot.slane %v218, 7
    %v266 = vrot.slane %v219, 7
    %v267 = vrot.slane %v220, 7
    %v268 = vrot.slane %v221, 7
    %v269 = vrot.slane %v222, 7
    %vm270 = vcmp.lt.s32.totalorder %v130, 1
    %v271 = vsel %vm270, %v268, %v269
    %v272 = vsel %vm270, %v267, %v268
    %v273 = vsel %vm270, %v266, %v267
    %v274 = vsel %vm270, %v265, %v266
    %v275 = vsel %vm270, %v264, %v265
    %v276 = vsel %vm270, %v263, %v264
    %v277 = vsel %vm270, %v262, %v263
    %v278 = vsel %vm270, %v269, %v262
    %v279 = vsel %vm146, %v278, 0.0
    %v280 = vsel %vm147, %v277, 0.0
    %v281 = vsel %vm148, %v276, 0.0
    %v282 = vsel %vm149, %v275, 0.0
    %v283 = vsel %vm150, %v274, 0.0
    %v284 = vsel %vm151, %v273, 0.0
    %v285 = vsel %vm152, %v272, 0.0
    %v286 = vsel %vm153, %v271, 0.0
    %v287 = vadd.f32 %v254, %v279
    %v288 = vadd.f32 %v255, %v280
    %v289 = vadd.f32 %v256, %v281
    %v290 = vadd.f32 %v257, %v282
    %v291 = vadd.f32 %v258, %v283
    %v292 = vadd.f32 %v259, %v284
    %v293 = vadd.f32 %v260, %v285
    %v294 = vadd.f32 %v261, %v286
    %v295 = vrot.slane %v239, 1
    %v296 = vrot.slane %v240, 1
    %v297 = vrot.slane %v241, 1
    %v298 = vrot.slane %v242, 1
    %v299 = vrot.slane %v243, 1
    %v300 = vrot.slane %v244, 1
    %v301 = vrot.slane %v245, 1
    %v302 = vrot.slane %v246, 1
    %vm303 = vcmp.lt.s32.totalorder %v130, 7
    %v304 = vsel %vm303, %v301, %v302
    %v305 = vsel %vm303, %v300, %v301
    %v306 = vsel %vm303, %v299, %v300
    %v307 = vsel %vm303, %v298, %v299
    %v308 = vsel %vm303, %v297, %v298
    %v309 = vsel %vm303, %v296, %v297
    %v310 = vsel %vm303, %v295, %v296
    %v311 = vsel %vm303, %v302, %v295
    %v312 = vsel %vm154, %v310, 0.0
    %v313 = vsel %vm155, %v309, 0.0
    %v314 = vsel %vm156, %v308, 0.0
    %v315 = vsel %vm157, %v307, 0.0
    %v316 = vsel %vm158, %v306, 0.0
    %v317 = vsel %vm159, %v305, 0.0
    %v318 = vsel %vm160, %v304, 0.0
    %v319 = vsel %vm161, %v311, 0.0
    %v320 = vadd.f32 %v287, %v312
    %v321 = vadd.f32 %v288, %v313
    %v322 = vadd.f32 %v289, %v314
    %v323 = vadd.f32 %v290, %v315
    %v324 = vadd.f32 %v291, %v316
    %v325 = vadd.f32 %v292, %v317
    %v326 = vadd.f32 %v293, %v318
    %v327 = vadd.f32 %v294, %v319
    %vm328 = vcmp.gt.f32.partialorder %v320, 0.0
    %vm329 = vcmp.gt.f32.partialorder %v321, 0.0
    %vm330 = vcmp.gt.f32.partialorder %v322, 0.0
    %vm331 = vcmp.gt.f32.partialorder %v323, 0.0
    %vm332 = vcmp.gt.f32.partialorder %v324, 0.0
    %vm333 = vcmp.gt.f32.partialorder %v325, 0.0
    %vm334 = vcmp.gt.f32.partialorder %v326, 0.0
    %vm335 = vcmp.gt.f32.partialorder %v327, 0.0
    %v336 = vmul.f32 %v320, 0.01
    %v337 = vmul.f32 %v321, 0.01
    %v338 = vmul.f32 %v322, 0.01
    %v339 = vmul.f32 %v323, 0.01
    %v340 = vmul.f32 %v324, 0.01
    %v341 = vmul.f32 %v325, 0.01
    %v342 = vmul.f32 %v326, 0.01
    %v343 = vmul.f32 %v327, 0.01
    %v344 = vsel %vm328, %v320, %v336
    %v345 = vsel %vm329, %v321, %v337
    %v346 = vsel %vm330, %v322, %v338
    %v347 = vsel %vm331, %v323, %v339
    %v348 = vsel %vm332, %v324, %v340
    %v349 = vsel %vm333, %v325, %v341
    %v350 = vsel %vm334, %v326, %v342
    %v351 = vsel %vm335, %v327, %v343
    %v352 = vrot.slane %v344, 7
    %v353 = vrot.slane %v345, 7
    %v354 = vrot.slane %v346, 7
    %v355 = vrot.slane %v347, 7
    %v356 = vrot.slane %v348, 7
    %v357 = vrot.slane %v349, 7
    %v358 = vrot.slane %v350, 7
    %v359 = vrot.slane %v351, 7
    %v360 = vsel %vm270, %v358, %v359
    %v361 = vsel %vm270, %v357, %v358
    %v362 = vsel %vm270, %v356, %v357
    %v363 = vsel %vm270, %v355, %v356
    %v364 = vsel %vm270, %v354, %v355
    %v365 = vsel %vm270, %v353, %v354
    %v366 = vsel %vm270, %v352, %v353
    %v367 = vsel %vm270, %v359, %v352
    %v368 = vsel %vm146, %v367, 0.0
    %v369 = vsel %vm147, %v366, 0.0
    %v370 = vsel %vm148, %v365, 0.0
    %v371 = vsel %vm149, %v364, 0.0
    %v372 = vsel %vm150, %v363, 0.0
    %v373 = vsel %vm151, %v362, 0.0
    %v374 = vsel %vm152, %v361, 0.0
    %v375 = vsel %vm153, %v360, 0.0
    %v376 = vrot.slane %v344, 1
    %v377 = vrot.slane %v345, 1
    %v378 = vrot.slane %v346, 1
    %v379 = vrot.slane %v347, 1
    %v380 = vrot.slane %v348, 1
    %v381 = vrot.slane %v349, 1
    %v382 = vrot.slane %v350, 1
    %v383 = vrot.slane %v351, 1
    %v384 = vsel %vm303, %v382, %v383
    %v385 = vsel %vm303, %v381, %v382
    %v386 = vsel %vm303, %v380, %v381
    %v387 = vsel %vm303, %v379, %v380
    %v388 = vsel %vm303, %v378, %v379
    %v389 = vsel %vm303, %v377, %v378
    %v390 = vsel %vm303, %v376, %v377
    %v391 = vsel %vm303, %v383, %v376
    %v392 = vsel %vm154, %v390, 0.0
    %v393 = vsel %vm155, %v389, 0.0
    %v394 = vsel %vm156, %v388, 0.0
    %v395 = vsel %vm157, %v387, 0.0
    %v396 = vsel %vm158, %v386, 0.0
    %v397 = vsel %vm159, %v385, 0.0
    %v398 = vsel %vm160, %v384, 0.0
    %v399 = vsel %vm161, %v391, 0.0
    %s400 = scalar_lea.vmem [#allocation10], 128
    %v401 = vld [vmem:[%s400] sm:$0xff]
    %v402 = vld [vmem:[%s400 + $0x8] sm:$0xff]
    %v403 = vld [vmem:[%s400 + $0x10] sm:$0xff]
    %v404 = vld [vmem:[%s400 + $0x18] sm:$0xff]
    %v405 = vld [vmem:[%s400 + $0x20] sm:$0xff]
    %v406 = vld [vmem:[%s400 + $0x28] sm:$0xff]
    %v407 = vld [vmem:[%s400 + $0x30] sm:$0xff]
    %v408 = vld [vmem:[%s400 + $0x38] sm:$0xff]
    %v409 = vld [vmem:[%s400 + $0x40] sm:$0xff]
    %v410 = vld [vmem:[%s400 + $0x48] sm:$0xff]
    %v411 = vld [vmem:[%s400 + $0x50] sm:$0xff]
    %v412 = vld [vmem:[%s400 + $0x58] sm:$0xff]
    %v413 = vld [vmem:[%s400 + $0x60] sm:$0xff]
    %v414 = vld [vmem:[%s400 + $0x68] sm:$0xff]
    %v415 = vld [vmem:[%s400 + $0x70] sm:$0xff]
    %v416 = vld [vmem:[%s400 + $0x78] sm:$0xff]
    %v417 = vld [vmem:[#allocation10] sm:$0xff]
    %v418 = vld [vmem:[#allocation10 + $0x8] sm:$0xff]
    %v419 = vld [vmem:[#allocation10 + $0x10] sm:$0xff]
    %v420 = vld [vmem:[#allocation10 + $0x18] sm:$0xff]
    %v421 = vld [vmem:[#allocation10 + $0x20] sm:$0xff]
    %v422 = vld [vmem:[#allocation10 + $0x28] sm:$0xff]
    %v423 = vld [vmem:[#allocation10 + $0x30] sm:$0xff]
    %v424 = vld [vmem:[#allocation10 + $0x38] sm:$0xff]
    %v425 = vld [vmem:[#allocation10 + $0x40] sm:$0xff]
    %v426 = vld [vmem:[#allocation10 + $0x48] sm:$0xff]
    %v427 = vld [vmem:[#allocation10 + $0x50] sm:$0xff]
    %v428 = vld [vmem:[#allocation10 + $0x58] sm:$0xff]
    %v429 = vld [vmem:[#allocation10 + $0x60] sm:$0xff]
    %v430 = vld [vmem:[#allocation10 + $0x68] sm:$0xff]
    %v431 = vld [vmem:[#allocation10 + $0x70] sm:$0xff]
    %v432 = vld [vmem:[#allocation10 + $0x78] sm:$0xff]
    %433 = vmatprep.subr.mxu0 0.0
    %434 = vmatpush1.msra.mxu0 %v432
    %435 = vmatprep.subr.mxu0 0.0
    %436 = vmatpush1.msra.mxu0 %v431
    %437 = vmatprep.subr.mxu0 0.0
    %438 = vmatpush1.msra.mxu0 %v430
    %439 = vmatprep.subr.mxu0 0.0
    %440 = vmatpush1.msra.mxu0 %v429
    %441 = vmatprep.subr.mxu0 0.0
    %442 = vmatpush1.msra.mxu0 %v428
    %443 = vmatprep.subr.mxu0 0.0
    %444 = vmatpush1.msra.mxu0 %v427
    %445 = vmatprep.subr.mxu0 0.0
    %446 = vmatpush1.msra.mxu0 %v426
    %447 = vmatprep.subr.mxu0 0.0
    %448 = vmatpush1.msra.mxu0 %v425
    %449 = vmatprep.subr.mxu0 0.0
    %450 = vmatpush1.msra.mxu0 %v424
    %451 = vmatprep.subr.mxu0 0.0
    %452 = vmatpush1.msra.mxu0 %v423
    %453 = vmatprep.subr.mxu0 0.0
    %454 = vmatpush1.msra.mxu0 %v422
    %455 = vmatprep.subr.mxu0 0.0
    %456 = vmatpush1.msra.mxu0 %v421
    %457 = vmatprep.subr.mxu0 0.0
    %458 = vmatpush1.msra.mxu0 %v420
    %459 = vmatprep.subr.mxu0 0.0
    %460 = vmatpush1.msra.mxu0 %v419
    %461 = vmatprep.subr.mxu0 0.0
    %462 = vmatpush1.msra.mxu0 %v418
    %463 = vmatprep.subr.mxu0 0.0
    %464 = vmatpush1.msra.mxu0 %v417
    %465 = vmatprep.subr.mxu0 0.0
    %466 = vmatpush2.msra.mxu0 0.0
    %467 = vmatprep.subr.mxu0 0.0
    %468 = vmatpush2.msra.mxu0 0.0
    %469 = vmatprep.subr.mxu0 0.0
    %470 = vmatpush2.msra.mxu0 0.0
    %471 = vmatprep.subr.mxu0 0.0
    %472 = vmatpush2.msra.mxu0 0.0
    %473 = vmatprep.subr.mxu0 0.0
    %474 = vmatpush2.msra.mxu0 0.0
    %475 = vmatprep.subr.mxu0 0.0
    %476 = vmatpush2.msra.mxu0 0.0
    %477 = vmatprep.subr.mxu0 0.0
    %478 = vmatpush2.msra.mxu0 0.0
    %479 = vmatprep.subr.mxu0 0.0
    %480 = vmatpush2.msra.mxu0 0.0
    %481 = vmatprep.subr.mxu0 0.0
    %482 = vmatpush2.msra.mxu0 0.0
    %483 = vmatprep.subr.mxu0 0.0
    %484 = vmatpush2.msra.mxu0 0.0
    %485 = vmatprep.subr.mxu0 0.0
    %486 = vmatpush2.msra.mxu0 0.0
    %487 = vmatprep.subr.mxu0 0.0
    %488 = vmatpush2.msra.mxu0 0.0
    %489 = vmatprep.subr.mxu0 0.0
    %490 = vmatpush2.msra.mxu0 0.0
    %491 = vmatprep.subr.mxu0 0.0
    %492 = vmatpush2.msra.mxu0 0.0
    %493 = vmatprep.subr.mxu0 0.0
    %494 = vmatpush2.msra.mxu0 0.0
    %495 = vmatprep.subr.mxu0 0.0
    %496 = vmatpush2.msra.mxu0 0.0
    %497 = vmatprep.mubr.f32.mxu0 0.0
    %498 = vmatmul.mubr.f32.gmra.mxu0 %v368
    %v499 = vpop.f32.mrf.mxu0
    %v500 = vadd.f32 0.0, %v499
    %v501 = vpop.f32.mrf.mxu0
    %502 = vmatprep.mubr.f32.mxu0 0.0
    %503 = vmatmul.mubr.f32.gmra.mxu0 %v369
    %v504 = vpop.f32.mrf.mxu0
    %v505 = vadd.f32 0.0, %v504
    %v506 = vpop.f32.mrf.mxu0
    %507 = vmatprep.mubr.f32.mxu0 0.0
    %508 = vmatmul.mubr.f32.gmra.mxu0 %v370
    %v509 = vpop.f32.mrf.mxu0
    %v510 = vadd.f32 0.0, %v509
    %v511 = vpop.f32.mrf.mxu0
    %512 = vmatprep.mubr.f32.mxu0 0.0
    %513 = vmatmul.mubr.f32.gmra.mxu0 %v371
    %v514 = vpop.f32.mrf.mxu0
    %v515 = vadd.f32 0.0, %v514
    %v516 = vpop.f32.mrf.mxu0
    %517 = vmatprep.mubr.f32.mxu0 0.0
    %518 = vmatmul.mubr.f32.gmra.mxu0 %v372
    %v519 = vpop.f32.mrf.mxu0
    %v520 = vadd.f32 0.0, %v519
    %v521 = vpop.f32.mrf.mxu0
    %522 = vmatprep.mubr.f32.mxu0 0.0
    %523 = vmatmul.mubr.f32.gmra.mxu0 %v373
    %v524 = vpop.f32.mrf.mxu0
    %v525 = vadd.f32 0.0, %v524
    %v526 = vpop.f32.mrf.mxu0
    %527 = vmatprep.mubr.f32.mxu0 0.0
    %528 = vmatmul.mubr.f32.gmra.mxu0 %v374
    %v529 = vpop.f32.mrf.mxu0
    %v530 = vadd.f32 0.0, %v529
    %v531 = vpop.f32.mrf.mxu0
    %532 = vmatprep.mubr.f32.mxu0 0.0
    %533 = vmatmul.mubr.f32.gmra.mxu0 %v375
    %v534 = vpop.f32.mrf.mxu0
    %v535 = vadd.f32 0.0, %v534
    %v536 = vpop.f32.mrf.mxu0
    %537 = vdwg.mxu0
    %538 = vmatprep.subr.mxu0 0.0
    %539 = vmatpush1.msra.mxu0 %v416
    %540 = vmatprep.subr.mxu0 0.0
    %541 = vmatpush1.msra.mxu0 %v415
    %542 = vmatprep.subr.mxu0 0.0
    %543 = vmatpush1.msra.mxu0 %v414
    %544 = vmatprep.subr.mxu0 0.0
    %545 = vmatpush1.msra.mxu0 %v413
    %546 = vmatprep.subr.mxu0 0.0
    %547 = vmatpush1.msra.mxu0 %v412
    %548 = vmatprep.subr.mxu0 0.0
    %549 = vmatpush1.msra.mxu0 %v411
    %550 = vmatprep.subr.mxu0 0.0
    %551 = vmatpush1.msra.mxu0 %v410
    %552 = vmatprep.subr.mxu0 0.0
    %553 = vmatpush1.msra.mxu0 %v409
    %554 = vmatprep.subr.mxu0 0.0
    %555 = vmatpush1.msra.mxu0 %v408
    %556 = vmatprep.subr.mxu0 0.0
    %557 = vmatpush1.msra.mxu0 %v407
    %558 = vmatprep.subr.mxu0 0.0
    %559 = vmatpush1.msra.mxu0 %v406
    %560 = vmatprep.subr.mxu0 0.0
    %561 = vmatpush1.msra.mxu0 %v405
    %562 = vmatprep.subr.mxu0 0.0
    %563 = vmatpush1.msra.mxu0 %v404
    %564 = vmatprep.subr.mxu0 0.0
    %565 = vmatpush1.msra.mxu0 %v403
    %566 = vmatprep.subr.mxu0 0.0
    %567 = vmatpush1.msra.mxu0 %v402
    %568 = vmatprep.subr.mxu0 0.0
    %569 = vmatpush1.msra.mxu0 %v401
    %570 = vmatprep.subr.mxu0 0.0
    %571 = vmatpush2.msra.mxu0 0.0
    %572 = vmatprep.subr.mxu0 0.0
    %573 = vmatpush2.msra.mxu0 0.0
    %574 = vmatprep.subr.mxu0 0.0
    %575 = vmatpush2.msra.mxu0 0.0
    %576 = vmatprep.subr.mxu0 0.0
    %577 = vmatpush2.msra.mxu0 0.0
    %578 = vmatprep.subr.mxu0 0.0
    %579 = vmatpush2.msra.mxu0 0.0
    %580 = vmatprep.subr.mxu0 0.0
    %581 = vmatpush2.msra.mxu0 0.0
    %582 = vmatprep.subr.mxu0 0.0
    %583 = vmatpush2.msra.mxu0 0.0
    %584 = vmatprep.subr.mxu0 0.0
    %585 = vmatpush2.msra.mxu0 0.0
    %586 = vmatprep.subr.mxu0 0.0
    %587 = vmatpush2.msra.mxu0 0.0
    %588 = vmatprep.subr.mxu0 0.0
    %589 = vmatpush2.msra.mxu0 0.0
    %590 = vmatprep.subr.mxu0 0.0
    %591 = vmatpush2.msra.mxu0 0.0
    %592 = vmatprep.subr.mxu0 0.0
    %593 = vmatpush2.msra.mxu0 0.0
    %594 = vmatprep.subr.mxu0 0.0
    %595 = vmatpush2.msra.mxu0 0.0
    %596 = vmatprep.subr.mxu0 0.0
    %597 = vmatpush2.msra.mxu0 0.0
    %598 = vmatprep.subr.mxu0 0.0
    %599 = vmatpush2.msra.mxu0 0.0
    %600 = vmatprep.subr.mxu0 0.0
    %601 = vmatpush2.msra.mxu0 0.0
    %602 = vmatprep.mubr.f32.mxu0 0.0
    %603 = vmatmul.mubr.f32.gmra.mxu0 %v344
    %v604 = vpop.f32.mrf.mxu0
    %v605 = vadd.f32 %v500, %v604
    %v606 = vpop.f32.mrf.mxu0
    %607 = vmatprep.mubr.f32.mxu0 0.0
    %608 = vmatmul.mubr.f32.gmra.mxu0 %v345
    %v609 = vpop.f32.mrf.mxu0
    %v610 = vadd.f32 %v505, %v609
    %v611 = vpop.f32.mrf.mxu0
    %612 = vmatprep.mubr.f32.mxu0 0.0
    %613 = vmatmul.mubr.f32.gmra.mxu0 %v346
    %v614 = vpop.f32.mrf.mxu0
    %v615 = vadd.f32 %v510, %v614
    %v616 = vpop.f32.mrf.mxu0
    %617 = vmatprep.mubr.f32.mxu0 0.0
    %618 = vmatmul.mubr.f32.gmra.mxu0 %v347
    %v619 = vpop.f32.mrf.mxu0
    %v620 = vadd.f32 %v515, %v619
    %v621 = vpop.f32.mrf.mxu0
    %622 = vmatprep.mubr.f32.mxu0 0.0
    %623 = vmatmul.mubr.f32.gmra.mxu0 %v348
    %v624 = vpop.f32.mrf.mxu0
    %v625 = vadd.f32 %v520, %v624
    %v626 = vpop.f32.mrf.mxu0
    %627 = vmatprep.mubr.f32.mxu0 0.0
    %628 = vmatmul.mubr.f32.gmra.mxu0 %v349
    %v629 = vpop.f32.mrf.mxu0
    %v630 = vadd.f32 %v525, %v629
    %v631 = vpop.f32.mrf.mxu0
    %632 = vmatprep.mubr.f32.mxu0 0.0
    %633 = vmatmul.mubr.f32.gmra.mxu0 %v350
    %v634 = vpop.f32.mrf.mxu0
    %v635 = vadd.f32 %v530, %v634
    %v636 = vpop.f32.mrf.mxu0
    %637 = vmatprep.mubr.f32.mxu0 0.0
    %638 = vmatmul.mubr.f32.gmra.mxu0 %v351
    %v639 = vpop.f32.mrf.mxu0
    %v640 = vadd.f32 %v535, %v639
    %v641 = vpop.f32.mrf.mxu0
    %642 = vdwg.mxu0
    %s643 = scalar_lea.vmem [#allocation10], 256
    %v644 = vld [vmem:[%s643] sm:$0xff]
    %v645 = vld [vmem:[%s643 + $0x8] sm:$0xff]
    %v646 = vld [vmem:[%s643 + $0x10] sm:$0xff]
    %v647 = vld [vmem:[%s643 + $0x18] sm:$0xff]
    %v648 = vld [vmem:[%s643 + $0x20] sm:$0xff]
    %v649 = vld [vmem:[%s643 + $0x28] sm:$0xff]
    %v650 = vld [vmem:[%s643 + $0x30] sm:$0xff]
    %v651 = vld [vmem:[%s643 + $0x38] sm:$0xff]
    %v652 = vld [vmem:[%s643 + $0x40] sm:$0xff]
    %v653 = vld [vmem:[%s643 + $0x48] sm:$0xff]
    %v654 = vld [vmem:[%s643 + $0x50] sm:$0xff]
    %v655 = vld [vmem:[%s643 + $0x58] sm:$0xff]
    %v656 = vld [vmem:[%s643 + $0x60] sm:$0xff]
    %v657 = vld [vmem:[%s643 + $0x68] sm:$0xff]
    %v658 = vld [vmem:[%s643 + $0x70] sm:$0xff]
    %v659 = vld [vmem:[%s643 + $0x78] sm:$0xff]
    %660 = vmatprep.subr.mxu0 0.0
    %661 = vmatpush1.msra.mxu0 %v659
    %662 = vmatprep.subr.mxu0 0.0
    %663 = vmatpush1.msra.mxu0 %v658
    %664 = vmatprep.subr.mxu0 0.0
    %665 = vmatpush1.msra.mxu0 %v657
    %666 = vmatprep.subr.mxu0 0.0
    %667 = vmatpush1.msra.mxu0 %v656
    %668 = vmatprep.subr.mxu0 0.0
    %669 = vmatpush1.msra.mxu0 %v655
    %670 = vmatprep.subr.mxu0 0.0
    %671 = vmatpush1.msra.mxu0 %v654
    %672 = vmatprep.subr.mxu0 0.0
    %673 = vmatpush1.msra.mxu0 %v653
    %674 = vmatprep.subr.mxu0 0.0
    %675 = vmatpush1.msra.mxu0 %v652
    %676 = vmatprep.subr.mxu0 0.0
    %677 = vmatpush1.msra.mxu0 %v651
    %678 = vmatprep.subr.mxu0 0.0
    %679 = vmatpush1.msra.mxu0 %v650
    %680 = vmatprep.subr.mxu0 0.0
    %681 = vmatpush1.msra.mxu0 %v649
    %682 = vmatprep.subr.mxu0 0.0
    %683 = vmatpush1.msra.mxu0 %v648
    %684 = vmatprep.subr.mxu0 0.0
    %685 = vmatpush1.msra.mxu0 %v647
    %686 = vmatprep.subr.mxu0 0.0
    %687 = vmatpush1.msra.mxu0 %v646
    %688 = vmatprep.subr.mxu0 0.0
    %689 = vmatpush1.msra.mxu0 %v645
    %690 = vmatprep.subr.mxu0 0.0
    %691 = vmatpush1.msra.mxu0 %v644
    %692 = vmatprep.subr.mxu0 0.0
    %693 = vmatpush2.msra.mxu0 0.0
    %694 = vmatprep.subr.mxu0 0.0
    %695 = vmatpush2.msra.mxu0 0.0
    %696 = vmatprep.subr.mxu0 0.0
    %697 = vmatpush2.msra.mxu0 0.0
    %698 = vmatprep.subr.mxu0 0.0
    %699 = vmatpush2.msra.mxu0 0.0
    %700 = vmatprep.subr.mxu0 0.0
    %701 = vmatpush2.msra.mxu0 0.0
    %702 = vmatprep.subr.mxu0 0.0
    %703 = vmatpush2.msra.mxu0 0.0
    %704 = vmatprep.subr.mxu0 0.0
    %705 = vmatpush2.msra.mxu0 0.0
    %706 = vmatprep.subr.mxu0 0.0
    %707 = vmatpush2.msra.mxu0 0.0
    %708 = vmatprep.subr.mxu0 0.0
    %709 = vmatpush2.msra.mxu0 0.0
    %710 = vmatprep.subr.mxu0 0.0
    %711 = vmatpush2.msra.mxu0 0.0
    %712 = vmatprep.subr.mxu0 0.0
    %713 = vmatpush2.msra.mxu0 0.0
    %714 = vmatprep.subr.mxu0 0.0
    %715 = vmatpush2.msra.mxu0 0.0
    %716 = vmatprep.subr.mxu0 0.0
    %717 = vmatpush2.msra.mxu0 0.0
    %718 = vmatprep.subr.mxu0 0.0
    %719 = vmatpush2.msra.mxu0 0.0
    %720 = vmatprep.subr.mxu0 0.0
    %721 = vmatpush2.msra.mxu0 0.0
    %722 = vmatprep.subr.mxu0 0.0
    %723 = vmatpush2.msra.mxu0 0.0
    %724 = vmatprep.mubr.f32.mxu0 0.0
    %725 = vmatmul.mubr.f32.gmra.mxu0 %v392
    %v726 = vpop.f32.mrf.mxu0
    %v727 = vadd.f32 0.0, %v726
    %v728 = vpop.f32.mrf.mxu0
    %729 = vmatprep.mubr.f32.mxu0 0.0
    %730 = vmatmul.mubr.f32.gmra.mxu0 %v393
    %v731 = vpop.f32.mrf.mxu0
    %v732 = vadd.f32 0.0, %v731
    %v733 = vpop.f32.mrf.mxu0
    %734 = vmatprep.mubr.f32.mxu0 0.0
    %735 = vmatmul.mubr.f32.gmra.mxu0 %v394
    %v736 = vpop.f32.mrf.mxu0
    %v737 = vadd.f32 0.0, %v736
    %v738 = vpop.f32.mrf.mxu0
    %739 = vmatprep.mubr.f32.mxu0 0.0
    %740 = vmatmul.mubr.f32.gmra.mxu0 %v395
    %v741 = vpop.f32.mrf.mxu0
    %v742 = vadd.f32 0.0, %v741
    %v743 = vpop.f32.mrf.mxu0
    %744 = vmatprep.mubr.f32.mxu0 0.0
    %745 = vmatmul.mubr.f32.gmra.mxu0 %v396
    %v746 = vpop.f32.mrf.mxu0
    %v747 = vadd.f32 0.0, %v746
    %v748 = vpop.f32.mrf.mxu0
    %749 = vmatprep.mubr.f32.mxu0 0.0
    %750 = vmatmul.mubr.f32.gmra.mxu0 %v397
    %v751 = vpop.f32.mrf.mxu0
    %v752 = vadd.f32 0.0, %v751
    %v753 = vpop.f32.mrf.mxu0
    %754 = vmatprep.mubr.f32.mxu0 0.0
    %755 = vmatmul.mubr.f32.gmra.mxu0 %v398
    %v756 = vpop.f32.mrf.mxu0
    %v757 = vadd.f32 0.0, %v756
    %v758 = vpop.f32.mrf.mxu0
    %759 = vmatprep.mubr.f32.mxu0 0.0
    %760 = vmatmul.mubr.f32.gmra.mxu0 %v399
    %v761 = vpop.f32.mrf.mxu0
    %v762 = vadd.f32 0.0, %v761
    %v763 = vpop.f32.mrf.mxu0
    %764 = vdwg.mxu0
    %v765 = vadd.f32 %v605, %v727
    %v766 = vadd.f32 %v610, %v732
    %v767 = vadd.f32 %v615, %v737
    %v768 = vadd.f32 %v620, %v742
    %v769 = vadd.f32 %v625, %v747
    %v770 = vadd.f32 %v630, %v752
    %v771 = vadd.f32 %v635, %v757
    %v772 = vadd.f32 %v640, %v762
    %v773 = vld [vmem:[#allocation11] sm:$0x1]
    %v775 = vlaneseq
    %v776 = vshrl.u32 %v775, 7
    %v777 = vsub.s32 0, %v776
    %v778 = vrot.slane %v773, %v777
    %v780 = vadd.f32 %v765, %v778
    %v781 = vadd.f32 %v766, %v778
    %v782 = vadd.f32 %v767, %v778
    %v783 = vadd.f32 %v768, %v778
    %v784 = vadd.f32 %v769, %v778
    %v785 = vadd.f32 %v770, %v778
    %v786 = vadd.f32 %v771, %v778
    %v787 = vadd.f32 %v772, %v778
    %vm788 = vcmp.gt.f32.partialorder %v780, 0.0
    %vm789 = vcmp.gt.f32.partialorder %v781, 0.0
    %vm790 = vcmp.gt.f32.partialorder %v782, 0.0
    %vm791 = vcmp.gt.f32.partialorder %v783, 0.0
    %vm792 = vcmp.gt.f32.partialorder %v784, 0.0
    %vm793 = vcmp.gt.f32.partialorder %v785, 0.0
    %vm794 = vcmp.gt.f32.partialorder %v786, 0.0
    %vm795 = vcmp.gt.f32.partialorder %v787, 0.0
    %v796 = vmul.f32 %v780, 0.01
    %v797 = vmul.f32 %v781, 0.01
    %v798 = vmul.f32 %v782, 0.01
    %v799 = vmul.f32 %v783, 0.01
    %v800 = vmul.f32 %v784, 0.01
    %v801 = vmul.f32 %v785, 0.01
    %v802 = vmul.f32 %v786, 0.01
    %v803 = vmul.f32 %v787, 0.01
    %v804 = vsel %vm788, %v780, %v796
    %v805 = vsel %vm789, %v781, %v797
    %v806 = vsel %vm790, %v782, %v798
    %v807 = vsel %vm791, %v783, %v799
    %v808 = vsel %vm792, %v784, %v800
    %v809 = vsel %vm793, %v785, %v801
    %v810 = vsel %vm794, %v786, %v802
    %v811 = vsel %vm795, %v787, %v803
    %v812 = vrot.slane %v804, 7
    %v813 = vrot.slane %v805, 7
    %v814 = vrot.slane %v806, 7
    %v815 = vrot.slane %v807, 7
    %v816 = vrot.slane %v808, 7
    %v817 = vrot.slane %v809, 7
    %v818 = vrot.slane %v810, 7
    %v819 = vrot.slane %v811, 7
    %v820 = vsel %vm270, %v818, %v819
    %v821 = vsel %vm270, %v817, %v818
    %v822 = vsel %vm270, %v816, %v817
    %v823 = vsel %vm270, %v815, %v816
    %v824 = vsel %vm270, %v814, %v815
    %v825 = vsel %vm270, %v813, %v814
    %v826 = vsel %vm270, %v812, %v813
    %v827 = vsel %vm270, %v819, %v812
    %v828 = vsel %vm146, %v827, 0.0
    %v829 = vsel %vm147, %v826, 0.0
    %v830 = vsel %vm148, %v825, 0.0
    %v831 = vsel %vm149, %v824, 0.0
    %v832 = vsel %vm150, %v823, 0.0
    %v833 = vsel %vm151, %v822, 0.0
    %v834 = vsel %vm152, %v821, 0.0
    %v835 = vsel %vm153, %v820, 0.0
    %v836 = vrot.slane %v804, 1
    %v837 = vrot.slane %v805, 1
    %v838 = vrot.slane %v806, 1
    %v839 = vrot.slane %v807, 1
    %v840 = vrot.slane %v808, 1
    %v841 = vrot.slane %v809, 1
    %v842 = vrot.slane %v810, 1
    %v843 = vrot.slane %v811, 1
    %v844 = vsel %vm303, %v842, %v843
    %v845 = vsel %vm303, %v841, %v842
    %v846 = vsel %vm303, %v840, %v841
    %v847 = vsel %vm303, %v839, %v840
    %v848 = vsel %vm303, %v838, %v839
    %v849 = vsel %vm303, %v837, %v838
    %v850 = vsel %vm303, %v836, %v837
    %v851 = vsel %vm303, %v843, %v836
    %v852 = vsel %vm154, %v850, 0.0
    %v853 = vsel %vm155, %v849, 0.0
    %v854 = vsel %vm156, %v848, 0.0
    %v855 = vsel %vm157, %v847, 0.0
    %v856 = vsel %vm158, %v846, 0.0
    %v857 = vsel %vm159, %v845, 0.0
    %v858 = vsel %vm160, %v844, 0.0
    %v859 = vsel %vm161, %v851, 0.0
    %s860 = scalar_lea.vmem [#allocation10], 512
    %v861 = vld [vmem:[%s860] sm:$0xff]
    %v862 = vld [vmem:[%s860 + $0x8] sm:$0xff]
    %v863 = vld [vmem:[%s860 + $0x10] sm:$0xff]
    %v864 = vld [vmem:[%s860 + $0x18] sm:$0xff]
    %v865 = vld [vmem:[%s860 + $0x20] sm:$0xff]
    %v866 = vld [vmem:[%s860 + $0x28] sm:$0xff]
    %v867 = vld [vmem:[%s860 + $0x30] sm:$0xff]
    %v868 = vld [vmem:[%s860 + $0x38] sm:$0xff]
    %v869 = vld [vmem:[%s860 + $0x40] sm:$0xff]
    %v870 = vld [vmem:[%s860 + $0x48] sm:$0xff]
    %v871 = vld [vmem:[%s860 + $0x50] sm:$0xff]
    %v872 = vld [vmem:[%s860 + $0x58] sm:$0xff]
    %v873 = vld [vmem:[%s860 + $0x60] sm:$0xff]
    %v874 = vld [vmem:[%s860 + $0x68] sm:$0xff]
    %v875 = vld [vmem:[%s860 + $0x70] sm:$0xff]
    %v876 = vld [vmem:[%s860 + $0x78] sm:$0xff]
    %s877 = scalar_lea.vmem [#allocation10], 384
    %v878 = vld [vmem:[%s877] sm:$0xff]
    %v879 = vld [vmem:[%s877 + $0x8] sm:$0xff]
    %v880 = vld [vmem:[%s877 + $0x10] sm:$0xff]
    %v881 = vld [vmem:[%s877 + $0x18] sm:$0xff]
    %v882 = vld [vmem:[%s877 + $0x20] sm:$0xff]
    %v883 = vld [vmem:[%s877 + $0x28] sm:$0xff]
    %v884 = vld [vmem:[%s877 + $0x30] sm:$0xff]
    %v885 = vld [vmem:[%s877 + $0x38] sm:$0xff]
    %v886 = vld [vmem:[%s877 + $0x40] sm:$0xff]
    %v887 = vld [vmem:[%s877 + $0x48] sm:$0xff]
    %v888 = vld [vmem:[%s877 + $0x50] sm:$0xff]
    %v889 = vld [vmem:[%s877 + $0x58] sm:$0xff]
    %v890 = vld [vmem:[%s877 + $0x60] sm:$0xff]
    %v891 = vld [vmem:[%s877 + $0x68] sm:$0xff]
    %v892 = vld [vmem:[%s877 + $0x70] sm:$0xff]
    %v893 = vld [vmem:[%s877 + $0x78] sm:$0xff]
    %894 = vmatprep.subr.mxu0 0.0
    %895 = vmatpush1.msra.mxu0 %v893
    %896 = vmatprep.subr.mxu0 0.0
    %897 = vmatpush1.msra.mxu0 %v892
    %898 = vmatprep.subr.mxu0 0.0
    %899 = vmatpush1.msra.mxu0 %v891
    %900 = vmatprep.subr.mxu0 0.0
    %901 = vmatpush1.msra.mxu0 %v890
    %902 = vmatprep.subr.mxu0 0.0
    %903 = vmatpush1.msra.mxu0 %v889
    %904 = vmatprep.subr.mxu0 0.0
    %905 = vmatpush1.msra.mxu0 %v888
    %906 = vmatprep.subr.mxu0 0.0
    %907 = vmatpush1.msra.mxu0 %v887
    %908 = vmatprep.subr.mxu0 0.0
    %909 = vmatpush1.msra.mxu0 %v886
    %910 = vmatprep.subr.mxu0 0.0
    %911 = vmatpush1.msra.mxu0 %v885
    %912 = vmatprep.subr.mxu0 0.0
    %913 = vmatpush1.msra.mxu0 %v884
    %914 = vmatprep.subr.mxu0 0.0
    %915 = vmatpush1.msra.mxu0 %v883
    %916 = vmatprep.subr.mxu0 0.0
    %917 = vmatpush1.msra.mxu0 %v882
    %918 = vmatprep.subr.mxu0 0.0
    %919 = vmatpush1.msra.mxu0 %v881
    %920 = vmatprep.subr.mxu0 0.0
    %921 = vmatpush1.msra.mxu0 %v880
    %922 = vmatprep.subr.mxu0 0.0
    %923 = vmatpush1.msra.mxu0 %v879
    %924 = vmatprep.subr.mxu0 0.0
    %925 = vmatpush1.msra.mxu0 %v878
    %926 = vmatprep.subr.mxu0 0.0
    %927 = vmatpush2.msra.mxu0 0.0
    %928 = vmatprep.subr.mxu0 0.0
    %929 = vmatpush2.msra.mxu0 0.0
    %930 = vmatprep.subr.mxu0 0.0
    %931 = vmatpush2.msra.mxu0 0.0
    %932 = vmatprep.subr.mxu0 0.0
    %933 = vmatpush2.msra.mxu0 0.0
    %934 = vmatprep.subr.mxu0 0.0
    %935 = vmatpush2.msra.mxu0 0.0
    %936 = vmatprep.subr.mxu0 0.0
    %937 = vmatpush2.msra.mxu0 0.0
    %938 = vmatprep.subr.mxu0 0.0
    %939 = vmatpush2.msra.mxu0 0.0
    %940 = vmatprep.subr.mxu0 0.0
    %941 = vmatpush2.msra.mxu0 0.0
    %942 = vmatprep.subr.mxu0 0.0
    %943 = vmatpush2.msra.mxu0 0.0
    %944 = vmatprep.subr.mxu0 0.0
    %945 = vmatpush2.msra.mxu0 0.0
    %946 = vmatprep.subr.mxu0 0.0
    %947 = vmatpush2.msra.mxu0 0.0
    %948 = vmatprep.subr.mxu0 0.0
    %949 = vmatpush2.msra.mxu0 0.0
    %950 = vmatprep.subr.mxu0 0.0
    %951 = vmatpush2.msra.mxu0 0.0
    %952 = vmatprep.subr.mxu0 0.0
    %953 = vmatpush2.msra.mxu0 0.0
    %954 = vmatprep.subr.mxu0 0.0
    %955 = vmatpush2.msra.mxu0 0.0
    %956 = vmatprep.subr.mxu0 0.0
    %957 = vmatpush2.msra.mxu0 0.0
    %958 = vmatprep.mubr.f32.mxu0 0.0
    %959 = vmatmul.mubr.f32.gmra.mxu0 %v828
    %v960 = vpop.f32.mrf.mxu0
    %v961 = vadd.f32 0.0, %v960
    %v962 = vpop.f32.mrf.mxu0
    %963 = vmatprep.mubr.f32.mxu0 0.0
    %964 = vmatmul.mubr.f32.gmra.mxu0 %v829
    %v965 = vpop.f32.mrf.mxu0
    %v966 = vadd.f32 0.0, %v965
    %v967 = vpop.f32.mrf.mxu0
    %968 = vmatprep.mubr.f32.mxu0 0.0
    %969 = vmatmul.mubr.f32.gmra.mxu0 %v830
    %v970 = vpop.f32.mrf.mxu0
    %v971 = vadd.f32 0.0, %v970
    %v972 = vpop.f32.mrf.mxu0
    %973 = vmatprep.mubr.f32.mxu0 0.0
    %974 = vmatmul.mubr.f32.gmra.mxu0 %v831
    %v975 = vpop.f32.mrf.mxu0
    %v976 = vadd.f32 0.0, %v975
    %v977 = vpop.f32.mrf.mxu0
    %978 = vmatprep.mubr.f32.mxu0 0.0
    %979 = vmatmul.mubr.f32.gmra.mxu0 %v832
    %v980 = vpop.f32.mrf.mxu0
    %v981 = vadd.f32 0.0, %v980
    %v982 = vpop.f32.mrf.mxu0
    %983 = vmatprep.mubr.f32.mxu0 0.0
    %984 = vmatmul.mubr.f32.gmra.mxu0 %v833
    %v985 = vpop.f32.mrf.mxu0
    %v986 = vadd.f32 0.0, %v985
    %v987 = vpop.f32.mrf.mxu0
    %988 = vmatprep.mubr.f32.mxu0 0.0
    %989 = vmatmul.mubr.f32.gmra.mxu0 %v834
    %v990 = vpop.f32.mrf.mxu0
    %v991 = vadd.f32 0.0, %v990
    %v992 = vpop.f32.mrf.mxu0
    %993 = vmatprep.mubr.f32.mxu0 0.0
    %994 = vmatmul.mubr.f32.gmra.mxu0 %v835
    %v995 = vpop.f32.mrf.mxu0
    %v996 = vadd.f32 0.0, %v995
    %v997 = vpop.f32.mrf.mxu0
    %998 = vdwg.mxu0
    %999 = vmatprep.subr.mxu0 0.0
    %1000 = vmatpush1.msra.mxu0 %v876
    %1001 = vmatprep.subr.mxu0 0.0
    %1002 = vmatpush1.msra.mxu0 %v875
    %1003 = vmatprep.subr.mxu0 0.0
    %1004 = vmatpush1.msra.mxu0 %v874
    %1005 = vmatprep.subr.mxu0 0.0
    %1006 = vmatpush1.msra.mxu0 %v873
    %1007 = vmatprep.subr.mxu0 0.0
    %1008 = vmatpush1.msra.mxu0 %v872
    %1009 = vmatprep.subr.mxu0 0.0
    %1010 = vmatpush1.msra.mxu0 %v871
    %1011 = vmatprep.subr.mxu0 0.0
    %1012 = vmatpush1.msra.mxu0 %v870
    %1013 = vmatprep.subr.mxu0 0.0
    %1014 = vmatpush1.msra.mxu0 %v869
    %1015 = vmatprep.subr.mxu0 0.0
    %1016 = vmatpush1.msra.mxu0 %v868
    %1017 = vmatprep.subr.mxu0 0.0
    %1018 = vmatpush1.msra.mxu0 %v867
    %1019 = vmatprep.subr.mxu0 0.0
    %1020 = vmatpush1.msra.mxu0 %v866
    %1021 = vmatprep.subr.mxu0 0.0
    %1022 = vmatpush1.msra.mxu0 %v865
    %1023 = vmatprep.subr.mxu0 0.0
    %1024 = vmatpush1.msra.mxu0 %v864
    %1025 = vmatprep.subr.mxu0 0.0
    %1026 = vmatpush1.msra.mxu0 %v863
    %1027 = vmatprep.subr.mxu0 0.0
    %1028 = vmatpush1.msra.mxu0 %v862
    %1029 = vmatprep.subr.mxu0 0.0
    %1030 = vmatpush1.msra.mxu0 %v861
    %1031 = vmatprep.subr.mxu0 0.0
    %1032 = vmatpush2.msra.mxu0 0.0
    %1033 = vmatprep.subr.mxu0 0.0
    %1034 = vmatpush2.msra.mxu0 0.0
    %1035 = vmatprep.subr.mxu0 0.0
    %1036 = vmatpush2.msra.mxu0 0.0
    %1037 = vmatprep.subr.mxu0 0.0
    %1038 = vmatpush2.msra.mxu0 0.0
    %1039 = vmatprep.subr.mxu0 0.0
    %1040 = vmatpush2.msra.mxu0 0.0
    %1041 = vmatprep.subr.mxu0 0.0
    %1042 = vmatpush2.msra.mxu0 0.0
    %1043 = vmatprep.subr.mxu0 0.0
    %1044 = vmatpush2.msra.mxu0 0.0
    %1045 = vmatprep.subr.mxu0 0.0
    %1046 = vmatpush2.msra.mxu0 0.0
    %1047 = vmatprep.subr.mxu0 0.0
    %1048 = vmatpush2.msra.mxu0 0.0
    %1049 = vmatprep.subr.mxu0 0.0
    %1050 = vmatpush2.msra.mxu0 0.0
    %1051 = vmatprep.subr.mxu0 0.0
    %1052 = vmatpush2.msra.mxu0 0.0
    %1053 = vmatprep.subr.mxu0 0.0
    %1054 = vmatpush2.msra.mxu0 0.0
    %1055 = vmatprep.subr.mxu0 0.0
    %1056 = vmatpush2.msra.mxu0 0.0
    %1057 = vmatprep.subr.mxu0 0.0
    %1058 = vmatpush2.msra.mxu0 0.0
    %1059 = vmatprep.subr.mxu0 0.0
    %1060 = vmatpush2.msra.mxu0 0.0
    %1061 = vmatprep.subr.mxu0 0.0
    %1062 = vmatpush2.msra.mxu0 0.0
    %1063 = vmatprep.mubr.f32.mxu0 0.0
    %1064 = vmatmul.mubr.f32.gmra.mxu0 %v804
    %v1065 = vpop.f32.mrf.mxu0
    %v1066 = vadd.f32 %v961, %v1065
    %v1067 = vpop.f32.mrf.mxu0
    %1068 = vmatprep.mubr.f32.mxu0 0.0
    %1069 = vmatmul.mubr.f32.gmra.mxu0 %v805
    %v1070 = vpop.f32.mrf.mxu0
    %v1071 = vadd.f32 %v966, %v1070
    %v1072 = vpop.f32.mrf.mxu0
    %1073 = vmatprep.mubr.f32.mxu0 0.0
    %1074 = vmatmul.mubr.f32.gmra.mxu0 %v806
    %v1075 = vpop.f32.mrf.mxu0
    %v1076 = vadd.f32 %v971, %v1075
    %v1077 = vpop.f32.mrf.mxu0
    %1078 = vmatprep.mubr.f32.mxu0 0.0
    %1079 = vmatmul.mubr.f32.gmra.mxu0 %v807
    %v1080 = vpop.f32.mrf.mxu0
    %v1081 = vadd.f32 %v976, %v1080
    %v1082 = vpop.f32.mrf.mxu0
    %1083 = vmatprep.mubr.f32.mxu0 0.0
    %1084 = vmatmul.mubr.f32.gmra.mxu0 %v808
    %v1085 = vpop.f32.mrf.mxu0
    %v1086 = vadd.f32 %v981, %v1085
    %v1087 = vpop.f32.mrf.mxu0
    %1088 = vmatprep.mubr.f32.mxu0 0.0
    %1089 = vmatmul.mubr.f32.gmra.mxu0 %v809
    %v1090 = vpop.f32.mrf.mxu0
    %v1091 = vadd.f32 %v986, %v1090
    %v1092 = vpop.f32.mrf.mxu0
    %1093 = vmatprep.mubr.f32.mxu0 0.0
    %1094 = vmatmul.mubr.f32.gmra.mxu0 %v810
    %v1095 = vpop.f32.mrf.mxu0
    %v1096 = vadd.f32 %v991, %v1095
    %v1097 = vpop.f32.mrf.mxu0
    %1098 = vmatprep.mubr.f32.mxu0 0.0
    %1099 = vmatmul.mubr.f32.gmra.mxu0 %v811
    %v1100 = vpop.f32.mrf.mxu0
    %v1101 = vadd.f32 %v996, %v1100
    %v1102 = vpop.f32.mrf.mxu0
    %1103 = vdwg.mxu0
    %s1104 = scalar_lea.vmem [#allocation10], 640
    %v1105 = vld [vmem:[%s1104] sm:$0xff]
    %v1106 = vld [vmem:[%s1104 + $0x8] sm:$0xff]
    %v1107 = vld [vmem:[%s1104 + $0x10] sm:$0xff]
    %v1108 = vld [vmem:[%s1104 + $0x18] sm:$0xff]
    %v1109 = vld [vmem:[%s1104 + $0x20] sm:$0xff]
    %v1110 = vld [vmem:[%s1104 + $0x28] sm:$0xff]
    %v1111 = vld [vmem:[%s1104 + $0x30] sm:$0xff]
    %v1112 = vld [vmem:[%s1104 + $0x38] sm:$0xff]
    %v1113 = vld [vmem:[%s1104 + $0x40] sm:$0xff]
    %v1114 = vld [vmem:[%s1104 + $0x48] sm:$0xff]
    %v1115 = vld [vmem:[%s1104 + $0x50] sm:$0xff]
    %v1116 = vld [vmem:[%s1104 + $0x58] sm:$0xff]
    %v1117 = vld [vmem:[%s1104 + $0x60] sm:$0xff]
    %v1118 = vld [vmem:[%s1104 + $0x68] sm:$0xff]
    %v1119 = vld [vmem:[%s1104 + $0x70] sm:$0xff]
    %v1120 = vld [vmem:[%s1104 + $0x78] sm:$0xff]
    %1121 = vmatprep.subr.mxu0 0.0
    %1122 = vmatpush1.msra.mxu0 %v1120
    %1123 = vmatprep.subr.mxu0 0.0
    %1124 = vmatpush1.msra.mxu0 %v1119
    %1125 = vmatprep.subr.mxu0 0.0
    %1126 = vmatpush1.msra.mxu0 %v1118
    %1127 = vmatprep.subr.mxu0 0.0
    %1128 = vmatpush1.msra.mxu0 %v1117
    %1129 = vmatprep.subr.mxu0 0.0
    %1130 = vmatpush1.msra.mxu0 %v1116
    %1131 = vmatprep.subr.mxu0 0.0
    %1132 = vmatpush1.msra.mxu0 %v1115
    %1133 = vmatprep.subr.mxu0 0.0
    %1134 = vmatpush1.msra.mxu0 %v1114
    %1135 = vmatprep.subr.mxu0 0.0
    %1136 = vmatpush1.msra.mxu0 %v1113
    %1137 = vmatprep.subr.mxu0 0.0
    %1138 = vmatpush1.msra.mxu0 %v1112
    %1139 = vmatprep.subr.mxu0 0.0
    %1140 = vmatpush1.msra.mxu0 %v1111
    %1141 = vmatprep.subr.mxu0 0.0
    %1142 = vmatpush1.msra.mxu0 %v1110
    %1143 = vmatprep.subr.mxu0 0.0
    %1144 = vmatpush1.msra.mxu0 %v1109
    %1145 = vmatprep.subr.mxu0 0.0
    %1146 = vmatpush1.msra.mxu0 %v1108
    %1147 = vmatprep.subr.mxu0 0.0
    %1148 = vmatpush1.msra.mxu0 %v1107
    %1149 = vmatprep.subr.mxu0 0.0
    %1150 = vmatpush1.msra.mxu0 %v1106
    %1151 = vmatprep.subr.mxu0 0.0
    %1152 = vmatpush1.msra.mxu0 %v1105
    %1153 = vmatprep.subr.mxu0 0.0
    %1154 = vmatpush2.msra.mxu0 0.0
    %1155 = vmatprep.subr.mxu0 0.0
    %1156 = vmatpush2.msra.mxu0 0.0
    %1157 = vmatprep.subr.mxu0 0.0
    %1158 = vmatpush2.msra.mxu0 0.0
    %1159 = vmatprep.subr.mxu0 0.0
    %1160 = vmatpush2.msra.mxu0 0.0
    %1161 = vmatprep.subr.mxu0 0.0
    %1162 = vmatpush2.msra.mxu0 0.0
    %1163 = vmatprep.subr.mxu0 0.0
    %1164 = vmatpush2.msra.mxu0 0.0
    %1165 = vmatprep.subr.mxu0 0.0
    %1166 = vmatpush2.msra.mxu0 0.0
    %1167 = vmatprep.subr.mxu0 0.0
    %1168 = vmatpush2.msra.mxu0 0.0
    %1169 = vmatprep.subr.mxu0 0.0
    %1170 = vmatpush2.msra.mxu0 0.0
    %1171 = vmatprep.subr.mxu0 0.0
    %1172 = vmatpush2.msra.mxu0 0.0
    %1173 = vmatprep.subr.mxu0 0.0
    %1174 = vmatpush2.msra.mxu0 0.0
    %1175 = vmatprep.subr.mxu0 0.0
    %1176 = vmatpush2.msra.mxu0 0.0
    %1177 = vmatprep.subr.mxu0 0.0
    %1178 = vmatpush2.msra.mxu0 0.0
    %1179 = vmatprep.subr.mxu0 0.0
    %1180 = vmatpush2.msra.mxu0 0.0
    %1181 = vmatprep.subr.mxu0 0.0
    %1182 = vmatpush2.msra.mxu0 0.0
    %1183 = vmatprep.subr.mxu0 0.0
    %1184 = vmatpush2.msra.mxu0 0.0
    %1185 = vmatprep.mubr.f32.mxu0 0.0
    %1186 = vmatmul.mubr.f32.gmra.mxu0 %v852
    %v1187 = vpop.f32.mrf.mxu0
    %v1188 = vadd.f32 0.0, %v1187
    %v1189 = vpop.f32.mrf.mxu0
    %1190 = vmatprep.mubr.f32.mxu0 0.0
    %1191 = vmatmul.mubr.f32.gmra.mxu0 %v853
    %v1192 = vpop.f32.mrf.mxu0
    %v1193 = vadd.f32 0.0, %v1192
    %v1194 = vpop.f32.mrf.mxu0
    %1195 = vmatprep.mubr.f32.mxu0 0.0
    %1196 = vmatmul.mubr.f32.gmra.mxu0 %v854
    %v1197 = vpop.f32.mrf.mxu0
    %v1198 = vadd.f32 0.0, %v1197
    %v1199 = vpop.f32.mrf.mxu0
    %1200 = vmatprep.mubr.f32.mxu0 0.0
    %1201 = vmatmul.mubr.f32.gmra.mxu0 %v855
    %v1202 = vpop.f32.mrf.mxu0
    %v1203 = vadd.f32 0.0, %v1202
    %v1204 = vpop.f32.mrf.mxu0
    %1205 = vmatprep.mubr.f32.mxu0 0.0
    %1206 = vmatmul.mubr.f32.gmra.mxu0 %v856
    %v1207 = vpop.f32.mrf.mxu0
    %v1208 = vadd.f32 0.0, %v1207
    %v1209 = vpop.f32.mrf.mxu0
    %1210 = vmatprep.mubr.f32.mxu0 0.0
    %1211 = vmatmul.mubr.f32.gmra.mxu0 %v857
    %v1212 = vpop.f32.mrf.mxu0
    %v1213 = vadd.f32 0.0, %v1212
    %v1214 = vpop.f32.mrf.mxu0
    %1215 = vmatprep.mubr.f32.mxu0 0.0
    %1216 = vmatmul.mubr.f32.gmra.mxu0 %v858
    %v1217 = vpop.f32.mrf.mxu0
    %v1218 = vadd.f32 0.0, %v1217
    %v1219 = vpop.f32.mrf.mxu0
    %1220 = vmatprep.mubr.f32.mxu0 0.0
    %1221 = vmatmul.mubr.f32.gmra.mxu0 %v859
    %v1222 = vpop.f32.mrf.mxu0
    %v1223 = vadd.f32 0.0, %v1222
    %v1224 = vpop.f32.mrf.mxu0
    %1225 = vdwg.mxu0
    %v1226 = vadd.f32 %v1066, %v1188
    %v1227 = vadd.f32 %v1071, %v1193
    %v1228 = vadd.f32 %v1076, %v1198
    %v1229 = vadd.f32 %v1081, %v1203
    %v1230 = vadd.f32 %v1086, %v1208
    %v1231 = vadd.f32 %v1091, %v1213
    %v1232 = vadd.f32 %v1096, %v1218
    %v1233 = vadd.f32 %v1101, %v1223
    %s1234 = scalar_lea.vmem [#allocation11], 1
    %v1235 = vld [vmem:[%s1234] sm:$0x1]
    %v1237 = vlaneseq
    %v1238 = vshrl.u32 %v1237, 7
    %v1239 = vsub.s32 0, %v1238
    %v1240 = vrot.slane %v1235, %v1239
    %v1242 = vadd.f32 %v1226, %v1240
    %v1243 = vadd.f32 %v1227, %v1240
    %v1244 = vadd.f32 %v1228, %v1240
    %v1245 = vadd.f32 %v1229, %v1240
    %v1246 = vadd.f32 %v1230, %v1240
    %v1247 = vadd.f32 %v1231, %v1240
    %v1248 = vadd.f32 %v1232, %v1240
    %v1249 = vadd.f32 %v1233, %v1240
    %vm1250 = vcmp.gt.f32.partialorder %v1242, 0.0
    %vm1251 = vcmp.gt.f32.partialorder %v1243, 0.0
    %vm1252 = vcmp.gt.f32.partialorder %v1244, 0.0
    %vm1253 = vcmp.gt.f32.partialorder %v1245, 0.0
    %vm1254 = vcmp.gt.f32.partialorder %v1246, 0.0
    %vm1255 = vcmp.gt.f32.partialorder %v1247, 0.0
    %vm1256 = vcmp.gt.f32.partialorder %v1248, 0.0
    %vm1257 = vcmp.gt.f32.partialorder %v1249, 0.0
    %v1258 = vmul.f32 %v1242, 0.01
    %v1259 = vmul.f32 %v1243, 0.01
    %v1260 = vmul.f32 %v1244, 0.01
    %v1261 = vmul.f32 %v1245, 0.01
    %v1262 = vmul.f32 %v1246, 0.01
    %v1263 = vmul.f32 %v1247, 0.01
    %v1264 = vmul.f32 %v1248, 0.01
    %v1265 = vmul.f32 %v1249, 0.01
    %v1266 = vsel %vm1250, %v1242, %v1258
    %v1267 = vsel %vm1251, %v1243, %v1259
    %v1268 = vsel %vm1252, %v1244, %v1260
    %v1269 = vsel %vm1253, %v1245, %v1261
    %v1270 = vsel %vm1254, %v1246, %v1262
    %v1271 = vsel %vm1255, %v1247, %v1263
    %v1272 = vsel %vm1256, %v1248, %v1264
    %v1273 = vsel %vm1257, %v1249, %v1265
    %v1274 = vrot.slane %v1266, 7
    %v1275 = vrot.slane %v1267, 7
    %v1276 = vrot.slane %v1268, 7
    %v1277 = vrot.slane %v1269, 7
    %v1278 = vrot.slane %v1270, 7
    %v1279 = vrot.slane %v1271, 7
    %v1280 = vrot.slane %v1272, 7
    %v1281 = vrot.slane %v1273, 7
    %v1282 = vsel %vm270, %v1280, %v1281
    %v1283 = vsel %vm270, %v1279, %v1280
    %v1284 = vsel %vm270, %v1278, %v1279
    %v1285 = vsel %vm270, %v1277, %v1278
    %v1286 = vsel %vm270, %v1276, %v1277
    %v1287 = vsel %vm270, %v1275, %v1276
    %v1288 = vsel %vm270, %v1274, %v1275
    %v1289 = vsel %vm270, %v1281, %v1274
    %v1290 = vsel %vm146, %v1289, 0.0
    %v1291 = vsel %vm147, %v1288, 0.0
    %v1292 = vsel %vm148, %v1287, 0.0
    %v1293 = vsel %vm149, %v1286, 0.0
    %v1294 = vsel %vm150, %v1285, 0.0
    %v1295 = vsel %vm151, %v1284, 0.0
    %v1296 = vsel %vm152, %v1283, 0.0
    %v1297 = vsel %vm153, %v1282, 0.0
    %v1298 = vrot.slane %v1266, 1
    %v1299 = vrot.slane %v1267, 1
    %v1300 = vrot.slane %v1268, 1
    %v1301 = vrot.slane %v1269, 1
    %v1302 = vrot.slane %v1270, 1
    %v1303 = vrot.slane %v1271, 1
    %v1304 = vrot.slane %v1272, 1
    %v1305 = vrot.slane %v1273, 1
    %v1306 = vsel %vm303, %v1304, %v1305
    %v1307 = vsel %vm303, %v1303, %v1304
    %v1308 = vsel %vm303, %v1302, %v1303
    %v1309 = vsel %vm303, %v1301, %v1302
    %v1310 = vsel %vm303, %v1300, %v1301
    %v1311 = vsel %vm303, %v1299, %v1300
    %v1312 = vsel %vm303, %v1298, %v1299
    %v1313 = vsel %vm303, %v1305, %v1298
    %v1314 = vsel %vm154, %v1312, 0.0
    %v1315 = vsel %vm155, %v1311, 0.0
    %v1316 = vsel %vm156, %v1310, 0.0
    %v1317 = vsel %vm157, %v1309, 0.0
    %v1318 = vsel %vm158, %v1308, 0.0
    %v1319 = vsel %vm159, %v1307, 0.0
    %v1320 = vsel %vm160, %v1306, 0.0
    %v1321 = vsel %vm161, %v1313, 0.0
    %s1322 = scalar_lea.vmem [#allocation10], 896
    %v1323 = vld [vmem:[%s1322] sm:$0xff]
    %v1324 = vld [vmem:[%s1322 + $0x8] sm:$0xff]
    %v1325 = vld [vmem:[%s1322 + $0x10] sm:$0xff]
    %v1326 = vld [vmem:[%s1322 + $0x18] sm:$0xff]
    %v1327 = vld [vmem:[%s1322 + $0x20] sm:$0xff]
    %v1328 = vld [vmem:[%s1322 + $0x28] sm:$0xff]
    %v1329 = vld [vmem:[%s1322 + $0x30] sm:$0xff]
    %v1330 = vld [vmem:[%s1322 + $0x38] sm:$0xff]
    %v1331 = vld [vmem:[%s1322 + $0x40] sm:$0xff]
    %v1332 = vld [vmem:[%s1322 + $0x48] sm:$0xff]
    %v1333 = vld [vmem:[%s1322 + $0x50] sm:$0xff]
    %v1334 = vld [vmem:[%s1322 + $0x58] sm:$0xff]
    %v1335 = vld [vmem:[%s1322 + $0x60] sm:$0xff]
    %v1336 = vld [vmem:[%s1322 + $0x68] sm:$0xff]
    %v1337 = vld [vmem:[%s1322 + $0x70] sm:$0xff]
    %v1338 = vld [vmem:[%s1322 + $0x78] sm:$0xff]
    %s1339 = scalar_lea.vmem [#allocation10], 768
    %v1340 = vld [vmem:[%s1339] sm:$0xff]
    %v1341 = vld [vmem:[%s1339 + $0x8] sm:$0xff]
    %v1342 = vld [vmem:[%s1339 + $0x10] sm:$0xff]
    %v1343 = vld [vmem:[%s1339 + $0x18] sm:$0xff]
    %v1344 = vld [vmem:[%s1339 + $0x20] sm:$0xff]
    %v1345 = vld [vmem:[%s1339 + $0x28] sm:$0xff]
    %v1346 = vld [vmem:[%s1339 + $0x30] sm:$0xff]
    %v1347 = vld [vmem:[%s1339 + $0x38] sm:$0xff]
    %v1348 = vld [vmem:[%s1339 + $0x40] sm:$0xff]
    %v1349 = vld [vmem:[%s1339 + $0x48] sm:$0xff]
    %v1350 = vld [vmem:[%s1339 + $0x50] sm:$0xff]
    %v1351 = vld [vmem:[%s1339 + $0x58] sm:$0xff]
    %v1352 = vld [vmem:[%s1339 + $0x60] sm:$0xff]
    %v1353 = vld [vmem:[%s1339 + $0x68] sm:$0xff]
    %v1354 = vld [vmem:[%s1339 + $0x70] sm:$0xff]
    %v1355 = vld [vmem:[%s1339 + $0x78] sm:$0xff]
    %1356 = vmatprep.subr.mxu0 0.0
    %1357 = vmatpush1.msra.mxu0 %v1355
    %1358 = vmatprep.subr.mxu0 0.0
    %1359 = vmatpush1.msra.mxu0 %v1354
    %1360 = vmatprep.subr.mxu0 0.0
    %1361 = vmatpush1.msra.mxu0 %v1353
    %1362 = vmatprep.subr.mxu0 0.0
    %1363 = vmatpush1.msra.mxu0 %v1352
    %1364 = vmatprep.subr.mxu0 0.0
    %1365 = vmatpush1.msra.mxu0 %v1351
    %1366 = vmatprep.subr.mxu0 0.0
    %1367 = vmatpush1.msra.mxu0 %v1350
    %1368 = vmatprep.subr.mxu0 0.0
    %1369 = vmatpush1.msra.mxu0 %v1349
    %1370 = vmatprep.subr.mxu0 0.0
    %1371 = vmatpush1.msra.mxu0 %v1348
    %1372 = vmatprep.subr.mxu0 0.0
    %1373 = vmatpush1.msra.mxu0 %v1347
    %1374 = vmatprep.subr.mxu0 0.0
    %1375 = vmatpush1.msra.mxu0 %v1346
    %1376 = vmatprep.subr.mxu0 0.0
    %1377 = vmatpush1.msra.mxu0 %v1345
    %1378 = vmatprep.subr.mxu0 0.0
    %1379 = vmatpush1.msra.mxu0 %v1344
    %1380 = vmatprep.subr.mxu0 0.0
    %1381 = vmatpush1.msra.mxu0 %v1343
    %1382 = vmatprep.subr.mxu0 0.0
    %1383 = vmatpush1.msra.mxu0 %v1342
    %1384 = vmatprep.subr.mxu0 0.0
    %1385 = vmatpush1.msra.mxu0 %v1341
    %1386 = vmatprep.subr.mxu0 0.0
    %1387 = vmatpush1.msra.mxu0 %v1340
    %1388 = vmatprep.subr.mxu0 0.0
    %1389 = vmatpush2.msra.mxu0 0.0
    %1390 = vmatprep.subr.mxu0 0.0
    %1391 = vmatpush2.msra.mxu0 0.0
    %1392 = vmatprep.subr.mxu0 0.0
    %1393 = vmatpush2.msra.mxu0 0.0
    %1394 = vmatprep.subr.mxu0 0.0
    %1395 = vmatpush2.msra.mxu0 0.0
    %1396 = vmatprep.subr.mxu0 0.0
    %1397 = vmatpush2.msra.mxu0 0.0
    %1398 = vmatprep.subr.mxu0 0.0
    %1399 = vmatpush2.msra.mxu0 0.0
    %1400 = vmatprep.subr.mxu0 0.0
    %1401 = vmatpush2.msra.mxu0 0.0
    %1402 = vmatprep.subr.mxu0 0.0
    %1403 = vmatpush2.msra.mxu0 0.0
    %1404 = vmatprep.subr.mxu0 0.0
    %1405 = vmatpush2.msra.mxu0 0.0
    %1406 = vmatprep.subr.mxu0 0.0
    %1407 = vmatpush2.msra.mxu0 0.0
    %1408 = vmatprep.subr.mxu0 0.0
    %1409 = vmatpush2.msra.mxu0 0.0
    %1410 = vmatprep.subr.mxu0 0.0
    %1411 = vmatpush2.msra.mxu0 0.0
    %1412 = vmatprep.subr.mxu0 0.0
    %1413 = vmatpush2.msra.mxu0 0.0
    %1414 = vmatprep.subr.mxu0 0.0
    %1415 = vmatpush2.msra.mxu0 0.0
    %1416 = vmatprep.subr.mxu0 0.0
    %1417 = vmatpush2.msra.mxu0 0.0
    %1418 = vmatprep.subr.mxu0 0.0
    %1419 = vmatpush2.msra.mxu0 0.0
    %1420 = vmatprep.mubr.f32.mxu0 0.0
    %1421 = vmatmul.mubr.f32.gmra.mxu0 %v1290
    %v1422 = vpop.f32.mrf.mxu0
    %v1423 = vadd.f32 0.0, %v1422
    %v1424 = vpop.f32.mrf.mxu0
    %1425 = vmatprep.mubr.f32.mxu0 0.0
    %1426 = vmatmul.mubr.f32.gmra.mxu0 %v1291
    %v1427 = vpop.f32.mrf.mxu0
    %v1428 = vadd.f32 0.0, %v1427
    %v1429 = vpop.f32.mrf.mxu0
    %1430 = vmatprep.mubr.f32.mxu0 0.0
    %1431 = vmatmul.mubr.f32.gmra.mxu0 %v1292
    %v1432 = vpop.f32.mrf.mxu0
    %v1433 = vadd.f32 0.0, %v1432
    %v1434 = vpop.f32.mrf.mxu0
    %1435 = vmatprep.mubr.f32.mxu0 0.0
    %1436 = vmatmul.mubr.f32.gmra.mxu0 %v1293
    %v1437 = vpop.f32.mrf.mxu0
    %v1438 = vadd.f32 0.0, %v1437
    %v1439 = vpop.f32.mrf.mxu0
    %1440 = vmatprep.mubr.f32.mxu0 0.0
    %1441 = vmatmul.mubr.f32.gmra.mxu0 %v1294
    %v1442 = vpop.f32.mrf.mxu0
    %v1443 = vadd.f32 0.0, %v1442
    %v1444 = vpop.f32.mrf.mxu0
    %1445 = vmatprep.mubr.f32.mxu0 0.0
    %1446 = vmatmul.mubr.f32.gmra.mxu0 %v1295
    %v1447 = vpop.f32.mrf.mxu0
    %v1448 = vadd.f32 0.0, %v1447
    %v1449 = vpop.f32.mrf.mxu0
    %1450 = vmatprep.mubr.f32.mxu0 0.0
    %1451 = vmatmul.mubr.f32.gmra.mxu0 %v1296
    %v1452 = vpop.f32.mrf.mxu0
    %v1453 = vadd.f32 0.0, %v1452
    %v1454 = vpop.f32.mrf.mxu0
    %1455 = vmatprep.mubr.f32.mxu0 0.0
    %1456 = vmatmul.mubr.f32.gmra.mxu0 %v1297
    %v1457 = vpop.f32.mrf.mxu0
    %v1458 = vadd.f32 0.0, %v1457
    %v1459 = vpop.f32.mrf.mxu0
    %1460 = vdwg.mxu0
    %1461 = vmatprep.subr.mxu0 0.0
    %1462 = vmatpush1.msra.mxu0 %v1338
    %1463 = vmatprep.subr.mxu0 0.0
    %1464 = vmatpush1.msra.mxu0 %v1337
    %1465 = vmatprep.subr.mxu0 0.0
    %1466 = vmatpush1.msra.mxu0 %v1336
    %1467 = vmatprep.subr.mxu0 0.0
    %1468 = vmatpush1.msra.mxu0 %v1335
    %1469 = vmatprep.subr.mxu0 0.0
    %1470 = vmatpush1.msra.mxu0 %v1334
    %1471 = vmatprep.subr.mxu0 0.0
    %1472 = vmatpush1.msra.mxu0 %v1333
    %1473 = vmatprep.subr.mxu0 0.0
    %1474 = vmatpush1.msra.mxu0 %v1332
    %1475 = vmatprep.subr.mxu0 0.0
    %1476 = vmatpush1.msra.mxu0 %v1331
    %1477 = vmatprep.subr.mxu0 0.0
    %1478 = vmatpush1.msra.mxu0 %v1330
    %1479 = vmatprep.subr.mxu0 0.0
    %1480 = vmatpush1.msra.mxu0 %v1329
    %1481 = vmatprep.subr.mxu0 0.0
    %1482 = vmatpush1.msra.mxu0 %v1328
    %1483 = vmatprep.subr.mxu0 0.0
    %1484 = vmatpush1.msra.mxu0 %v1327
    %1485 = vmatprep.subr.mxu0 0.0
    %1486 = vmatpush1.msra.mxu0 %v1326
    %1487 = vmatprep.subr.mxu0 0.0
    %1488 = vmatpush1.msra.mxu0 %v1325
    %1489 = vmatprep.subr.mxu0 0.0
    %1490 = vmatpush1.msra.mxu0 %v1324
    %1491 = vmatprep.subr.mxu0 0.0
    %1492 = vmatpush1.msra.mxu0 %v1323
    %1493 = vmatprep.subr.mxu0 0.0
    %1494 = vmatpush2.msra.mxu0 0.0
    %1495 = vmatprep.subr.mxu0 0.0
    %1496 = vmatpush2.msra.mxu0 0.0
    %1497 = vmatprep.subr.mxu0 0.0
    %1498 = vmatpush2.msra.mxu0 0.0
    %1499 = vmatprep.subr.mxu0 0.0
    %1500 = vmatpush2.msra.mxu0 0.0
    %1501 = vmatprep.subr.mxu0 0.0
    %1502 = vmatpush2.msra.mxu0 0.0
    %1503 = vmatprep.subr.mxu0 0.0
    %1504 = vmatpush2.msra.mxu0 0.0
    %1505 = vmatprep.subr.mxu0 0.0
    %1506 = vmatpush2.msra.mxu0 0.0
    %1507 = vmatprep.subr.mxu0 0.0
    %1508 = vmatpush2.msra.mxu0 0.0
    %1509 = vmatprep.subr.mxu0 0.0
    %1510 = vmatpush2.msra.mxu0 0.0
    %1511 = vmatprep.subr.mxu0 0.0
    %1512 = vmatpush2.msra.mxu0 0.0
    %1513 = vmatprep.subr.mxu0 0.0
    %1514 = vmatpush2.msra.mxu0 0.0
    %1515 = vmatprep.subr.mxu0 0.0
    %1516 = vmatpush2.msra.mxu0 0.0
    %1517 = vmatprep.subr.mxu0 0.0
    %1518 = vmatpush2.msra.mxu0 0.0
    %1519 = vmatprep.subr.mxu0 0.0
    %1520 = vmatpush2.msra.mxu0 0.0
    %1521 = vmatprep.subr.mxu0 0.0
    %1522 = vmatpush2.msra.mxu0 0.0
    %1523 = vmatprep.subr.mxu0 0.0
    %1524 = vmatpush2.msra.mxu0 0.0
    %1525 = vmatprep.mubr.f32.mxu0 0.0
    %1526 = vmatmul.mubr.f32.gmra.mxu0 %v1266
    %v1527 = vpop.f32.mrf.mxu0
    %v1528 = vadd.f32 %v1423, %v1527
    %v1529 = vpop.f32.mrf.mxu0
    %1530 = vmatprep.mubr.f32.mxu0 0.0
    %1531 = vmatmul.mubr.f32.gmra.mxu0 %v1267
    %v1532 = vpop.f32.mrf.mxu0
    %v1533 = vadd.f32 %v1428, %v1532
    %v1534 = vpop.f32.mrf.mxu0
    %1535 = vmatprep.mubr.f32.mxu0 0.0
    %1536 = vmatmul.mubr.f32.gmra.mxu0 %v1268
    %v1537 = vpop.f32.mrf.mxu0
    %v1538 = vadd.f32 %v1433, %v1537
    %v1539 = vpop.f32.mrf.mxu0
    %1540 = vmatprep.mubr.f32.mxu0 0.0
    %1541 = vmatmul.mubr.f32.gmra.mxu0 %v1269
    %v1542 = vpop.f32.mrf.mxu0
    %v1543 = vadd.f32 %v1438, %v1542
    %v1544 = vpop.f32.mrf.mxu0
    %1545 = vmatprep.mubr.f32.mxu0 0.0
    %1546 = vmatmul.mubr.f32.gmra.mxu0 %v1270
    %v1547 = vpop.f32.mrf.mxu0
    %v1548 = vadd.f32 %v1443, %v1547
    %v1549 = vpop.f32.mrf.mxu0
    %1550 = vmatprep.mubr.f32.mxu0 0.0
    %1551 = vmatmul.mubr.f32.gmra.mxu0 %v1271
    %v1552 = vpop.f32.mrf.mxu0
    %v1553 = vadd.f32 %v1448, %v1552
    %v1554 = vpop.f32.mrf.mxu0
    %1555 = vmatprep.mubr.f32.mxu0 0.0
    %1556 = vmatmul.mubr.f32.gmra.mxu0 %v1272
    %v1557 = vpop.f32.mrf.mxu0
    %v1558 = vadd.f32 %v1453, %v1557
    %v1559 = vpop.f32.mrf.mxu0
    %1560 = vmatprep.mubr.f32.mxu0 0.0
    %1561 = vmatmul.mubr.f32.gmra.mxu0 %v1273
    %v1562 = vpop.f32.mrf.mxu0
    %v1563 = vadd.f32 %v1458, %v1562
    %v1564 = vpop.f32.mrf.mxu0
    %1565 = vdwg.mxu0
    %s1566 = scalar_lea.vmem [#allocation10], 1024
    %v1567 = vld [vmem:[%s1566] sm:$0xff]
    %v1568 = vld [vmem:[%s1566 + $0x8] sm:$0xff]
    %v1569 = vld [vmem:[%s1566 + $0x10] sm:$0xff]
    %v1570 = vld [vmem:[%s1566 + $0x18] sm:$0xff]
    %v1571 = vld [vmem:[%s1566 + $0x20] sm:$0xff]
    %v1572 = vld [vmem:[%s1566 + $0x28] sm:$0xff]
    %v1573 = vld [vmem:[%s1566 + $0x30] sm:$0xff]
    %v1574 = vld [vmem:[%s1566 + $0x38] sm:$0xff]
    %v1575 = vld [vmem:[%s1566 + $0x40] sm:$0xff]
    %v1576 = vld [vmem:[%s1566 + $0x48] sm:$0xff]
    %v1577 = vld [vmem:[%s1566 + $0x50] sm:$0xff]
    %v1578 = vld [vmem:[%s1566 + $0x58] sm:$0xff]
    %v1579 = vld [vmem:[%s1566 + $0x60] sm:$0xff]
    %v1580 = vld [vmem:[%s1566 + $0x68] sm:$0xff]
    %v1581 = vld [vmem:[%s1566 + $0x70] sm:$0xff]
    %v1582 = vld [vmem:[%s1566 + $0x78] sm:$0xff]
    %1583 = vmatprep.subr.mxu0 0.0
    %1584 = vmatpush1.msra.mxu0 %v1582
    %1585 = vmatprep.subr.mxu0 0.0
    %1586 = vmatpush1.msra.mxu0 %v1581
    %1587 = vmatprep.subr.mxu0 0.0
    %1588 = vmatpush1.msra.mxu0 %v1580
    %1589 = vmatprep.subr.mxu0 0.0
    %1590 = vmatpush1.msra.mxu0 %v1579
    %1591 = vmatprep.subr.mxu0 0.0
    %1592 = vmatpush1.msra.mxu0 %v1578
    %1593 = vmatprep.subr.mxu0 0.0
    %1594 = vmatpush1.msra.mxu0 %v1577
    %1595 = vmatprep.subr.mxu0 0.0
    %1596 = vmatpush1.msra.mxu0 %v1576
    %1597 = vmatprep.subr.mxu0 0.0
    %1598 = vmatpush1.msra.mxu0 %v1575
    %1599 = vmatprep.subr.mxu0 0.0
    %1600 = vmatpush1.msra.mxu0 %v1574
    %1601 = vmatprep.subr.mxu0 0.0
    %1602 = vmatpush1.msra.mxu0 %v1573
    %1603 = vmatprep.subr.mxu0 0.0
    %1604 = vmatpush1.msra.mxu0 %v1572
    %1605 = vmatprep.subr.mxu0 0.0
    %1606 = vmatpush1.msra.mxu0 %v1571
    %1607 = vmatprep.subr.mxu0 0.0
    %1608 = vmatpush1.msra.mxu0 %v1570
    %1609 = vmatprep.subr.mxu0 0.0
    %1610 = vmatpush1.msra.mxu0 %v1569
    %1611 = vmatprep.subr.mxu0 0.0
    %1612 = vmatpush1.msra.mxu0 %v1568
    %1613 = vmatprep.subr.mxu0 0.0
    %1614 = vmatpush1.msra.mxu0 %v1567
    %1615 = vmatprep.subr.mxu0 0.0
    %1616 = vmatpush2.msra.mxu0 0.0
    %1617 = vmatprep.subr.mxu0 0.0
    %1618 = vmatpush2.msra.mxu0 0.0
    %1619 = vmatprep.subr.mxu0 0.0
    %1620 = vmatpush2.msra.mxu0 0.0
    %1621 = vmatprep.subr.mxu0 0.0
    %1622 = vmatpush2.msra.mxu0 0.0
    %1623 = vmatprep.subr.mxu0 0.0
    %1624 = vmatpush2.msra.mxu0 0.0
    %1625 = vmatprep.subr.mxu0 0.0
    %1626 = vmatpush2.msra.mxu0 0.0
    %1627 = vmatprep.subr.mxu0 0.0
    %1628 = vmatpush2.msra.mxu0 0.0
    %1629 = vmatprep.subr.mxu0 0.0
    %1630 = vmatpush2.msra.mxu0 0.0
    %1631 = vmatprep.subr.mxu0 0.0
    %1632 = vmatpush2.msra.mxu0 0.0
    %1633 = vmatprep.subr.mxu0 0.0
    %1634 = vmatpush2.msra.mxu0 0.0
    %1635 = vmatprep.subr.mxu0 0.0
    %1636 = vmatpush2.msra.mxu0 0.0
    %1637 = vmatprep.subr.mxu0 0.0
    %1638 = vmatpush2.msra.mxu0 0.0
    %1639 = vmatprep.subr.mxu0 0.0
    %1640 = vmatpush2.msra.mxu0 0.0
    %1641 = vmatprep.subr.mxu0 0.0
    %1642 = vmatpush2.msra.mxu0 0.0
    %1643 = vmatprep.subr.mxu0 0.0
    %1644 = vmatpush2.msra.mxu0 0.0
    %1645 = vmatprep.subr.mxu0 0.0
    %1646 = vmatpush2.msra.mxu0 0.0
    %1647 = vmatprep.mubr.f32.mxu0 0.0
    %1648 = vmatmul.mubr.f32.gmra.mxu0 %v1314
    %v1649 = vpop.f32.mrf.mxu0
    %v1650 = vadd.f32 0.0, %v1649
    %v1651 = vpop.f32.mrf.mxu0
    %1652 = vmatprep.mubr.f32.mxu0 0.0
    %1653 = vmatmul.mubr.f32.gmra.mxu0 %v1315
    %v1654 = vpop.f32.mrf.mxu0
    %v1655 = vadd.f32 0.0, %v1654
    %v1656 = vpop.f32.mrf.mxu0
    %1657 = vmatprep.mubr.f32.mxu0 0.0
    %1658 = vmatmul.mubr.f32.gmra.mxu0 %v1316
    %v1659 = vpop.f32.mrf.mxu0
    %v1660 = vadd.f32 0.0, %v1659
    %v1661 = vpop.f32.mrf.mxu0
    %1662 = vmatprep.mubr.f32.mxu0 0.0
    %1663 = vmatmul.mubr.f32.gmra.mxu0 %v1317
    %v1664 = vpop.f32.mrf.mxu0
    %v1665 = vadd.f32 0.0, %v1664
    %v1666 = vpop.f32.mrf.mxu0
    %1667 = vmatprep.mubr.f32.mxu0 0.0
    %1668 = vmatmul.mubr.f32.gmra.mxu0 %v1318
    %v1669 = vpop.f32.mrf.mxu0
    %v1670 = vadd.f32 0.0, %v1669
    %v1671 = vpop.f32.mrf.mxu0
    %1672 = vmatprep.mubr.f32.mxu0 0.0
    %1673 = vmatmul.mubr.f32.gmra.mxu0 %v1319
    %v1674 = vpop.f32.mrf.mxu0
    %v1675 = vadd.f32 0.0, %v1674
    %v1676 = vpop.f32.mrf.mxu0
    %1677 = vmatprep.mubr.f32.mxu0 0.0
    %1678 = vmatmul.mubr.f32.gmra.mxu0 %v1320
    %v1679 = vpop.f32.mrf.mxu0
    %v1680 = vadd.f32 0.0, %v1679
    %v1681 = vpop.f32.mrf.mxu0
    %1682 = vmatprep.mubr.f32.mxu0 0.0
    %1683 = vmatmul.mubr.f32.gmra.mxu0 %v1321
    %v1684 = vpop.f32.mrf.mxu0
    %v1685 = vadd.f32 0.0, %v1684
    %v1686 = vpop.f32.mrf.mxu0
    %1687 = vdwg.mxu0
    %v1688 = vadd.f32 %v1528, %v1650
    %v1689 = vadd.f32 %v1533, %v1655
    %v1690 = vadd.f32 %v1538, %v1660
    %v1691 = vadd.f32 %v1543, %v1665
    %v1692 = vadd.f32 %v1548, %v1670
    %v1693 = vadd.f32 %v1553, %v1675
    %v1694 = vadd.f32 %v1558, %v1680
    %v1695 = vadd.f32 %v1563, %v1685
    %s1696 = scalar_lea.vmem [#allocation11], 2
    %v1697 = vld [vmem:[%s1696] sm:$0x1]
    %v1699 = vlaneseq
    %v1700 = vshrl.u32 %v1699, 7
    %v1701 = vsub.s32 0, %v1700
    %v1702 = vrot.slane %v1697, %v1701
    %v1704 = vadd.f32 %v1688, %v1702
    %v1705 = vadd.f32 %v1689, %v1702
    %v1706 = vadd.f32 %v1690, %v1702
    %v1707 = vadd.f32 %v1691, %v1702
    %v1708 = vadd.f32 %v1692, %v1702
    %v1709 = vadd.f32 %v1693, %v1702
    %v1710 = vadd.f32 %v1694, %v1702
    %v1711 = vadd.f32 %v1695, %v1702
    %vm1712 = vcmp.gt.f32.partialorder %v1704, 0.0
    %vm1713 = vcmp.gt.f32.partialorder %v1705, 0.0
    %vm1714 = vcmp.gt.f32.partialorder %v1706, 0.0
    %vm1715 = vcmp.gt.f32.partialorder %v1707, 0.0
    %vm1716 = vcmp.gt.f32.partialorder %v1708, 0.0
    %vm1717 = vcmp.gt.f32.partialorder %v1709, 0.0
    %vm1718 = vcmp.gt.f32.partialorder %v1710, 0.0
    %vm1719 = vcmp.gt.f32.partialorder %v1711, 0.0
    %v1720 = vmul.f32 %v1704, 0.01
    %v1721 = vmul.f32 %v1705, 0.01
    %v1722 = vmul.f32 %v1706, 0.01
    %v1723 = vmul.f32 %v1707, 0.01
    %v1724 = vmul.f32 %v1708, 0.01
    %v1725 = vmul.f32 %v1709, 0.01
    %v1726 = vmul.f32 %v1710, 0.01
    %v1727 = vmul.f32 %v1711, 0.01
    %v1728 = vsel %vm1712, %v1704, %v1720
    %v1729 = vsel %vm1713, %v1705, %v1721
    %v1730 = vsel %vm1714, %v1706, %v1722
    %v1731 = vsel %vm1715, %v1707, %v1723
    %v1732 = vsel %vm1716, %v1708, %v1724
    %v1733 = vsel %vm1717, %v1709, %v1725
    %v1734 = vsel %vm1718, %v1710, %v1726
    %v1735 = vsel %vm1719, %v1711, %v1727
    %1736 = vst [vmem:[#allocation3] sm:$0xff] %v1728
    %1737 = vst [vmem:[#allocation3 + $0x8] sm:$0xff] %v1729
    %1738 = vst [vmem:[#allocation3 + $0x10] sm:$0xff] %v1730
    %1739 = vst [vmem:[#allocation3 + $0x18] sm:$0xff] %v1731
    %s1740 = scalar_lea.vmem [#allocation3], 32
    %1741 = vst [vmem:[%s1740] sm:$0xff] %v1732
    %1742 = vst [vmem:[%s1740 + $0x8] sm:$0xff] %v1733
    %1743 = vst [vmem:[%s1740 + $0x10] sm:$0xff] %v1734
    %1744 = vst [vmem:[%s1740 + $0x18] sm:$0xff] %v1735
    %s1745 = smul.u32 32, 128
    %s1746 = smul.u32 %s1745, 1
    %s1747 = sshll.u32 %s1746, 4
    %1748 = dma.done [#allocation4], %s1747
    %v1749 = vld [vmem:[#allocation3] sm:$0x1]
    %v1750 = vld [vmem:[#allocation3 + $0x20] sm:$0x1]
    %v1751 = vld [vmem:[#allocation2] sm:$0xff]
    %v1752 = vld [vmem:[#allocation2 + $0x8] sm:$0xff]
    %v1753 = vld [vmem:[#allocation2 + $0x10] sm:$0xff]
    %v1754 = vld [vmem:[#allocation2 + $0x18] sm:$0xff]
    %v1755 = vld [vmem:[#allocation2 + $0x20] sm:$0xff]
    %v1756 = vld [vmem:[#allocation2 + $0x28] sm:$0xff]
    %v1757 = vld [vmem:[#allocation2 + $0x30] sm:$0xff]
    %v1758 = vld [vmem:[#allocation2 + $0x38] sm:$0xff]
    %v1759 = vld [vmem:[#allocation2 + $0x40] sm:$0xff]
    %v1760 = vld [vmem:[#allocation2 + $0x48] sm:$0xff]
    %v1761 = vld [vmem:[#allocation2 + $0x50] sm:$0xff]
    %v1762 = vld [vmem:[#allocation2 + $0x58] sm:$0xff]
    %v1763 = vld [vmem:[#allocation2 + $0x60] sm:$0xff]
    %v1764 = vld [vmem:[#allocation2 + $0x68] sm:$0xff]
    %v1765 = vld [vmem:[#allocation2 + $0x70] sm:$0xff]
    %v1766 = vld [vmem:[#allocation2 + $0x78] sm:$0xff]
    %v1767 = vld [vmem:[#allocation3 + $0x1] sm:$0x1]
    %v1768 = vld [vmem:[#allocation3 + $0x21] sm:$0x1]
    %s1769 = scalar_lea.vmem [#allocation2], 128
    %v1770 = vld [vmem:[%s1769] sm:$0xff]
    %v1771 = vld [vmem:[%s1769 + $0x8] sm:$0xff]
    %v1772 = vld [vmem:[%s1769 + $0x10] sm:$0xff]
    %v1773 = vld [vmem:[%s1769 + $0x18] sm:$0xff]
    %v1774 = vld [vmem:[%s1769 + $0x20] sm:$0xff]
    %v1775 = vld [vmem:[%s1769 + $0x28] sm:$0xff]
    %v1776 = vld [vmem:[%s1769 + $0x30] sm:$0xff]
    %v1777 = vld [vmem:[%s1769 + $0x38] sm:$0xff]
    %v1778 = vld [vmem:[%s1769 + $0x40] sm:$0xff]
    %v1779 = vld [vmem:[%s1769 + $0x48] sm:$0xff]
    %v1780 = vld [vmem:[%s1769 + $0x50] sm:$0xff]
    %v1781 = vld [vmem:[%s1769 + $0x58] sm:$0xff]
    %v1782 = vld [vmem:[%s1769 + $0x60] sm:$0xff]
    %v1783 = vld [vmem:[%s1769 + $0x68] sm:$0xff]
    %v1784 = vld [vmem:[%s1769 + $0x70] sm:$0xff]
    %v1785 = vld [vmem:[%s1769 + $0x78] sm:$0xff]
    %v1788 = vrot.slane %v1768, 7
    %vm1789 = vcmask 1041409
    %v1790 = vsel %vm1789, %v1788, %v1767
    %1792 = vmatprep.subr.mxu0 0.0
    %1793 = vmatpush1.msra.mxu0 %v1785
    %1794 = vmatprep.subr.mxu0 0.0
    %1795 = vmatpush1.msra.mxu0 %v1784
    %1796 = vmatprep.subr.mxu0 0.0
    %1797 = vmatpush1.msra.mxu0 %v1783
    %1798 = vmatprep.subr.mxu0 0.0
    %1799 = vmatpush1.msra.mxu0 %v1782
    %1800 = vmatprep.subr.mxu0 0.0
    %1801 = vmatpush1.msra.mxu0 %v1781
    %1802 = vmatprep.subr.mxu0 0.0
    %1803 = vmatpush1.msra.mxu0 %v1780
    %1804 = vmatprep.subr.mxu0 0.0
    %1805 = vmatpush1.msra.mxu0 %v1779
    %1806 = vmatprep.subr.mxu0 0.0
    %1807 = vmatpush1.msra.mxu0 %v1778
    %1808 = vmatprep.subr.mxu0 0.0
    %1809 = vmatpush1.msra.mxu0 %v1777
    %1810 = vmatprep.subr.mxu0 0.0
    %1811 = vmatpush1.msra.mxu0 %v1776
    %1812 = vmatprep.subr.mxu0 0.0
    %1813 = vmatpush1.msra.mxu0 %v1775
    %1814 = vmatprep.subr.mxu0 0.0
    %1815 = vmatpush1.msra.mxu0 %v1774
    %1816 = vmatprep.subr.mxu0 0.0
    %1817 = vmatpush1.msra.mxu0 %v1773
    %1818 = vmatprep.subr.mxu0 0.0
    %1819 = vmatpush1.msra.mxu0 %v1772
    %1820 = vmatprep.subr.mxu0 0.0
    %1821 = vmatpush1.msra.mxu0 %v1771
    %1822 = vmatprep.subr.mxu0 0.0
    %1823 = vmatpush1.msra.mxu0 %v1770
    %1824 = vmatprep.subr.mxu0 0.0
    %1825 = vmatpush2.msra.mxu0 0.0
    %1826 = vmatprep.subr.mxu0 0.0
    %1827 = vmatpush2.msra.mxu0 0.0
    %1828 = vmatprep.subr.mxu0 0.0
    %1829 = vmatpush2.msra.mxu0 0.0
    %1830 = vmatprep.subr.mxu0 0.0
    %1831 = vmatpush2.msra.mxu0 0.0
    %1832 = vmatprep.subr.mxu0 0.0
    %1833 = vmatpush2.msra.mxu0 0.0
    %1834 = vmatprep.subr.mxu0 0.0
    %1835 = vmatpush2.msra.mxu0 0.0
    %1836 = vmatprep.subr.mxu0 0.0
    %1837 = vmatpush2.msra.mxu0 0.0
    %1838 = vmatprep.subr.mxu0 0.0
    %1839 = vmatpush2.msra.mxu0 0.0
    %1840 = vmatprep.subr.mxu0 0.0
    %1841 = vmatpush2.msra.mxu0 0.0
    %1842 = vmatprep.subr.mxu0 0.0
    %1843 = vmatpush2.msra.mxu0 0.0
    %1844 = vmatprep.subr.mxu0 0.0
    %1845 = vmatpush2.msra.mxu0 0.0
    %1846 = vmatprep.subr.mxu0 0.0
    %1847 = vmatpush2.msra.mxu0 0.0
    %1848 = vmatprep.subr.mxu0 0.0
    %1849 = vmatpush2.msra.mxu0 0.0
    %1850 = vmatprep.subr.mxu0 0.0
    %1851 = vmatpush2.msra.mxu0 0.0
    %1852 = vmatprep.subr.mxu0 0.0
    %1853 = vmatpush2.msra.mxu0 0.0
    %1854 = vmatprep.subr.mxu0 0.0
    %1855 = vmatpush2.msra.mxu0 0.0
    %1856 = vmatprep.mubr.f32.mxu0 0.0
    %1857 = vmatmul.mubr.f32.gmra.mxu0 %v1790
    %v1858 = vpop.f32.mrf.mxu0
    %v1859 = vadd.f32 0.0, %v1858
    %v1860 = vpop.f32.mrf.mxu0
    %1861 = vdwg.mxu0
    %v1864 = vrot.slane %v1750, 7
    %v1865 = vsel %vm1789, %v1864, %v1749
    %1867 = vmatprep.subr.mxu0 0.0
    %1868 = vmatpush1.msra.mxu0 %v1766
    %1869 = vmatprep.subr.mxu0 0.0
    %1870 = vmatpush1.msra.mxu0 %v1765
    %1871 = vmatprep.subr.mxu0 0.0
    %1872 = vmatpush1.msra.mxu0 %v1764
    %1873 = vmatprep.subr.mxu0 0.0
    %1874 = vmatpush1.msra.mxu0 %v1763
    %1875 = vmatprep.subr.mxu0 0.0
    %1876 = vmatpush1.msra.mxu0 %v1762
    %1877 = vmatprep.subr.mxu0 0.0
    %1878 = vmatpush1.msra.mxu0 %v1761
    %1879 = vmatprep.subr.mxu0 0.0
    %1880 = vmatpush1.msra.mxu0 %v1760
    %1881 = vmatprep.subr.mxu0 0.0
    %1882 = vmatpush1.msra.mxu0 %v1759
    %1883 = vmatprep.subr.mxu0 0.0
    %1884 = vmatpush1.msra.mxu0 %v1758
    %1885 = vmatprep.subr.mxu0 0.0
    %1886 = vmatpush1.msra.mxu0 %v1757
    %1887 = vmatprep.subr.mxu0 0.0
    %1888 = vmatpush1.msra.mxu0 %v1756
    %1889 = vmatprep.subr.mxu0 0.0
    %1890 = vmatpush1.msra.mxu0 %v1755
    %1891 = vmatprep.subr.mxu0 0.0
    %1892 = vmatpush1.msra.mxu0 %v1754
    %1893 = vmatprep.subr.mxu0 0.0
    %1894 = vmatpush1.msra.mxu0 %v1753
    %1895 = vmatprep.subr.mxu0 0.0
    %1896 = vmatpush1.msra.mxu0 %v1752
    %1897 = vmatprep.subr.mxu0 0.0
    %1898 = vmatpush1.msra.mxu0 %v1751
    %1899 = vmatprep.subr.mxu0 0.0
    %1900 = vmatpush2.msra.mxu0 0.0
    %1901 = vmatprep.subr.mxu0 0.0
    %1902 = vmatpush2.msra.mxu0 0.0
    %1903 = vmatprep.subr.mxu0 0.0
    %1904 = vmatpush2.msra.mxu0 0.0
    %1905 = vmatprep.subr.mxu0 0.0
    %1906 = vmatpush2.msra.mxu0 0.0
    %1907 = vmatprep.subr.mxu0 0.0
    %1908 = vmatpush2.msra.mxu0 0.0
    %1909 = vmatprep.subr.mxu0 0.0
    %1910 = vmatpush2.msra.mxu0 0.0
    %1911 = vmatprep.subr.mxu0 0.0
    %1912 = vmatpush2.msra.mxu0 0.0
    %1913 = vmatprep.subr.mxu0 0.0
    %1914 = vmatpush2.msra.mxu0 0.0
    %1915 = vmatprep.subr.mxu0 0.0
    %1916 = vmatpush2.msra.mxu0 0.0
    %1917 = vmatprep.subr.mxu0 0.0
    %1918 = vmatpush2.msra.mxu0 0.0
    %1919 = vmatprep.subr.mxu0 0.0
    %1920 = vmatpush2.msra.mxu0 0.0
    %1921 = vmatprep.subr.mxu0 0.0
    %1922 = vmatpush2.msra.mxu0 0.0
    %1923 = vmatprep.subr.mxu0 0.0
    %1924 = vmatpush2.msra.mxu0 0.0
    %1925 = vmatprep.subr.mxu0 0.0
    %1926 = vmatpush2.msra.mxu0 0.0
    %1927 = vmatprep.subr.mxu0 0.0
    %1928 = vmatpush2.msra.mxu0 0.0
    %1929 = vmatprep.subr.mxu0 0.0
    %1930 = vmatpush2.msra.mxu0 0.0
    %1931 = vmatprep.mubr.f32.mxu0 0.0
    %1932 = vmatmul.mubr.f32.gmra.mxu0 %v1865
    %v1933 = vpop.f32.mrf.mxu0
    %v1934 = vadd.f32 %v1859, %v1933
    %v1935 = vpop.f32.mrf.mxu0
    %1936 = vdwg.mxu0
    %v1937 = vld [vmem:[#allocation3 + $0x2] sm:$0x1]
    %v1938 = vld [vmem:[#allocation3 + $0x22] sm:$0x1]
    %s1939 = scalar_lea.vmem [#allocation2], 256
    %v1940 = vld [vmem:[%s1939] sm:$0xff]
    %v1941 = vld [vmem:[%s1939 + $0x8] sm:$0xff]
    %v1942 = vld [vmem:[%s1939 + $0x10] sm:$0xff]
    %v1943 = vld [vmem:[%s1939 + $0x18] sm:$0xff]
    %v1944 = vld [vmem:[%s1939 + $0x20] sm:$0xff]
    %v1945 = vld [vmem:[%s1939 + $0x28] sm:$0xff]
    %v1946 = vld [vmem:[%s1939 + $0x30] sm:$0xff]
    %v1947 = vld [vmem:[%s1939 + $0x38] sm:$0xff]
    %v1948 = vld [vmem:[%s1939 + $0x40] sm:$0xff]
    %v1949 = vld [vmem:[%s1939 + $0x48] sm:$0xff]
    %v1950 = vld [vmem:[%s1939 + $0x50] sm:$0xff]
    %v1951 = vld [vmem:[%s1939 + $0x58] sm:$0xff]
    %v1952 = vld [vmem:[%s1939 + $0x60] sm:$0xff]
    %v1953 = vld [vmem:[%s1939 + $0x68] sm:$0xff]
    %v1954 = vld [vmem:[%s1939 + $0x70] sm:$0xff]
    %v1955 = vld [vmem:[%s1939 + $0x78] sm:$0xff]
    %v1958 = vrot.slane %v1938, 7
    %v1959 = vsel %vm1789, %v1958, %v1937
    %1961 = vmatprep.subr.mxu0 0.0
    %1962 = vmatpush1.msra.mxu0 %v1955
    %1963 = vmatprep.subr.mxu0 0.0
    %1964 = vmatpush1.msra.mxu0 %v1954
    %1965 = vmatprep.subr.mxu0 0.0
    %1966 = vmatpush1.msra.mxu0 %v1953
    %1967 = vmatprep.subr.mxu0 0.0
    %1968 = vmatpush1.msra.mxu0 %v1952
    %1969 = vmatprep.subr.mxu0 0.0
    %1970 = vmatpush1.msra.mxu0 %v1951
    %1971 = vmatprep.subr.mxu0 0.0
    %1972 = vmatpush1.msra.mxu0 %v1950
    %1973 = vmatprep.subr.mxu0 0.0
    %1974 = vmatpush1.msra.mxu0 %v1949
    %1975 = vmatprep.subr.mxu0 0.0
    %1976 = vmatpush1.msra.mxu0 %v1948
    %1977 = vmatprep.subr.mxu0 0.0
    %1978 = vmatpush1.msra.mxu0 %v1947
    %1979 = vmatprep.subr.mxu0 0.0
    %1980 = vmatpush1.msra.mxu0 %v1946
    %1981 = vmatprep.subr.mxu0 0.0
    %1982 = vmatpush1.msra.mxu0 %v1945
    %1983 = vmatprep.subr.mxu0 0.0
    %1984 = vmatpush1.msra.mxu0 %v1944
    %1985 = vmatprep.subr.mxu0 0.0
    %1986 = vmatpush1.msra.mxu0 %v1943
    %1987 = vmatprep.subr.mxu0 0.0
    %1988 = vmatpush1.msra.mxu0 %v1942
    %1989 = vmatprep.subr.mxu0 0.0
    %1990 = vmatpush1.msra.mxu0 %v1941
    %1991 = vmatprep.subr.mxu0 0.0
    %1992 = vmatpush1.msra.mxu0 %v1940
    %1993 = vmatprep.subr.mxu0 0.0
    %1994 = vmatpush2.msra.mxu0 0.0
    %1995 = vmatprep.subr.mxu0 0.0
    %1996 = vmatpush2.msra.mxu0 0.0
    %1997 = vmatprep.subr.mxu0 0.0
    %1998 = vmatpush2.msra.mxu0 0.0
    %1999 = vmatprep.subr.mxu0 0.0
    %2000 = vmatpush2.msra.mxu0 0.0
    %2001 = vmatprep.subr.mxu0 0.0
    %2002 = vmatpush2.msra.mxu0 0.0
    %2003 = vmatprep.subr.mxu0 0.0
    %2004 = vmatpush2.msra.mxu0 0.0
    %2005 = vmatprep.subr.mxu0 0.0
    %2006 = vmatpush2.msra.mxu0 0.0
    %2007 = vmatprep.subr.mxu0 0.0
    %2008 = vmatpush2.msra.mxu0 0.0
    %2009 = vmatprep.subr.mxu0 0.0
    %2010 = vmatpush2.msra.mxu0 0.0
    %2011 = vmatprep.subr.mxu0 0.0
    %2012 = vmatpush2.msra.mxu0 0.0
    %2013 = vmatprep.subr.mxu0 0.0
    %2014 = vmatpush2.msra.mxu0 0.0
    %2015 = vmatprep.subr.mxu0 0.0
    %2016 = vmatpush2.msra.mxu0 0.0
    %2017 = vmatprep.subr.mxu0 0.0
    %2018 = vmatpush2.msra.mxu0 0.0
    %2019 = vmatprep.subr.mxu0 0.0
    %2020 = vmatpush2.msra.mxu0 0.0
    %2021 = vmatprep.subr.mxu0 0.0
    %2022 = vmatpush2.msra.mxu0 0.0
    %2023 = vmatprep.subr.mxu0 0.0
    %2024 = vmatpush2.msra.mxu0 0.0
    %2025 = vmatprep.mubr.f32.mxu0 0.0
    %2026 = vmatmul.mubr.f32.gmra.mxu0 %v1959
    %v2027 = vpop.f32.mrf.mxu0
    %v2028 = vadd.f32 0.0, %v2027
    %v2029 = vpop.f32.mrf.mxu0
    %2030 = vdwg.mxu0
    %v2031 = vadd.f32 %v1934, %v2028
    %v2032 = vld [vmem:[#allocation3 + $0x3] sm:$0x1]
    %v2033 = vld [vmem:[#allocation3 + $0x23] sm:$0x1]
    %s2034 = scalar_lea.vmem [#allocation2], 384
    %v2035 = vld [vmem:[%s2034] sm:$0xff]
    %v2036 = vld [vmem:[%s2034 + $0x8] sm:$0xff]
    %v2037 = vld [vmem:[%s2034 + $0x10] sm:$0xff]
    %v2038 = vld [vmem:[%s2034 + $0x18] sm:$0xff]
    %v2039 = vld [vmem:[%s2034 + $0x20] sm:$0xff]
    %v2040 = vld [vmem:[%s2034 + $0x28] sm:$0xff]
    %v2041 = vld [vmem:[%s2034 + $0x30] sm:$0xff]
    %v2042 = vld [vmem:[%s2034 + $0x38] sm:$0xff]
    %v2043 = vld [vmem:[%s2034 + $0x40] sm:$0xff]
    %v2044 = vld [vmem:[%s2034 + $0x48] sm:$0xff]
    %v2045 = vld [vmem:[%s2034 + $0x50] sm:$0xff]
    %v2046 = vld [vmem:[%s2034 + $0x58] sm:$0xff]
    %v2047 = vld [vmem:[%s2034 + $0x60] sm:$0xff]
    %v2048 = vld [vmem:[%s2034 + $0x68] sm:$0xff]
    %v2049 = vld [vmem:[%s2034 + $0x70] sm:$0xff]
    %v2050 = vld [vmem:[%s2034 + $0x78] sm:$0xff]
    %v2053 = vrot.slane %v2033, 7
    %v2054 = vsel %vm1789, %v2053, %v2032
    %2056 = vmatprep.subr.mxu0 0.0
    %2057 = vmatpush1.msra.mxu0 %v2050
    %2058 = vmatprep.subr.mxu0 0.0
    %2059 = vmatpush1.msra.mxu0 %v2049
    %2060 = vmatprep.subr.mxu0 0.0
    %2061 = vmatpush1.msra.mxu0 %v2048
    %2062 = vmatprep.subr.mxu0 0.0
    %2063 = vmatpush1.msra.mxu0 %v2047
    %2064 = vmatprep.subr.mxu0 0.0
    %2065 = vmatpush1.msra.mxu0 %v2046
    %2066 = vmatprep.subr.mxu0 0.0
    %2067 = vmatpush1.msra.mxu0 %v2045
    %2068 = vmatprep.subr.mxu0 0.0
    %2069 = vmatpush1.msra.mxu0 %v2044
    %2070 = vmatprep.subr.mxu0 0.0
    %2071 = vmatpush1.msra.mxu0 %v2043
    %2072 = vmatprep.subr.mxu0 0.0
    %2073 = vmatpush1.msra.mxu0 %v2042
    %2074 = vmatprep.subr.mxu0 0.0
    %2075 = vmatpush1.msra.mxu0 %v2041
    %2076 = vmatprep.subr.mxu0 0.0
    %2077 = vmatpush1.msra.mxu0 %v2040
    %2078 = vmatprep.subr.mxu0 0.0
    %2079 = vmatpush1.msra.mxu0 %v2039
    %2080 = vmatprep.subr.mxu0 0.0
    %2081 = vmatpush1.msra.mxu0 %v2038
    %2082 = vmatprep.subr.mxu0 0.0
    %2083 = vmatpush1.msra.mxu0 %v2037
    %2084 = vmatprep.subr.mxu0 0.0
    %2085 = vmatpush1.msra.mxu0 %v2036
    %2086 = vmatprep.subr.mxu0 0.0
    %2087 = vmatpush1.msra.mxu0 %v2035
    %2088 = vmatprep.subr.mxu0 0.0
    %2089 = vmatpush2.msra.mxu0 0.0
    %2090 = vmatprep.subr.mxu0 0.0
    %2091 = vmatpush2.msra.mxu0 0.0
    %2092 = vmatprep.subr.mxu0 0.0
    %2093 = vmatpush2.msra.mxu0 0.0
    %2094 = vmatprep.subr.mxu0 0.0
    %2095 = vmatpush2.msra.mxu0 0.0
    %2096 = vmatprep.subr.mxu0 0.0
    %2097 = vmatpush2.msra.mxu0 0.0
    %2098 = vmatprep.subr.mxu0 0.0
    %2099 = vmatpush2.msra.mxu0 0.0
    %2100 = vmatprep.subr.mxu0 0.0
    %2101 = vmatpush2.msra.mxu0 0.0
    %2102 = vmatprep.subr.mxu0 0.0
    %2103 = vmatpush2.msra.mxu0 0.0
    %2104 = vmatprep.subr.mxu0 0.0
    %2105 = vmatpush2.msra.mxu0 0.0
    %2106 = vmatprep.subr.mxu0 0.0
    %2107 = vmatpush2.msra.mxu0 0.0
    %2108 = vmatprep.subr.mxu0 0.0
    %2109 = vmatpush2.msra.mxu0 0.0
    %2110 = vmatprep.subr.mxu0 0.0
    %2111 = vmatpush2.msra.mxu0 0.0
    %2112 = vmatprep.subr.mxu0 0.0
    %2113 = vmatpush2.msra.mxu0 0.0
    %2114 = vmatprep.subr.mxu0 0.0
    %2115 = vmatpush2.msra.mxu0 0.0
    %2116 = vmatprep.subr.mxu0 0.0
    %2117 = vmatpush2.msra.mxu0 0.0
    %2118 = vmatprep.subr.mxu0 0.0
    %2119 = vmatpush2.msra.mxu0 0.0
    %2120 = vmatprep.mubr.f32.mxu0 0.0
    %2121 = vmatmul.mubr.f32.gmra.mxu0 %v2054
    %v2122 = vpop.f32.mrf.mxu0
    %v2123 = vadd.f32 0.0, %v2122
    %v2124 = vpop.f32.mrf.mxu0
    %2125 = vdwg.mxu0
    %v2126 = vadd.f32 %v2031, %v2123
    %v2127 = vld [vmem:[#allocation3 + $0x4] sm:$0x1]
    %v2128 = vld [vmem:[#allocation3 + $0x24] sm:$0x1]
    %s2129 = scalar_lea.vmem [#allocation2], 512
    %v2130 = vld [vmem:[%s2129] sm:$0xff]
    %v2131 = vld [vmem:[%s2129 + $0x8] sm:$0xff]
    %v2132 = vld [vmem:[%s2129 + $0x10] sm:$0xff]
    %v2133 = vld [vmem:[%s2129 + $0x18] sm:$0xff]
    %v2134 = vld [vmem:[%s2129 + $0x20] sm:$0xff]
    %v2135 = vld [vmem:[%s2129 + $0x28] sm:$0xff]
    %v2136 = vld [vmem:[%s2129 + $0x30] sm:$0xff]
    %v2137 = vld [vmem:[%s2129 + $0x38] sm:$0xff]
    %v2138 = vld [vmem:[%s2129 + $0x40] sm:$0xff]
    %v2139 = vld [vmem:[%s2129 + $0x48] sm:$0xff]
    %v2140 = vld [vmem:[%s2129 + $0x50] sm:$0xff]
    %v2141 = vld [vmem:[%s2129 + $0x58] sm:$0xff]
    %v2142 = vld [vmem:[%s2129 + $0x60] sm:$0xff]
    %v2143 = vld [vmem:[%s2129 + $0x68] sm:$0xff]
    %v2144 = vld [vmem:[%s2129 + $0x70] sm:$0xff]
    %v2145 = vld [vmem:[%s2129 + $0x78] sm:$0xff]
    %v2148 = vrot.slane %v2128, 7
    %v2149 = vsel %vm1789, %v2148, %v2127
    %2151 = vmatprep.subr.mxu0 0.0
    %2152 = vmatpush1.msra.mxu0 %v2145
    %2153 = vmatprep.subr.mxu0 0.0
    %2154 = vmatpush1.msra.mxu0 %v2144
    %2155 = vmatprep.subr.mxu0 0.0
    %2156 = vmatpush1.msra.mxu0 %v2143
    %2157 = vmatprep.subr.mxu0 0.0
    %2158 = vmatpush1.msra.mxu0 %v2142
    %2159 = vmatprep.subr.mxu0 0.0
    %2160 = vmatpush1.msra.mxu0 %v2141
    %2161 = vmatprep.subr.mxu0 0.0
    %2162 = vmatpush1.msra.mxu0 %v2140
    %2163 = vmatprep.subr.mxu0 0.0
    %2164 = vmatpush1.msra.mxu0 %v2139
    %2165 = vmatprep.subr.mxu0 0.0
    %2166 = vmatpush1.msra.mxu0 %v2138
    %2167 = vmatprep.subr.mxu0 0.0
    %2168 = vmatpush1.msra.mxu0 %v2137
    %2169 = vmatprep.subr.mxu0 0.0
    %2170 = vmatpush1.msra.mxu0 %v2136
    %2171 = vmatprep.subr.mxu0 0.0
    %2172 = vmatpush1.msra.mxu0 %v2135
    %2173 = vmatprep.subr.mxu0 0.0
    %2174 = vmatpush1.msra.mxu0 %v2134
    %2175 = vmatprep.subr.mxu0 0.0
    %2176 = vmatpush1.msra.mxu0 %v2133
    %2177 = vmatprep.subr.mxu0 0.0
    %2178 = vmatpush1.msra.mxu0 %v2132
    %2179 = vmatprep.subr.mxu0 0.0
    %2180 = vmatpush1.msra.mxu0 %v2131
    %2181 = vmatprep.subr.mxu0 0.0
    %2182 = vmatpush1.msra.mxu0 %v2130
    %2183 = vmatprep.subr.mxu0 0.0
    %2184 = vmatpush2.msra.mxu0 0.0
    %2185 = vmatprep.subr.mxu0 0.0
    %2186 = vmatpush2.msra.mxu0 0.0
    %2187 = vmatprep.subr.mxu0 0.0
    %2188 = vmatpush2.msra.mxu0 0.0
    %2189 = vmatprep.subr.mxu0 0.0
    %2190 = vmatpush2.msra.mxu0 0.0
    %2191 = vmatprep.subr.mxu0 0.0
    %2192 = vmatpush2.msra.mxu0 0.0
    %2193 = vmatprep.subr.mxu0 0.0
    %2194 = vmatpush2.msra.mxu0 0.0
    %2195 = vmatprep.subr.mxu0 0.0
    %2196 = vmatpush2.msra.mxu0 0.0
    %2197 = vmatprep.subr.mxu0 0.0
    %2198 = vmatpush2.msra.mxu0 0.0
    %2199 = vmatprep.subr.mxu0 0.0
    %2200 = vmatpush2.msra.mxu0 0.0
    %2201 = vmatprep.subr.mxu0 0.0
    %2202 = vmatpush2.msra.mxu0 0.0
    %2203 = vmatprep.subr.mxu0 0.0
    %2204 = vmatpush2.msra.mxu0 0.0
    %2205 = vmatprep.subr.mxu0 0.0
    %2206 = vmatpush2.msra.mxu0 0.0
    %2207 = vmatprep.subr.mxu0 0.0
    %2208 = vmatpush2.msra.mxu0 0.0
    %2209 = vmatprep.subr.mxu0 0.0
    %2210 = vmatpush2.msra.mxu0 0.0
    %2211 = vmatprep.subr.mxu0 0.0
    %2212 = vmatpush2.msra.mxu0 0.0
    %2213 = vmatprep.subr.mxu0 0.0
    %2214 = vmatpush2.msra.mxu0 0.0
    %2215 = vmatprep.mubr.f32.mxu0 0.0
    %2216 = vmatmul.mubr.f32.gmra.mxu0 %v2149
    %v2217 = vpop.f32.mrf.mxu0
    %v2218 = vadd.f32 0.0, %v2217
    %v2219 = vpop.f32.mrf.mxu0
    %2220 = vdwg.mxu0
    %v2221 = vadd.f32 %v2126, %v2218
    %v2222 = vld [vmem:[#allocation3 + $0x5] sm:$0x1]
    %v2223 = vld [vmem:[#allocation3 + $0x25] sm:$0x1]
    %s2224 = scalar_lea.vmem [#allocation2], 640
    %v2225 = vld [vmem:[%s2224] sm:$0xff]
    %v2226 = vld [vmem:[%s2224 + $0x8] sm:$0xff]
    %v2227 = vld [vmem:[%s2224 + $0x10] sm:$0xff]
    %v2228 = vld [vmem:[%s2224 + $0x18] sm:$0xff]
    %v2229 = vld [vmem:[%s2224 + $0x20] sm:$0xff]
    %v2230 = vld [vmem:[%s2224 + $0x28] sm:$0xff]
    %v2231 = vld [vmem:[%s2224 + $0x30] sm:$0xff]
    %v2232 = vld [vmem:[%s2224 + $0x38] sm:$0xff]
    %v2233 = vld [vmem:[%s2224 + $0x40] sm:$0xff]
    %v2234 = vld [vmem:[%s2224 + $0x48] sm:$0xff]
    %v2235 = vld [vmem:[%s2224 + $0x50] sm:$0xff]
    %v2236 = vld [vmem:[%s2224 + $0x58] sm:$0xff]
    %v2237 = vld [vmem:[%s2224 + $0x60] sm:$0xff]
    %v2238 = vld [vmem:[%s2224 + $0x68] sm:$0xff]
    %v2239 = vld [vmem:[%s2224 + $0x70] sm:$0xff]
    %v2240 = vld [vmem:[%s2224 + $0x78] sm:$0xff]
    %v2243 = vrot.slane %v2223, 7
    %v2244 = vsel %vm1789, %v2243, %v2222
    %2246 = vmatprep.subr.mxu0 0.0
    %2247 = vmatpush1.msra.mxu0 %v2240
    %2248 = vmatprep.subr.mxu0 0.0
    %2249 = vmatpush1.msra.mxu0 %v2239
    %2250 = vmatprep.subr.mxu0 0.0
    %2251 = vmatpush1.msra.mxu0 %v2238
    %2252 = vmatprep.subr.mxu0 0.0
    %2253 = vmatpush1.msra.mxu0 %v2237
    %2254 = vmatprep.subr.mxu0 0.0
    %2255 = vmatpush1.msra.mxu0 %v2236
    %2256 = vmatprep.subr.mxu0 0.0
    %2257 = vmatpush1.msra.mxu0 %v2235
    %2258 = vmatprep.subr.mxu0 0.0
    %2259 = vmatpush1.msra.mxu0 %v2234
    %2260 = vmatprep.subr.mxu0 0.0
    %2261 = vmatpush1.msra.mxu0 %v2233
    %2262 = vmatprep.subr.mxu0 0.0
    %2263 = vmatpush1.msra.mxu0 %v2232
    %2264 = vmatprep.subr.mxu0 0.0
    %2265 = vmatpush1.msra.mxu0 %v2231
    %2266 = vmatprep.subr.mxu0 0.0
    %2267 = vmatpush1.msra.mxu0 %v2230
    %2268 = vmatprep.subr.mxu0 0.0
    %2269 = vmatpush1.msra.mxu0 %v2229
    %2270 = vmatprep.subr.mxu0 0.0
    %2271 = vmatpush1.msra.mxu0 %v2228
    %2272 = vmatprep.subr.mxu0 0.0
    %2273 = vmatpush1.msra.mxu0 %v2227
    %2274 = vmatprep.subr.mxu0 0.0
    %2275 = vmatpush1.msra.mxu0 %v2226
    %2276 = vmatprep.subr.mxu0 0.0
    %2277 = vmatpush1.msra.mxu0 %v2225
    %2278 = vmatprep.subr.mxu0 0.0
    %2279 = vmatpush2.msra.mxu0 0.0
    %2280 = vmatprep.subr.mxu0 0.0
    %2281 = vmatpush2.msra.mxu0 0.0
    %2282 = vmatprep.subr.mxu0 0.0
    %2283 = vmatpush2.msra.mxu0 0.0
    %2284 = vmatprep.subr.mxu0 0.0
    %2285 = vmatpush2.msra.mxu0 0.0
    %2286 = vmatprep.subr.mxu0 0.0
    %2287 = vmatpush2.msra.mxu0 0.0
    %2288 = vmatprep.subr.mxu0 0.0
    %2289 = vmatpush2.msra.mxu0 0.0
    %2290 = vmatprep.subr.mxu0 0.0
    %2291 = vmatpush2.msra.mxu0 0.0
    %2292 = vmatprep.subr.mxu0 0.0
    %2293 = vmatpush2.msra.mxu0 0.0
    %2294 = vmatprep.subr.mxu0 0.0
    %2295 = vmatpush2.msra.mxu0 0.0
    %2296 = vmatprep.subr.mxu0 0.0
    %2297 = vmatpush2.msra.mxu0 0.0
    %2298 = vmatprep.subr.mxu0 0.0
    %2299 = vmatpush2.msra.mxu0 0.0
    %2300 = vmatprep.subr.mxu0 0.0
    %2301 = vmatpush2.msra.mxu0 0.0
    %2302 = vmatprep.subr.mxu0 0.0
    %2303 = vmatpush2.msra.mxu0 0.0
    %2304 = vmatprep.subr.mxu0 0.0
    %2305 = vmatpush2.msra.mxu0 0.0
    %2306 = vmatprep.subr.mxu0 0.0
    %2307 = vmatpush2.msra.mxu0 0.0
    %2308 = vmatprep.subr.mxu0 0.0
    %2309 = vmatpush2.msra.mxu0 0.0
    %2310 = vmatprep.mubr.f32.mxu0 0.0
    %2311 = vmatmul.mubr.f32.gmra.mxu0 %v2244
    %v2312 = vpop.f32.mrf.mxu0
    %v2313 = vadd.f32 0.0, %v2312
    %v2314 = vpop.f32.mrf.mxu0
    %2315 = vdwg.mxu0
    %v2316 = vadd.f32 %v2221, %v2313
    %v2317 = vld [vmem:[#allocation3 + $0x6] sm:$0x1]
    %v2318 = vld [vmem:[#allocation3 + $0x26] sm:$0x1]
    %s2319 = scalar_lea.vmem [#allocation2], 768
    %v2320 = vld [vmem:[%s2319] sm:$0xff]
    %v2321 = vld [vmem:[%s2319 + $0x8] sm:$0xff]
    %v2322 = vld [vmem:[%s2319 + $0x10] sm:$0xff]
    %v2323 = vld [vmem:[%s2319 + $0x18] sm:$0xff]
    %v2324 = vld [vmem:[%s2319 + $0x20] sm:$0xff]
    %v2325 = vld [vmem:[%s2319 + $0x28] sm:$0xff]
    %v2326 = vld [vmem:[%s2319 + $0x30] sm:$0xff]
    %v2327 = vld [vmem:[%s2319 + $0x38] sm:$0xff]
    %v2328 = vld [vmem:[%s2319 + $0x40] sm:$0xff]
    %v2329 = vld [vmem:[%s2319 + $0x48] sm:$0xff]
    %v2330 = vld [vmem:[%s2319 + $0x50] sm:$0xff]
    %v2331 = vld [vmem:[%s2319 + $0x58] sm:$0xff]
    %v2332 = vld [vmem:[%s2319 + $0x60] sm:$0xff]
    %v2333 = vld [vmem:[%s2319 + $0x68] sm:$0xff]
    %v2334 = vld [vmem:[%s2319 + $0x70] sm:$0xff]
    %v2335 = vld [vmem:[%s2319 + $0x78] sm:$0xff]
    %v2338 = vrot.slane %v2318, 7
    %v2339 = vsel %vm1789, %v2338, %v2317
    %2341 = vmatprep.subr.mxu0 0.0
    %2342 = vmatpush1.msra.mxu0 %v2335
    %2343 = vmatprep.subr.mxu0 0.0
    %2344 = vmatpush1.msra.mxu0 %v2334
    %2345 = vmatprep.subr.mxu0 0.0
    %2346 = vmatpush1.msra.mxu0 %v2333
    %2347 = vmatprep.subr.mxu0 0.0
    %2348 = vmatpush1.msra.mxu0 %v2332
    %2349 = vmatprep.subr.mxu0 0.0
    %2350 = vmatpush1.msra.mxu0 %v2331
    %2351 = vmatprep.subr.mxu0 0.0
    %2352 = vmatpush1.msra.mxu0 %v2330
    %2353 = vmatprep.subr.mxu0 0.0
    %2354 = vmatpush1.msra.mxu0 %v2329
    %2355 = vmatprep.subr.mxu0 0.0
    %2356 = vmatpush1.msra.mxu0 %v2328
    %2357 = vmatprep.subr.mxu0 0.0
    %2358 = vmatpush1.msra.mxu0 %v2327
    %2359 = vmatprep.subr.mxu0 0.0
    %2360 = vmatpush1.msra.mxu0 %v2326
    %2361 = vmatprep.subr.mxu0 0.0
    %2362 = vmatpush1.msra.mxu0 %v2325
    %2363 = vmatprep.subr.mxu0 0.0
    %2364 = vmatpush1.msra.mxu0 %v2324
    %2365 = vmatprep.subr.mxu0 0.0
    %2366 = vmatpush1.msra.mxu0 %v2323
    %2367 = vmatprep.subr.mxu0 0.0
    %2368 = vmatpush1.msra.mxu0 %v2322
    %2369 = vmatprep.subr.mxu0 0.0
    %2370 = vmatpush1.msra.mxu0 %v2321
    %2371 = vmatprep.subr.mxu0 0.0
    %2372 = vmatpush1.msra.mxu0 %v2320
    %2373 = vmatprep.subr.mxu0 0.0
    %2374 = vmatpush2.msra.mxu0 0.0
    %2375 = vmatprep.subr.mxu0 0.0
    %2376 = vmatpush2.msra.mxu0 0.0
    %2377 = vmatprep.subr.mxu0 0.0
    %2378 = vmatpush2.msra.mxu0 0.0
    %2379 = vmatprep.subr.mxu0 0.0
    %2380 = vmatpush2.msra.mxu0 0.0
    %2381 = vmatprep.subr.mxu0 0.0
    %2382 = vmatpush2.msra.mxu0 0.0
    %2383 = vmatprep.subr.mxu0 0.0
    %2384 = vmatpush2.msra.mxu0 0.0
    %2385 = vmatprep.subr.mxu0 0.0
    %2386 = vmatpush2.msra.mxu0 0.0
    %2387 = vmatprep.subr.mxu0 0.0
    %2388 = vmatpush2.msra.mxu0 0.0
    %2389 = vmatprep.subr.mxu0 0.0
    %2390 = vmatpush2.msra.mxu0 0.0
    %2391 = vmatprep.subr.mxu0 0.0
    %2392 = vmatpush2.msra.mxu0 0.0
    %2393 = vmatprep.subr.mxu0 0.0
    %2394 = vmatpush2.msra.mxu0 0.0
    %2395 = vmatprep.subr.mxu0 0.0
    %2396 = vmatpush2.msra.mxu0 0.0
    %2397 = vmatprep.subr.mxu0 0.0
    %2398 = vmatpush2.msra.mxu0 0.0
    %2399 = vmatprep.subr.mxu0 0.0
    %2400 = vmatpush2.msra.mxu0 0.0
    %2401 = vmatprep.subr.mxu0 0.0
    %2402 = vmatpush2.msra.mxu0 0.0
    %2403 = vmatprep.subr.mxu0 0.0
    %2404 = vmatpush2.msra.mxu0 0.0
    %2405 = vmatprep.mubr.f32.mxu0 0.0
    %2406 = vmatmul.mubr.f32.gmra.mxu0 %v2339
    %v2407 = vpop.f32.mrf.mxu0
    %v2408 = vadd.f32 0.0, %v2407
    %v2409 = vpop.f32.mrf.mxu0
    %2410 = vdwg.mxu0
    %v2411 = vadd.f32 %v2316, %v2408
    %v2412 = vld [vmem:[#allocation3 + $0x7] sm:$0x1]
    %v2413 = vld [vmem:[#allocation3 + $0x27] sm:$0x1]
    %s2414 = scalar_lea.vmem [#allocation2], 896
    %v2415 = vld [vmem:[%s2414] sm:$0xff]
    %v2416 = vld [vmem:[%s2414 + $0x8] sm:$0xff]
    %v2417 = vld [vmem:[%s2414 + $0x10] sm:$0xff]
    %v2418 = vld [vmem:[%s2414 + $0x18] sm:$0xff]
    %v2419 = vld [vmem:[%s2414 + $0x20] sm:$0xff]
    %v2420 = vld [vmem:[%s2414 + $0x28] sm:$0xff]
    %v2421 = vld [vmem:[%s2414 + $0x30] sm:$0xff]
    %v2422 = vld [vmem:[%s2414 + $0x38] sm:$0xff]
    %v2423 = vld [vmem:[%s2414 + $0x40] sm:$0xff]
    %v2424 = vld [vmem:[%s2414 + $0x48] sm:$0xff]
    %v2425 = vld [vmem:[%s2414 + $0x50] sm:$0xff]
    %v2426 = vld [vmem:[%s2414 + $0x58] sm:$0xff]
    %v2427 = vld [vmem:[%s2414 + $0x60] sm:$0xff]
    %v2428 = vld [vmem:[%s2414 + $0x68] sm:$0xff]
    %v2429 = vld [vmem:[%s2414 + $0x70] sm:$0xff]
    %v2430 = vld [vmem:[%s2414 + $0x78] sm:$0xff]
    %v2433 = vrot.slane %v2413, 7
    %v2434 = vsel %vm1789, %v2433, %v2412
    %2436 = vmatprep.subr.mxu0 0.0
    %2437 = vmatpush1.msra.mxu0 %v2430
    %2438 = vmatprep.subr.mxu0 0.0
    %2439 = vmatpush1.msra.mxu0 %v2429
    %2440 = vmatprep.subr.mxu0 0.0
    %2441 = vmatpush1.msra.mxu0 %v2428
    %2442 = vmatprep.subr.mxu0 0.0
    %2443 = vmatpush1.msra.mxu0 %v2427
    %2444 = vmatprep.subr.mxu0 0.0
    %2445 = vmatpush1.msra.mxu0 %v2426
    %2446 = vmatprep.subr.mxu0 0.0
    %2447 = vmatpush1.msra.mxu0 %v2425
    %2448 = vmatprep.subr.mxu0 0.0
    %2449 = vmatpush1.msra.mxu0 %v2424
    %2450 = vmatprep.subr.mxu0 0.0
    %2451 = vmatpush1.msra.mxu0 %v2423
    %2452 = vmatprep.subr.mxu0 0.0
    %2453 = vmatpush1.msra.mxu0 %v2422
    %2454 = vmatprep.subr.mxu0 0.0
    %2455 = vmatpush1.msra.mxu0 %v2421
    %2456 = vmatprep.subr.mxu0 0.0
    %2457 = vmatpush1.msra.mxu0 %v2420
    %2458 = vmatprep.subr.mxu0 0.0
    %2459 = vmatpush1.msra.mxu0 %v2419
    %2460 = vmatprep.subr.mxu0 0.0
    %2461 = vmatpush1.msra.mxu0 %v2418
    %2462 = vmatprep.subr.mxu0 0.0
    %2463 = vmatpush1.msra.mxu0 %v2417
    %2464 = vmatprep.subr.mxu0 0.0
    %2465 = vmatpush1.msra.mxu0 %v2416
    %2466 = vmatprep.subr.mxu0 0.0
    %2467 = vmatpush1.msra.mxu0 %v2415
    %2468 = vmatprep.subr.mxu0 0.0
    %2469 = vmatpush2.msra.mxu0 0.0
    %2470 = vmatprep.subr.mxu0 0.0
    %2471 = vmatpush2.msra.mxu0 0.0
    %2472 = vmatprep.subr.mxu0 0.0
    %2473 = vmatpush2.msra.mxu0 0.0
    %2474 = vmatprep.subr.mxu0 0.0
    %2475 = vmatpush2.msra.mxu0 0.0
    %2476 = vmatprep.subr.mxu0 0.0
    %2477 = vmatpush2.msra.mxu0 0.0
    %2478 = vmatprep.subr.mxu0 0.0
    %2479 = vmatpush2.msra.mxu0 0.0
    %2480 = vmatprep.subr.mxu0 0.0
    %2481 = vmatpush2.msra.mxu0 0.0
    %2482 = vmatprep.subr.mxu0 0.0
    %2483 = vmatpush2.msra.mxu0 0.0
    %2484 = vmatprep.subr.mxu0 0.0
    %2485 = vmatpush2.msra.mxu0 0.0
    %2486 = vmatprep.subr.mxu0 0.0
    %2487 = vmatpush2.msra.mxu0 0.0
    %2488 = vmatprep.subr.mxu0 0.0
    %2489 = vmatpush2.msra.mxu0 0.0
    %2490 = vmatprep.subr.mxu0 0.0
    %2491 = vmatpush2.msra.mxu0 0.0
    %2492 = vmatprep.subr.mxu0 0.0
    %2493 = vmatpush2.msra.mxu0 0.0
    %2494 = vmatprep.subr.mxu0 0.0
    %2495 = vmatpush2.msra.mxu0 0.0
    %2496 = vmatprep.subr.mxu0 0.0
    %2497 = vmatpush2.msra.mxu0 0.0
    %2498 = vmatprep.subr.mxu0 0.0
    %2499 = vmatpush2.msra.mxu0 0.0
    %2500 = vmatprep.mubr.f32.mxu0 0.0
    %2501 = vmatmul.mubr.f32.gmra.mxu0 %v2434
    %v2502 = vpop.f32.mrf.mxu0
    %v2503 = vadd.f32 0.0, %v2502
    %v2504 = vpop.f32.mrf.mxu0
    %2505 = vdwg.mxu0
    %v2506 = vadd.f32 %v2411, %v2503
    %v2507 = vld [vmem:[#allocation3 + $0x8] sm:$0x1]
    %v2508 = vld [vmem:[#allocation3 + $0x28] sm:$0x1]
    %s2509 = scalar_lea.vmem [#allocation2], 1024
    %v2510 = vld [vmem:[%s2509] sm:$0xff]
    %v2511 = vld [vmem:[%s2509 + $0x8] sm:$0xff]
    %v2512 = vld [vmem:[%s2509 + $0x10] sm:$0xff]
    %v2513 = vld [vmem:[%s2509 + $0x18] sm:$0xff]
    %v2514 = vld [vmem:[%s2509 + $0x20] sm:$0xff]
    %v2515 = vld [vmem:[%s2509 + $0x28] sm:$0xff]
    %v2516 = vld [vmem:[%s2509 + $0x30] sm:$0xff]
    %v2517 = vld [vmem:[%s2509 + $0x38] sm:$0xff]
    %v2518 = vld [vmem:[%s2509 + $0x40] sm:$0xff]
    %v2519 = vld [vmem:[%s2509 + $0x48] sm:$0xff]
    %v2520 = vld [vmem:[%s2509 + $0x50] sm:$0xff]
    %v2521 = vld [vmem:[%s2509 + $0x58] sm:$0xff]
    %v2522 = vld [vmem:[%s2509 + $0x60] sm:$0xff]
    %v2523 = vld [vmem:[%s2509 + $0x68] sm:$0xff]
    %v2524 = vld [vmem:[%s2509 + $0x70] sm:$0xff]
    %v2525 = vld [vmem:[%s2509 + $0x78] sm:$0xff]
    %v2528 = vrot.slane %v2508, 7
    %v2529 = vsel %vm1789, %v2528, %v2507
    %2531 = vmatprep.subr.mxu0 0.0
    %2532 = vmatpush1.msra.mxu0 %v2525
    %2533 = vmatprep.subr.mxu0 0.0
    %2534 = vmatpush1.msra.mxu0 %v2524
    %2535 = vmatprep.subr.mxu0 0.0
    %2536 = vmatpush1.msra.mxu0 %v2523
    %2537 = vmatprep.subr.mxu0 0.0
    %2538 = vmatpush1.msra.mxu0 %v2522
    %2539 = vmatprep.subr.mxu0 0.0
    %2540 = vmatpush1.msra.mxu0 %v2521
    %2541 = vmatprep.subr.mxu0 0.0
    %2542 = vmatpush1.msra.mxu0 %v2520
    %2543 = vmatprep.subr.mxu0 0.0
    %2544 = vmatpush1.msra.mxu0 %v2519
    %2545 = vmatprep.subr.mxu0 0.0
    %2546 = vmatpush1.msra.mxu0 %v2518
    %2547 = vmatprep.subr.mxu0 0.0
    %2548 = vmatpush1.msra.mxu0 %v2517
    %2549 = vmatprep.subr.mxu0 0.0
    %2550 = vmatpush1.msra.mxu0 %v2516
    %2551 = vmatprep.subr.mxu0 0.0
    %2552 = vmatpush1.msra.mxu0 %v2515
    %2553 = vmatprep.subr.mxu0 0.0
    %2554 = vmatpush1.msra.mxu0 %v2514
    %2555 = vmatprep.subr.mxu0 0.0
    %2556 = vmatpush1.msra.mxu0 %v2513
    %2557 = vmatprep.subr.mxu0 0.0
    %2558 = vmatpush1.msra.mxu0 %v2512
    %2559 = vmatprep.subr.mxu0 0.0
    %2560 = vmatpush1.msra.mxu0 %v2511
    %2561 = vmatprep.subr.mxu0 0.0
    %2562 = vmatpush1.msra.mxu0 %v2510
    %2563 = vmatprep.subr.mxu0 0.0
    %2564 = vmatpush2.msra.mxu0 0.0
    %2565 = vmatprep.subr.mxu0 0.0
    %2566 = vmatpush2.msra.mxu0 0.0
    %2567 = vmatprep.subr.mxu0 0.0
    %2568 = vmatpush2.msra.mxu0 0.0
    %2569 = vmatprep.subr.mxu0 0.0
    %2570 = vmatpush2.msra.mxu0 0.0
    %2571 = vmatprep.subr.mxu0 0.0
    %2572 = vmatpush2.msra.mxu0 0.0
    %2573 = vmatprep.subr.mxu0 0.0
    %2574 = vmatpush2.msra.mxu0 0.0
    %2575 = vmatprep.subr.mxu0 0.0
    %2576 = vmatpush2.msra.mxu0 0.0
    %2577 = vmatprep.subr.mxu0 0.0
    %2578 = vmatpush2.msra.mxu0 0.0
    %2579 = vmatprep.subr.mxu0 0.0
    %2580 = vmatpush2.msra.mxu0 0.0
    %2581 = vmatprep.subr.mxu0 0.0
    %2582 = vmatpush2.msra.mxu0 0.0
    %2583 = vmatprep.subr.mxu0 0.0
    %2584 = vmatpush2.msra.mxu0 0.0
    %2585 = vmatprep.subr.mxu0 0.0
    %2586 = vmatpush2.msra.mxu0 0.0
    %2587 = vmatprep.subr.mxu0 0.0
    %2588 = vmatpush2.msra.mxu0 0.0
    %2589 = vmatprep.subr.mxu0 0.0
    %2590 = vmatpush2.msra.mxu0 0.0
    %2591 = vmatprep.subr.mxu0 0.0
    %2592 = vmatpush2.msra.mxu0 0.0
    %2593 = vmatprep.subr.mxu0 0.0
    %2594 = vmatpush2.msra.mxu0 0.0
    %2595 = vmatprep.mubr.f32.mxu0 0.0
    %2596 = vmatmul.mubr.f32.gmra.mxu0 %v2529
    %v2597 = vpop.f32.mrf.mxu0
    %v2598 = vadd.f32 0.0, %v2597
    %v2599 = vpop.f32.mrf.mxu0
    %2600 = vdwg.mxu0
    %v2601 = vadd.f32 %v2506, %v2598
    %v2602 = vld [vmem:[#allocation3 + $0x9] sm:$0x1]
    %v2603 = vld [vmem:[#allocation3 + $0x29] sm:$0x1]
    %s2604 = scalar_lea.vmem [#allocation2], 1152
    %v2605 = vld [vmem:[%s2604] sm:$0xff]
    %v2606 = vld [vmem:[%s2604 + $0x8] sm:$0xff]
    %v2607 = vld [vmem:[%s2604 + $0x10] sm:$0xff]
    %v2608 = vld [vmem:[%s2604 + $0x18] sm:$0xff]
    %v2609 = vld [vmem:[%s2604 + $0x20] sm:$0xff]
    %v2610 = vld [vmem:[%s2604 + $0x28] sm:$0xff]
    %v2611 = vld [vmem:[%s2604 + $0x30] sm:$0xff]
    %v2612 = vld [vmem:[%s2604 + $0x38] sm:$0xff]
    %v2613 = vld [vmem:[%s2604 + $0x40] sm:$0xff]
    %v2614 = vld [vmem:[%s2604 + $0x48] sm:$0xff]
    %v2615 = vld [vmem:[%s2604 + $0x50] sm:$0xff]
    %v2616 = vld [vmem:[%s2604 + $0x58] sm:$0xff]
    %v2617 = vld [vmem:[%s2604 + $0x60] sm:$0xff]
    %v2618 = vld [vmem:[%s2604 + $0x68] sm:$0xff]
    %v2619 = vld [vmem:[%s2604 + $0x70] sm:$0xff]
    %v2620 = vld [vmem:[%s2604 + $0x78] sm:$0xff]
    %v2623 = vrot.slane %v2603, 7
    %v2624 = vsel %vm1789, %v2623, %v2602
    %2626 = vmatprep.subr.mxu0 0.0
    %2627 = vmatpush1.msra.mxu0 %v2620
    %2628 = vmatprep.subr.mxu0 0.0
    %2629 = vmatpush1.msra.mxu0 %v2619
    %2630 = vmatprep.subr.mxu0 0.0
    %2631 = vmatpush1.msra.mxu0 %v2618
    %2632 = vmatprep.subr.mxu0 0.0
    %2633 = vmatpush1.msra.mxu0 %v2617
    %2634 = vmatprep.subr.mxu0 0.0
    %2635 = vmatpush1.msra.mxu0 %v2616
    %2636 = vmatprep.subr.mxu0 0.0
    %2637 = vmatpush1.msra.mxu0 %v2615
    %2638 = vmatprep.subr.mxu0 0.0
    %2639 = vmatpush1.msra.mxu0 %v2614
    %2640 = vmatprep.subr.mxu0 0.0
    %2641 = vmatpush1.msra.mxu0 %v2613
    %2642 = vmatprep.subr.mxu0 0.0
    %2643 = vmatpush1.msra.mxu0 %v2612
    %2644 = vmatprep.subr.mxu0 0.0
    %2645 = vmatpush1.msra.mxu0 %v2611
    %2646 = vmatprep.subr.mxu0 0.0
    %2647 = vmatpush1.msra.mxu0 %v2610
    %2648 = vmatprep.subr.mxu0 0.0
    %2649 = vmatpush1.msra.mxu0 %v2609
    %2650 = vmatprep.subr.mxu0 0.0
    %2651 = vmatpush1.msra.mxu0 %v2608
    %2652 = vmatprep.subr.mxu0 0.0
    %2653 = vmatpush1.msra.mxu0 %v2607
    %2654 = vmatprep.subr.mxu0 0.0
    %2655 = vmatpush1.msra.mxu0 %v2606
    %2656 = vmatprep.subr.mxu0 0.0
    %2657 = vmatpush1.msra.mxu0 %v2605
    %2658 = vmatprep.subr.mxu0 0.0
    %2659 = vmatpush2.msra.mxu0 0.0
    %2660 = vmatprep.subr.mxu0 0.0
    %2661 = vmatpush2.msra.mxu0 0.0
    %2662 = vmatprep.subr.mxu0 0.0
    %2663 = vmatpush2.msra.mxu0 0.0
    %2664 = vmatprep.subr.mxu0 0.0
    %2665 = vmatpush2.msra.mxu0 0.0
    %2666 = vmatprep.subr.mxu0 0.0
    %2667 = vmatpush2.msra.mxu0 0.0
    %2668 = vmatprep.subr.mxu0 0.0
    %2669 = vmatpush2.msra.mxu0 0.0
    %2670 = vmatprep.subr.mxu0 0.0
    %2671 = vmatpush2.msra.mxu0 0.0
    %2672 = vmatprep.subr.mxu0 0.0
    %2673 = vmatpush2.msra.mxu0 0.0
    %2674 = vmatprep.subr.mxu0 0.0
    %2675 = vmatpush2.msra.mxu0 0.0
    %2676 = vmatprep.subr.mxu0 0.0
    %2677 = vmatpush2.msra.mxu0 0.0
    %2678 = vmatprep.subr.mxu0 0.0
    %2679 = vmatpush2.msra.mxu0 0.0
    %2680 = vmatprep.subr.mxu0 0.0
    %2681 = vmatpush2.msra.mxu0 0.0
    %2682 = vmatprep.subr.mxu0 0.0
    %2683 = vmatpush2.msra.mxu0 0.0
    %2684 = vmatprep.subr.mxu0 0.0
    %2685 = vmatpush2.msra.mxu0 0.0
    %2686 = vmatprep.subr.mxu0 0.0
    %2687 = vmatpush2.msra.mxu0 0.0
    %2688 = vmatprep.subr.mxu0 0.0
    %2689 = vmatpush2.msra.mxu0 0.0
    %2690 = vmatprep.mubr.f32.mxu0 0.0
    %2691 = vmatmul.mubr.f32.gmra.mxu0 %v2624
    %v2692 = vpop.f32.mrf.mxu0
    %v2693 = vadd.f32 0.0, %v2692
    %v2694 = vpop.f32.mrf.mxu0
    %2695 = vdwg.mxu0
    %v2696 = vadd.f32 %v2601, %v2693
    %v2697 = vld [vmem:[#allocation3 + $0xa] sm:$0x1]
    %v2698 = vld [vmem:[#allocation3 + $0x2a] sm:$0x1]
    %s2699 = scalar_lea.vmem [#allocation2], 1280
    %v2700 = vld [vmem:[%s2699] sm:$0xff]
    %v2701 = vld [vmem:[%s2699 + $0x8] sm:$0xff]
    %v2702 = vld [vmem:[%s2699 + $0x10] sm:$0xff]
    %v2703 = vld [vmem:[%s2699 + $0x18] sm:$0xff]
    %v2704 = vld [vmem:[%s2699 + $0x20] sm:$0xff]
    %v2705 = vld [vmem:[%s2699 + $0x28] sm:$0xff]
    %v2706 = vld [vmem:[%s2699 + $0x30] sm:$0xff]
    %v2707 = vld [vmem:[%s2699 + $0x38] sm:$0xff]
    %v2708 = vld [vmem:[%s2699 + $0x40] sm:$0xff]
    %v2709 = vld [vmem:[%s2699 + $0x48] sm:$0xff]
    %v2710 = vld [vmem:[%s2699 + $0x50] sm:$0xff]
    %v2711 = vld [vmem:[%s2699 + $0x58] sm:$0xff]
    %v2712 = vld [vmem:[%s2699 + $0x60] sm:$0xff]
    %v2713 = vld [vmem:[%s2699 + $0x68] sm:$0xff]
    %v2714 = vld [vmem:[%s2699 + $0x70] sm:$0xff]
    %v2715 = vld [vmem:[%s2699 + $0x78] sm:$0xff]
    %v2718 = vrot.slane %v2698, 7
    %v2719 = vsel %vm1789, %v2718, %v2697
    %2721 = vmatprep.subr.mxu0 0.0
    %2722 = vmatpush1.msra.mxu0 %v2715
    %2723 = vmatprep.subr.mxu0 0.0
    %2724 = vmatpush1.msra.mxu0 %v2714
    %2725 = vmatprep.subr.mxu0 0.0
    %2726 = vmatpush1.msra.mxu0 %v2713
    %2727 = vmatprep.subr.mxu0 0.0
    %2728 = vmatpush1.msra.mxu0 %v2712
    %2729 = vmatprep.subr.mxu0 0.0
    %2730 = vmatpush1.msra.mxu0 %v2711
    %2731 = vmatprep.subr.mxu0 0.0
    %2732 = vmatpush1.msra.mxu0 %v2710
    %2733 = vmatprep.subr.mxu0 0.0
    %2734 = vmatpush1.msra.mxu0 %v2709
    %2735 = vmatprep.subr.mxu0 0.0
    %2736 = vmatpush1.msra.mxu0 %v2708
    %2737 = vmatprep.subr.mxu0 0.0
    %2738 = vmatpush1.msra.mxu0 %v2707
    %2739 = vmatprep.subr.mxu0 0.0
    %2740 = vmatpush1.msra.mxu0 %v2706
    %2741 = vmatprep.subr.mxu0 0.0
    %2742 = vmatpush1.msra.mxu0 %v2705
    %2743 = vmatprep.subr.mxu0 0.0
    %2744 = vmatpush1.msra.mxu0 %v2704
    %2745 = vmatprep.subr.mxu0 0.0
    %2746 = vmatpush1.msra.mxu0 %v2703
    %2747 = vmatprep.subr.mxu0 0.0
    %2748 = vmatpush1.msra.mxu0 %v2702
    %2749 = vmatprep.subr.mxu0 0.0
    %2750 = vmatpush1.msra.mxu0 %v2701
    %2751 = vmatprep.subr.mxu0 0.0
    %2752 = vmatpush1.msra.mxu0 %v2700
    %2753 = vmatprep.subr.mxu0 0.0
    %2754 = vmatpush2.msra.mxu0 0.0
    %2755 = vmatprep.subr.mxu0 0.0
    %2756 = vmatpush2.msra.mxu0 0.0
    %2757 = vmatprep.subr.mxu0 0.0
    %2758 = vmatpush2.msra.mxu0 0.0
    %2759 = vmatprep.subr.mxu0 0.0
    %2760 = vmatpush2.msra.mxu0 0.0
    %2761 = vmatprep.subr.mxu0 0.0
    %2762 = vmatpush2.msra.mxu0 0.0
    %2763 = vmatprep.subr.mxu0 0.0
    %2764 = vmatpush2.msra.mxu0 0.0
    %2765 = vmatprep.subr.mxu0 0.0
    %2766 = vmatpush2.msra.mxu0 0.0
    %2767 = vmatprep.subr.mxu0 0.0
    %2768 = vmatpush2.msra.mxu0 0.0
    %2769 = vmatprep.subr.mxu0 0.0
    %2770 = vmatpush2.msra.mxu0 0.0
    %2771 = vmatprep.subr.mxu0 0.0
    %2772 = vmatpush2.msra.mxu0 0.0
    %2773 = vmatprep.subr.mxu0 0.0
    %2774 = vmatpush2.msra.mxu0 0.0
    %2775 = vmatprep.subr.mxu0 0.0
    %2776 = vmatpush2.msra.mxu0 0.0
    %2777 = vmatprep.subr.mxu0 0.0
    %2778 = vmatpush2.msra.mxu0 0.0
    %2779 = vmatprep.subr.mxu0 0.0
    %2780 = vmatpush2.msra.mxu0 0.0
    %2781 = vmatprep.subr.mxu0 0.0
    %2782 = vmatpush2.msra.mxu0 0.0
    %2783 = vmatprep.subr.mxu0 0.0
    %2784 = vmatpush2.msra.mxu0 0.0
    %2785 = vmatprep.mubr.f32.mxu0 0.0
    %2786 = vmatmul.mubr.f32.gmra.mxu0 %v2719
    %v2787 = vpop.f32.mrf.mxu0
    %v2788 = vadd.f32 0.0, %v2787
    %v2789 = vpop.f32.mrf.mxu0
    %2790 = vdwg.mxu0
    %v2791 = vadd.f32 %v2696, %v2788
    %v2792 = vld [vmem:[#allocation3 + $0xb] sm:$0x1]
    %v2793 = vld [vmem:[#allocation3 + $0x2b] sm:$0x1]
    %s2794 = scalar_lea.vmem [#allocation2], 1408
    %v2795 = vld [vmem:[%s2794] sm:$0xff]
    %v2796 = vld [vmem:[%s2794 + $0x8] sm:$0xff]
    %v2797 = vld [vmem:[%s2794 + $0x10] sm:$0xff]
    %v2798 = vld [vmem:[%s2794 + $0x18] sm:$0xff]
    %v2799 = vld [vmem:[%s2794 + $0x20] sm:$0xff]
    %v2800 = vld [vmem:[%s2794 + $0x28] sm:$0xff]
    %v2801 = vld [vmem:[%s2794 + $0x30] sm:$0xff]
    %v2802 = vld [vmem:[%s2794 + $0x38] sm:$0xff]
    %v2803 = vld [vmem:[%s2794 + $0x40] sm:$0xff]
    %v2804 = vld [vmem:[%s2794 + $0x48] sm:$0xff]
    %v2805 = vld [vmem:[%s2794 + $0x50] sm:$0xff]
    %v2806 = vld [vmem:[%s2794 + $0x58] sm:$0xff]
    %v2807 = vld [vmem:[%s2794 + $0x60] sm:$0xff]
    %v2808 = vld [vmem:[%s2794 + $0x68] sm:$0xff]
    %v2809 = vld [vmem:[%s2794 + $0x70] sm:$0xff]
    %v2810 = vld [vmem:[%s2794 + $0x78] sm:$0xff]
    %v2813 = vrot.slane %v2793, 7
    %v2814 = vsel %vm1789, %v2813, %v2792
    %2816 = vmatprep.subr.mxu0 0.0
    %2817 = vmatpush1.msra.mxu0 %v2810
    %2818 = vmatprep.subr.mxu0 0.0
    %2819 = vmatpush1.msra.mxu0 %v2809
    %2820 = vmatprep.subr.mxu0 0.0
    %2821 = vmatpush1.msra.mxu0 %v2808
    %2822 = vmatprep.subr.mxu0 0.0
    %2823 = vmatpush1.msra.mxu0 %v2807
    %2824 = vmatprep.subr.mxu0 0.0
    %2825 = vmatpush1.msra.mxu0 %v2806
    %2826 = vmatprep.subr.mxu0 0.0
    %2827 = vmatpush1.msra.mxu0 %v2805
    %2828 = vmatprep.subr.mxu0 0.0
    %2829 = vmatpush1.msra.mxu0 %v2804
    %2830 = vmatprep.subr.mxu0 0.0
    %2831 = vmatpush1.msra.mxu0 %v2803
    %2832 = vmatprep.subr.mxu0 0.0
    %2833 = vmatpush1.msra.mxu0 %v2802
    %2834 = vmatprep.subr.mxu0 0.0
    %2835 = vmatpush1.msra.mxu0 %v2801
    %2836 = vmatprep.subr.mxu0 0.0
    %2837 = vmatpush1.msra.mxu0 %v2800
    %2838 = vmatprep.subr.mxu0 0.0
    %2839 = vmatpush1.msra.mxu0 %v2799
    %2840 = vmatprep.subr.mxu0 0.0
    %2841 = vmatpush1.msra.mxu0 %v2798
    %2842 = vmatprep.subr.mxu0 0.0
    %2843 = vmatpush1.msra.mxu0 %v2797
    %2844 = vmatprep.subr.mxu0 0.0
    %2845 = vmatpush1.msra.mxu0 %v2796
    %2846 = vmatprep.subr.mxu0 0.0
    %2847 = vmatpush1.msra.mxu0 %v2795
    %2848 = vmatprep.subr.mxu0 0.0
    %2849 = vmatpush2.msra.mxu0 0.0
    %2850 = vmatprep.subr.mxu0 0.0
    %2851 = vmatpush2.msra.mxu0 0.0
    %2852 = vmatprep.subr.mxu0 0.0
    %2853 = vmatpush2.msra.mxu0 0.0
    %2854 = vmatprep.subr.mxu0 0.0
    %2855 = vmatpush2.msra.mxu0 0.0
    %2856 = vmatprep.subr.mxu0 0.0
    %2857 = vmatpush2.msra.mxu0 0.0
    %2858 = vmatprep.subr.mxu0 0.0
    %2859 = vmatpush2.msra.mxu0 0.0
    %2860 = vmatprep.subr.mxu0 0.0
    %2861 = vmatpush2.msra.mxu0 0.0
    %2862 = vmatprep.subr.mxu0 0.0
    %2863 = vmatpush2.msra.mxu0 0.0
    %2864 = vmatprep.subr.mxu0 0.0
    %2865 = vmatpush2.msra.mxu0 0.0
    %2866 = vmatprep.subr.mxu0 0.0
    %2867 = vmatpush2.msra.mxu0 0.0
    %2868 = vmatprep.subr.mxu0 0.0
    %2869 = vmatpush2.msra.mxu0 0.0
    %2870 = vmatprep.subr.mxu0 0.0
    %2871 = vmatpush2.msra.mxu0 0.0
    %2872 = vmatprep.subr.mxu0 0.0
    %2873 = vmatpush2.msra.mxu0 0.0
    %2874 = vmatprep.subr.mxu0 0.0
    %2875 = vmatpush2.msra.mxu0 0.0
    %2876 = vmatprep.subr.mxu0 0.0
    %2877 = vmatpush2.msra.mxu0 0.0
    %2878 = vmatprep.subr.mxu0 0.0
    %2879 = vmatpush2.msra.mxu0 0.0
    %2880 = vmatprep.mubr.f32.mxu0 0.0
    %2881 = vmatmul.mubr.f32.gmra.mxu0 %v2814
    %v2882 = vpop.f32.mrf.mxu0
    %v2883 = vadd.f32 0.0, %v2882
    %v2884 = vpop.f32.mrf.mxu0
    %2885 = vdwg.mxu0
    %v2886 = vadd.f32 %v2791, %v2883
    %v2887 = vld [vmem:[#allocation3 + $0xc] sm:$0x1]
    %v2888 = vld [vmem:[#allocation3 + $0x2c] sm:$0x1]
    %s2889 = scalar_lea.vmem [#allocation2], 1536
    %v2890 = vld [vmem:[%s2889] sm:$0xff]
    %v2891 = vld [vmem:[%s2889 + $0x8] sm:$0xff]
    %v2892 = vld [vmem:[%s2889 + $0x10] sm:$0xff]
    %v2893 = vld [vmem:[%s2889 + $0x18] sm:$0xff]
    %v2894 = vld [vmem:[%s2889 + $0x20] sm:$0xff]
    %v2895 = vld [vmem:[%s2889 + $0x28] sm:$0xff]
    %v2896 = vld [vmem:[%s2889 + $0x30] sm:$0xff]
    %v2897 = vld [vmem:[%s2889 + $0x38] sm:$0xff]
    %v2898 = vld [vmem:[%s2889 + $0x40] sm:$0xff]
    %v2899 = vld [vmem:[%s2889 + $0x48] sm:$0xff]
    %v2900 = vld [vmem:[%s2889 + $0x50] sm:$0xff]
    %v2901 = vld [vmem:[%s2889 + $0x58] sm:$0xff]
    %v2902 = vld [vmem:[%s2889 + $0x60] sm:$0xff]
    %v2903 = vld [vmem:[%s2889 + $0x68] sm:$0xff]
    %v2904 = vld [vmem:[%s2889 + $0x70] sm:$0xff]
    %v2905 = vld [vmem:[%s2889 + $0x78] sm:$0xff]
    %v2908 = vrot.slane %v2888, 7
    %v2909 = vsel %vm1789, %v2908, %v2887
    %2911 = vmatprep.subr.mxu0 0.0
    %2912 = vmatpush1.msra.mxu0 %v2905
    %2913 = vmatprep.subr.mxu0 0.0
    %2914 = vmatpush1.msra.mxu0 %v2904
    %2915 = vmatprep.subr.mxu0 0.0
    %2916 = vmatpush1.msra.mxu0 %v2903
    %2917 = vmatprep.subr.mxu0 0.0
    %2918 = vmatpush1.msra.mxu0 %v2902
    %2919 = vmatprep.subr.mxu0 0.0
    %2920 = vmatpush1.msra.mxu0 %v2901
    %2921 = vmatprep.subr.mxu0 0.0
    %2922 = vmatpush1.msra.mxu0 %v2900
    %2923 = vmatprep.subr.mxu0 0.0
    %2924 = vmatpush1.msra.mxu0 %v2899
    %2925 = vmatprep.subr.mxu0 0.0
    %2926 = vmatpush1.msra.mxu0 %v2898
    %2927 = vmatprep.subr.mxu0 0.0
    %2928 = vmatpush1.msra.mxu0 %v2897
    %2929 = vmatprep.subr.mxu0 0.0
    %2930 = vmatpush1.msra.mxu0 %v2896
    %2931 = vmatprep.subr.mxu0 0.0
    %2932 = vmatpush1.msra.mxu0 %v2895
    %2933 = vmatprep.subr.mxu0 0.0
    %2934 = vmatpush1.msra.mxu0 %v2894
    %2935 = vmatprep.subr.mxu0 0.0
    %2936 = vmatpush1.msra.mxu0 %v2893
    %2937 = vmatprep.subr.mxu0 0.0
    %2938 = vmatpush1.msra.mxu0 %v2892
    %2939 = vmatprep.subr.mxu0 0.0
    %2940 = vmatpush1.msra.mxu0 %v2891
    %2941 = vmatprep.subr.mxu0 0.0
    %2942 = vmatpush1.msra.mxu0 %v2890
    %2943 = vmatprep.subr.mxu0 0.0
    %2944 = vmatpush2.msra.mxu0 0.0
    %2945 = vmatprep.subr.mxu0 0.0
    %2946 = vmatpush2.msra.mxu0 0.0
    %2947 = vmatprep.subr.mxu0 0.0
    %2948 = vmatpush2.msra.mxu0 0.0
    %2949 = vmatprep.subr.mxu0 0.0
    %2950 = vmatpush2.msra.mxu0 0.0
    %2951 = vmatprep.subr.mxu0 0.0
    %2952 = vmatpush2.msra.mxu0 0.0
    %2953 = vmatprep.subr.mxu0 0.0
    %2954 = vmatpush2.msra.mxu0 0.0
    %2955 = vmatprep.subr.mxu0 0.0
    %2956 = vmatpush2.msra.mxu0 0.0
    %2957 = vmatprep.subr.mxu0 0.0
    %2958 = vmatpush2.msra.mxu0 0.0
    %2959 = vmatprep.subr.mxu0 0.0
    %2960 = vmatpush2.msra.mxu0 0.0
    %2961 = vmatprep.subr.mxu0 0.0
    %2962 = vmatpush2.msra.mxu0 0.0
    %2963 = vmatprep.subr.mxu0 0.0
    %2964 = vmatpush2.msra.mxu0 0.0
    %2965 = vmatprep.subr.mxu0 0.0
    %2966 = vmatpush2.msra.mxu0 0.0
    %2967 = vmatprep.subr.mxu0 0.0
    %2968 = vmatpush2.msra.mxu0 0.0
    %2969 = vmatprep.subr.mxu0 0.0
    %2970 = vmatpush2.msra.mxu0 0.0
    %2971 = vmatprep.subr.mxu0 0.0
    %2972 = vmatpush2.msra.mxu0 0.0
    %2973 = vmatprep.subr.mxu0 0.0
    %2974 = vmatpush2.msra.mxu0 0.0
    %2975 = vmatprep.mubr.f32.mxu0 0.0
    %2976 = vmatmul.mubr.f32.gmra.mxu0 %v2909
    %v2977 = vpop.f32.mrf.mxu0
    %v2978 = vadd.f32 0.0, %v2977
    %v2979 = vpop.f32.mrf.mxu0
    %2980 = vdwg.mxu0
    %v2981 = vadd.f32 %v2886, %v2978
    %v2982 = vld [vmem:[#allocation3 + $0xd] sm:$0x1]
    %v2983 = vld [vmem:[#allocation3 + $0x2d] sm:$0x1]
    %s2984 = scalar_lea.vmem [#allocation2], 1664
    %v2985 = vld [vmem:[%s2984] sm:$0xff]
    %v2986 = vld [vmem:[%s2984 + $0x8] sm:$0xff]
    %v2987 = vld [vmem:[%s2984 + $0x10] sm:$0xff]
    %v2988 = vld [vmem:[%s2984 + $0x18] sm:$0xff]
    %v2989 = vld [vmem:[%s2984 + $0x20] sm:$0xff]
    %v2990 = vld [vmem:[%s2984 + $0x28] sm:$0xff]
    %v2991 = vld [vmem:[%s2984 + $0x30] sm:$0xff]
    %v2992 = vld [vmem:[%s2984 + $0x38] sm:$0xff]
    %v2993 = vld [vmem:[%s2984 + $0x40] sm:$0xff]
    %v2994 = vld [vmem:[%s2984 + $0x48] sm:$0xff]
    %v2995 = vld [vmem:[%s2984 + $0x50] sm:$0xff]
    %v2996 = vld [vmem:[%s2984 + $0x58] sm:$0xff]
    %v2997 = vld [vmem:[%s2984 + $0x60] sm:$0xff]
    %v2998 = vld [vmem:[%s2984 + $0x68] sm:$0xff]
    %v2999 = vld [vmem:[%s2984 + $0x70] sm:$0xff]
    %v3000 = vld [vmem:[%s2984 + $0x78] sm:$0xff]
    %v3003 = vrot.slane %v2983, 7
    %v3004 = vsel %vm1789, %v3003, %v2982
    %3006 = vmatprep.subr.mxu0 0.0
    %3007 = vmatpush1.msra.mxu0 %v3000
    %3008 = vmatprep.subr.mxu0 0.0
    %3009 = vmatpush1.msra.mxu0 %v2999
    %3010 = vmatprep.subr.mxu0 0.0
    %3011 = vmatpush1.msra.mxu0 %v2998
    %3012 = vmatprep.subr.mxu0 0.0
    %3013 = vmatpush1.msra.mxu0 %v2997
    %3014 = vmatprep.subr.mxu0 0.0
    %3015 = vmatpush1.msra.mxu0 %v2996
    %3016 = vmatprep.subr.mxu0 0.0
    %3017 = vmatpush1.msra.mxu0 %v2995
    %3018 = vmatprep.subr.mxu0 0.0
    %3019 = vmatpush1.msra.mxu0 %v2994
    %3020 = vmatprep.subr.mxu0 0.0
    %3021 = vmatpush1.msra.mxu0 %v2993
    %3022 = vmatprep.subr.mxu0 0.0
    %3023 = vmatpush1.msra.mxu0 %v2992
    %3024 = vmatprep.subr.mxu0 0.0
    %3025 = vmatpush1.msra.mxu0 %v2991
    %3026 = vmatprep.subr.mxu0 0.0
    %3027 = vmatpush1.msra.mxu0 %v2990
    %3028 = vmatprep.subr.mxu0 0.0
    %3029 = vmatpush1.msra.mxu0 %v2989
    %3030 = vmatprep.subr.mxu0 0.0
    %3031 = vmatpush1.msra.mxu0 %v2988
    %3032 = vmatprep.subr.mxu0 0.0
    %3033 = vmatpush1.msra.mxu0 %v2987
    %3034 = vmatprep.subr.mxu0 0.0
    %3035 = vmatpush1.msra.mxu0 %v2986
    %3036 = vmatprep.subr.mxu0 0.0
    %3037 = vmatpush1.msra.mxu0 %v2985
    %3038 = vmatprep.subr.mxu0 0.0
    %3039 = vmatpush2.msra.mxu0 0.0
    %3040 = vmatprep.subr.mxu0 0.0
    %3041 = vmatpush2.msra.mxu0 0.0
    %3042 = vmatprep.subr.mxu0 0.0
    %3043 = vmatpush2.msra.mxu0 0.0
    %3044 = vmatprep.subr.mxu0 0.0
    %3045 = vmatpush2.msra.mxu0 0.0
    %3046 = vmatprep.subr.mxu0 0.0
    %3047 = vmatpush2.msra.mxu0 0.0
    %3048 = vmatprep.subr.mxu0 0.0
    %3049 = vmatpush2.msra.mxu0 0.0
    %3050 = vmatprep.subr.mxu0 0.0
    %3051 = vmatpush2.msra.mxu0 0.0
    %3052 = vmatprep.subr.mxu0 0.0
    %3053 = vmatpush2.msra.mxu0 0.0
    %3054 = vmatprep.subr.mxu0 0.0
    %3055 = vmatpush2.msra.mxu0 0.0
    %3056 = vmatprep.subr.mxu0 0.0
    %3057 = vmatpush2.msra.mxu0 0.0
    %3058 = vmatprep.subr.mxu0 0.0
    %3059 = vmatpush2.msra.mxu0 0.0
    %3060 = vmatprep.subr.mxu0 0.0
    %3061 = vmatpush2.msra.mxu0 0.0
    %3062 = vmatprep.subr.mxu0 0.0
    %3063 = vmatpush2.msra.mxu0 0.0
    %3064 = vmatprep.subr.mxu0 0.0
    %3065 = vmatpush2.msra.mxu0 0.0
    %3066 = vmatprep.subr.mxu0 0.0
    %3067 = vmatpush2.msra.mxu0 0.0
    %3068 = vmatprep.subr.mxu0 0.0
    %3069 = vmatpush2.msra.mxu0 0.0
    %3070 = vmatprep.mubr.f32.mxu0 0.0
    %3071 = vmatmul.mubr.f32.gmra.mxu0 %v3004
    %v3072 = vpop.f32.mrf.mxu0
    %v3073 = vadd.f32 0.0, %v3072
    %v3074 = vpop.f32.mrf.mxu0
    %3075 = vdwg.mxu0
    %v3076 = vadd.f32 %v2981, %v3073
    %v3077 = vld [vmem:[#allocation3 + $0xe] sm:$0x1]
    %v3078 = vld [vmem:[#allocation3 + $0x2e] sm:$0x1]
    %s3079 = scalar_lea.vmem [#allocation2], 1792
    %v3080 = vld [vmem:[%s3079] sm:$0xff]
    %v3081 = vld [vmem:[%s3079 + $0x8] sm:$0xff]
    %v3082 = vld [vmem:[%s3079 + $0x10] sm:$0xff]
    %v3083 = vld [vmem:[%s3079 + $0x18] sm:$0xff]
    %v3084 = vld [vmem:[%s3079 + $0x20] sm:$0xff]
    %v3085 = vld [vmem:[%s3079 + $0x28] sm:$0xff]
    %v3086 = vld [vmem:[%s3079 + $0x30] sm:$0xff]
    %v3087 = vld [vmem:[%s3079 + $0x38] sm:$0xff]
    %v3088 = vld [vmem:[%s3079 + $0x40] sm:$0xff]
    %v3089 = vld [vmem:[%s3079 + $0x48] sm:$0xff]
    %v3090 = vld [vmem:[%s3079 + $0x50] sm:$0xff]
    %v3091 = vld [vmem:[%s3079 + $0x58] sm:$0xff]
    %v3092 = vld [vmem:[%s3079 + $0x60] sm:$0xff]
    %v3093 = vld [vmem:[%s3079 + $0x68] sm:$0xff]
    %v3094 = vld [vmem:[%s3079 + $0x70] sm:$0xff]
    %v3095 = vld [vmem:[%s3079 + $0x78] sm:$0xff]
    %v3098 = vrot.slane %v3078, 7
    %v3099 = vsel %vm1789, %v3098, %v3077
    %3101 = vmatprep.subr.mxu0 0.0
    %3102 = vmatpush1.msra.mxu0 %v3095
    %3103 = vmatprep.subr.mxu0 0.0
    %3104 = vmatpush1.msra.mxu0 %v3094
    %3105 = vmatprep.subr.mxu0 0.0
    %3106 = vmatpush1.msra.mxu0 %v3093
    %3107 = vmatprep.subr.mxu0 0.0
    %3108 = vmatpush1.msra.mxu0 %v3092
    %3109 = vmatprep.subr.mxu0 0.0
    %3110 = vmatpush1.msra.mxu0 %v3091
    %3111 = vmatprep.subr.mxu0 0.0
    %3112 = vmatpush1.msra.mxu0 %v3090
    %3113 = vmatprep.subr.mxu0 0.0
    %3114 = vmatpush1.msra.mxu0 %v3089
    %3115 = vmatprep.subr.mxu0 0.0
    %3116 = vmatpush1.msra.mxu0 %v3088
    %3117 = vmatprep.subr.mxu0 0.0
    %3118 = vmatpush1.msra.mxu0 %v3087
    %3119 = vmatprep.subr.mxu0 0.0
    %3120 = vmatpush1.msra.mxu0 %v3086
    %3121 = vmatprep.subr.mxu0 0.0
    %3122 = vmatpush1.msra.mxu0 %v3085
    %3123 = vmatprep.subr.mxu0 0.0
    %3124 = vmatpush1.msra.mxu0 %v3084
    %3125 = vmatprep.subr.mxu0 0.0
    %3126 = vmatpush1.msra.mxu0 %v3083
    %3127 = vmatprep.subr.mxu0 0.0
    %3128 = vmatpush1.msra.mxu0 %v3082
    %3129 = vmatprep.subr.mxu0 0.0
    %3130 = vmatpush1.msra.mxu0 %v3081
    %3131 = vmatprep.subr.mxu0 0.0
    %3132 = vmatpush1.msra.mxu0 %v3080
    %3133 = vmatprep.subr.mxu0 0.0
    %3134 = vmatpush2.msra.mxu0 0.0
    %3135 = vmatprep.subr.mxu0 0.0
    %3136 = vmatpush2.msra.mxu0 0.0
    %3137 = vmatprep.subr.mxu0 0.0
    %3138 = vmatpush2.msra.mxu0 0.0
    %3139 = vmatprep.subr.mxu0 0.0
    %3140 = vmatpush2.msra.mxu0 0.0
    %3141 = vmatprep.subr.mxu0 0.0
    %3142 = vmatpush2.msra.mxu0 0.0
    %3143 = vmatprep.subr.mxu0 0.0
    %3144 = vmatpush2.msra.mxu0 0.0
    %3145 = vmatprep.subr.mxu0 0.0
    %3146 = vmatpush2.msra.mxu0 0.0
    %3147 = vmatprep.subr.mxu0 0.0
    %3148 = vmatpush2.msra.mxu0 0.0
    %3149 = vmatprep.subr.mxu0 0.0
    %3150 = vmatpush2.msra.mxu0 0.0
    %3151 = vmatprep.subr.mxu0 0.0
    %3152 = vmatpush2.msra.mxu0 0.0
    %3153 = vmatprep.subr.mxu0 0.0
    %3154 = vmatpush2.msra.mxu0 0.0
    %3155 = vmatprep.subr.mxu0 0.0
    %3156 = vmatpush2.msra.mxu0 0.0
    %3157 = vmatprep.subr.mxu0 0.0
    %3158 = vmatpush2.msra.mxu0 0.0
    %3159 = vmatprep.subr.mxu0 0.0
    %3160 = vmatpush2.msra.mxu0 0.0
    %3161 = vmatprep.subr.mxu0 0.0
    %3162 = vmatpush2.msra.mxu0 0.0
    %3163 = vmatprep.subr.mxu0 0.0
    %3164 = vmatpush2.msra.mxu0 0.0
    %3165 = vmatprep.mubr.f32.mxu0 0.0
    %3166 = vmatmul.mubr.f32.gmra.mxu0 %v3099
    %v3167 = vpop.f32.mrf.mxu0
    %v3168 = vadd.f32 0.0, %v3167
    %v3169 = vpop.f32.mrf.mxu0
    %3170 = vdwg.mxu0
    %v3171 = vadd.f32 %v3076, %v3168
    %v3172 = vld [vmem:[#allocation3 + $0xf] sm:$0x1]
    %v3173 = vld [vmem:[#allocation3 + $0x2f] sm:$0x1]
    %s3174 = scalar_lea.vmem [#allocation2], 1920
    %v3175 = vld [vmem:[%s3174] sm:$0xff]
    %v3176 = vld [vmem:[%s3174 + $0x8] sm:$0xff]
    %v3177 = vld [vmem:[%s3174 + $0x10] sm:$0xff]
    %v3178 = vld [vmem:[%s3174 + $0x18] sm:$0xff]
    %v3179 = vld [vmem:[%s3174 + $0x20] sm:$0xff]
    %v3180 = vld [vmem:[%s3174 + $0x28] sm:$0xff]
    %v3181 = vld [vmem:[%s3174 + $0x30] sm:$0xff]
    %v3182 = vld [vmem:[%s3174 + $0x38] sm:$0xff]
    %v3183 = vld [vmem:[%s3174 + $0x40] sm:$0xff]
    %v3184 = vld [vmem:[%s3174 + $0x48] sm:$0xff]
    %v3185 = vld [vmem:[%s3174 + $0x50] sm:$0xff]
    %v3186 = vld [vmem:[%s3174 + $0x58] sm:$0xff]
    %v3187 = vld [vmem:[%s3174 + $0x60] sm:$0xff]
    %v3188 = vld [vmem:[%s3174 + $0x68] sm:$0xff]
    %v3189 = vld [vmem:[%s3174 + $0x70] sm:$0xff]
    %v3190 = vld [vmem:[%s3174 + $0x78] sm:$0xff]
    %v3193 = vrot.slane %v3173, 7
    %v3194 = vsel %vm1789, %v3193, %v3172
    %3196 = vmatprep.subr.mxu0 0.0
    %3197 = vmatpush1.msra.mxu0 %v3190
    %3198 = vmatprep.subr.mxu0 0.0
    %3199 = vmatpush1.msra.mxu0 %v3189
    %3200 = vmatprep.subr.mxu0 0.0
    %3201 = vmatpush1.msra.mxu0 %v3188
    %3202 = vmatprep.subr.mxu0 0.0
    %3203 = vmatpush1.msra.mxu0 %v3187
    %3204 = vmatprep.subr.mxu0 0.0
    %3205 = vmatpush1.msra.mxu0 %v3186
    %3206 = vmatprep.subr.mxu0 0.0
    %3207 = vmatpush1.msra.mxu0 %v3185
    %3208 = vmatprep.subr.mxu0 0.0
    %3209 = vmatpush1.msra.mxu0 %v3184
    %3210 = vmatprep.subr.mxu0 0.0
    %3211 = vmatpush1.msra.mxu0 %v3183
    %3212 = vmatprep.subr.mxu0 0.0
    %3213 = vmatpush1.msra.mxu0 %v3182
    %3214 = vmatprep.subr.mxu0 0.0
    %3215 = vmatpush1.msra.mxu0 %v3181
    %3216 = vmatprep.subr.mxu0 0.0
    %3217 = vmatpush1.msra.mxu0 %v3180
    %3218 = vmatprep.subr.mxu0 0.0
    %3219 = vmatpush1.msra.mxu0 %v3179
    %3220 = vmatprep.subr.mxu0 0.0
    %3221 = vmatpush1.msra.mxu0 %v3178
    %3222 = vmatprep.subr.mxu0 0.0
    %3223 = vmatpush1.msra.mxu0 %v3177
    %3224 = vmatprep.subr.mxu0 0.0
    %3225 = vmatpush1.msra.mxu0 %v3176
    %3226 = vmatprep.subr.mxu0 0.0
    %3227 = vmatpush1.msra.mxu0 %v3175
    %3228 = vmatprep.subr.mxu0 0.0
    %3229 = vmatpush2.msra.mxu0 0.0
    %3230 = vmatprep.subr.mxu0 0.0
    %3231 = vmatpush2.msra.mxu0 0.0
    %3232 = vmatprep.subr.mxu0 0.0
    %3233 = vmatpush2.msra.mxu0 0.0
    %3234 = vmatprep.subr.mxu0 0.0
    %3235 = vmatpush2.msra.mxu0 0.0
    %3236 = vmatprep.subr.mxu0 0.0
    %3237 = vmatpush2.msra.mxu0 0.0
    %3238 = vmatprep.subr.mxu0 0.0
    %3239 = vmatpush2.msra.mxu0 0.0
    %3240 = vmatprep.subr.mxu0 0.0
    %3241 = vmatpush2.msra.mxu0 0.0
    %3242 = vmatprep.subr.mxu0 0.0
    %3243 = vmatpush2.msra.mxu0 0.0
    %3244 = vmatprep.subr.mxu0 0.0
    %3245 = vmatpush2.msra.mxu0 0.0
    %3246 = vmatprep.subr.mxu0 0.0
    %3247 = vmatpush2.msra.mxu0 0.0
    %3248 = vmatprep.subr.mxu0 0.0
    %3249 = vmatpush2.msra.mxu0 0.0
    %3250 = vmatprep.subr.mxu0 0.0
    %3251 = vmatpush2.msra.mxu0 0.0
    %3252 = vmatprep.subr.mxu0 0.0
    %3253 = vmatpush2.msra.mxu0 0.0
    %3254 = vmatprep.subr.mxu0 0.0
    %3255 = vmatpush2.msra.mxu0 0.0
    %3256 = vmatprep.subr.mxu0 0.0
    %3257 = vmatpush2.msra.mxu0 0.0
    %3258 = vmatprep.subr.mxu0 0.0
    %3259 = vmatpush2.msra.mxu0 0.0
    %3260 = vmatprep.mubr.f32.mxu0 0.0
    %3261 = vmatmul.mubr.f32.gmra.mxu0 %v3194
    %v3262 = vpop.f32.mrf.mxu0
    %v3263 = vadd.f32 0.0, %v3262
    %v3264 = vpop.f32.mrf.mxu0
    %3265 = vdwg.mxu0
    %v3266 = vadd.f32 %v3171, %v3263
    %v3267 = vld [vmem:[#allocation3 + $0x10] sm:$0x1]
    %v3268 = vld [vmem:[#allocation3 + $0x30] sm:$0x1]
    %s3269 = scalar_lea.vmem [#allocation2], 2048
    %v3270 = vld [vmem:[%s3269] sm:$0xff]
    %v3271 = vld [vmem:[%s3269 + $0x8] sm:$0xff]
    %v3272 = vld [vmem:[%s3269 + $0x10] sm:$0xff]
    %v3273 = vld [vmem:[%s3269 + $0x18] sm:$0xff]
    %v3274 = vld [vmem:[%s3269 + $0x20] sm:$0xff]
    %v3275 = vld [vmem:[%s3269 + $0x28] sm:$0xff]
    %v3276 = vld [vmem:[%s3269 + $0x30] sm:$0xff]
    %v3277 = vld [vmem:[%s3269 + $0x38] sm:$0xff]
    %v3278 = vld [vmem:[%s3269 + $0x40] sm:$0xff]
    %v3279 = vld [vmem:[%s3269 + $0x48] sm:$0xff]
    %v3280 = vld [vmem:[%s3269 + $0x50] sm:$0xff]
    %v3281 = vld [vmem:[%s3269 + $0x58] sm:$0xff]
    %v3282 = vld [vmem:[%s3269 + $0x60] sm:$0xff]
    %v3283 = vld [vmem:[%s3269 + $0x68] sm:$0xff]
    %v3284 = vld [vmem:[%s3269 + $0x70] sm:$0xff]
    %v3285 = vld [vmem:[%s3269 + $0x78] sm:$0xff]
    %v3288 = vrot.slane %v3268, 7
    %v3289 = vsel %vm1789, %v3288, %v3267
    %3291 = vmatprep.subr.mxu0 0.0
    %3292 = vmatpush1.msra.mxu0 %v3285
    %3293 = vmatprep.subr.mxu0 0.0
    %3294 = vmatpush1.msra.mxu0 %v3284
    %3295 = vmatprep.subr.mxu0 0.0
    %3296 = vmatpush1.msra.mxu0 %v3283
    %3297 = vmatprep.subr.mxu0 0.0
    %3298 = vmatpush1.msra.mxu0 %v3282
    %3299 = vmatprep.subr.mxu0 0.0
    %3300 = vmatpush1.msra.mxu0 %v3281
    %3301 = vmatprep.subr.mxu0 0.0
    %3302 = vmatpush1.msra.mxu0 %v3280
    %3303 = vmatprep.subr.mxu0 0.0
    %3304 = vmatpush1.msra.mxu0 %v3279
    %3305 = vmatprep.subr.mxu0 0.0
    %3306 = vmatpush1.msra.mxu0 %v3278
    %3307 = vmatprep.subr.mxu0 0.0
    %3308 = vmatpush1.msra.mxu0 %v3277
    %3309 = vmatprep.subr.mxu0 0.0
    %3310 = vmatpush1.msra.mxu0 %v3276
    %3311 = vmatprep.subr.mxu0 0.0
    %3312 = vmatpush1.msra.mxu0 %v3275
    %3313 = vmatprep.subr.mxu0 0.0
    %3314 = vmatpush1.msra.mxu0 %v3274
    %3315 = vmatprep.subr.mxu0 0.0
    %3316 = vmatpush1.msra.mxu0 %v3273
    %3317 = vmatprep.subr.mxu0 0.0
    %3318 = vmatpush1.msra.mxu0 %v3272
    %3319 = vmatprep.subr.mxu0 0.0
    %3320 = vmatpush1.msra.mxu0 %v3271
    %3321 = vmatprep.subr.mxu0 0.0
    %3322 = vmatpush1.msra.mxu0 %v3270
    %3323 = vmatprep.subr.mxu0 0.0
    %3324 = vmatpush2.msra.mxu0 0.0
    %3325 = vmatprep.subr.mxu0 0.0
    %3326 = vmatpush2.msra.mxu0 0.0
    %3327 = vmatprep.subr.mxu0 0.0
    %3328 = vmatpush2.msra.mxu0 0.0
    %3329 = vmatprep.subr.mxu0 0.0
    %3330 = vmatpush2.msra.mxu0 0.0
    %3331 = vmatprep.subr.mxu0 0.0
    %3332 = vmatpush2.msra.mxu0 0.0
    %3333 = vmatprep.subr.mxu0 0.0
    %3334 = vmatpush2.msra.mxu0 0.0
    %3335 = vmatprep.subr.mxu0 0.0
    %3336 = vmatpush2.msra.mxu0 0.0
    %3337 = vmatprep.subr.mxu0 0.0
    %3338 = vmatpush2.msra.mxu0 0.0
    %3339 = vmatprep.subr.mxu0 0.0
    %3340 = vmatpush2.msra.mxu0 0.0
    %3341 = vmatprep.subr.mxu0 0.0
    %3342 = vmatpush2.msra.mxu0 0.0
    %3343 = vmatprep.subr.mxu0 0.0
    %3344 = vmatpush2.msra.mxu0 0.0
    %3345 = vmatprep.subr.mxu0 0.0
    %3346 = vmatpush2.msra.mxu0 0.0
    %3347 = vmatprep.subr.mxu0 0.0
    %3348 = vmatpush2.msra.mxu0 0.0
    %3349 = vmatprep.subr.mxu0 0.0
    %3350 = vmatpush2.msra.mxu0 0.0
    %3351 = vmatprep.subr.mxu0 0.0
    %3352 = vmatpush2.msra.mxu0 0.0
    %3353 = vmatprep.subr.mxu0 0.0
    %3354 = vmatpush2.msra.mxu0 0.0
    %3355 = vmatprep.mubr.f32.mxu0 0.0
    %3356 = vmatmul.mubr.f32.gmra.mxu0 %v3289
    %v3357 = vpop.f32.mrf.mxu0
    %v3358 = vadd.f32 0.0, %v3357
    %v3359 = vpop.f32.mrf.mxu0
    %3360 = vdwg.mxu0
    %v3361 = vadd.f32 %v3266, %v3358
    %v3362 = vld [vmem:[#allocation3 + $0x11] sm:$0x1]
    %v3363 = vld [vmem:[#allocation3 + $0x31] sm:$0x1]
    %s3364 = scalar_lea.vmem [#allocation2], 2176
    %v3365 = vld [vmem:[%s3364] sm:$0xff]
    %v3366 = vld [vmem:[%s3364 + $0x8] sm:$0xff]
    %v3367 = vld [vmem:[%s3364 + $0x10] sm:$0xff]
    %v3368 = vld [vmem:[%s3364 + $0x18] sm:$0xff]
    %v3369 = vld [vmem:[%s3364 + $0x20] sm:$0xff]
    %v3370 = vld [vmem:[%s3364 + $0x28] sm:$0xff]
    %v3371 = vld [vmem:[%s3364 + $0x30] sm:$0xff]
    %v3372 = vld [vmem:[%s3364 + $0x38] sm:$0xff]
    %v3373 = vld [vmem:[%s3364 + $0x40] sm:$0xff]
    %v3374 = vld [vmem:[%s3364 + $0x48] sm:$0xff]
    %v3375 = vld [vmem:[%s3364 + $0x50] sm:$0xff]
    %v3376 = vld [vmem:[%s3364 + $0x58] sm:$0xff]
    %v3377 = vld [vmem:[%s3364 + $0x60] sm:$0xff]
    %v3378 = vld [vmem:[%s3364 + $0x68] sm:$0xff]
    %v3379 = vld [vmem:[%s3364 + $0x70] sm:$0xff]
    %v3380 = vld [vmem:[%s3364 + $0x78] sm:$0xff]
    %v3383 = vrot.slane %v3363, 7
    %v3384 = vsel %vm1789, %v3383, %v3362
    %3386 = vmatprep.subr.mxu0 0.0
    %3387 = vmatpush1.msra.mxu0 %v3380
    %3388 = vmatprep.subr.mxu0 0.0
    %3389 = vmatpush1.msra.mxu0 %v3379
    %3390 = vmatprep.subr.mxu0 0.0
    %3391 = vmatpush1.msra.mxu0 %v3378
    %3392 = vmatprep.subr.mxu0 0.0
    %3393 = vmatpush1.msra.mxu0 %v3377
    %3394 = vmatprep.subr.mxu0 0.0
    %3395 = vmatpush1.msra.mxu0 %v3376
    %3396 = vmatprep.subr.mxu0 0.0
    %3397 = vmatpush1.msra.mxu0 %v3375
    %3398 = vmatprep.subr.mxu0 0.0
    %3399 = vmatpush1.msra.mxu0 %v3374
    %3400 = vmatprep.subr.mxu0 0.0
    %3401 = vmatpush1.msra.mxu0 %v3373
    %3402 = vmatprep.subr.mxu0 0.0
    %3403 = vmatpush1.msra.mxu0 %v3372
    %3404 = vmatprep.subr.mxu0 0.0
    %3405 = vmatpush1.msra.mxu0 %v3371
    %3406 = vmatprep.subr.mxu0 0.0
    %3407 = vmatpush1.msra.mxu0 %v3370
    %3408 = vmatprep.subr.mxu0 0.0
    %3409 = vmatpush1.msra.mxu0 %v3369
    %3410 = vmatprep.subr.mxu0 0.0
    %3411 = vmatpush1.msra.mxu0 %v3368
    %3412 = vmatprep.subr.mxu0 0.0
    %3413 = vmatpush1.msra.mxu0 %v3367
    %3414 = vmatprep.subr.mxu0 0.0
    %3415 = vmatpush1.msra.mxu0 %v3366
    %3416 = vmatprep.subr.mxu0 0.0
    %3417 = vmatpush1.msra.mxu0 %v3365
    %3418 = vmatprep.subr.mxu0 0.0
    %3419 = vmatpush2.msra.mxu0 0.0
    %3420 = vmatprep.subr.mxu0 0.0
    %3421 = vmatpush2.msra.mxu0 0.0
    %3422 = vmatprep.subr.mxu0 0.0
    %3423 = vmatpush2.msra.mxu0 0.0
    %3424 = vmatprep.subr.mxu0 0.0
    %3425 = vmatpush2.msra.mxu0 0.0
    %3426 = vmatprep.subr.mxu0 0.0
    %3427 = vmatpush2.msra.mxu0 0.0
    %3428 = vmatprep.subr.mxu0 0.0
    %3429 = vmatpush2.msra.mxu0 0.0
    %3430 = vmatprep.subr.mxu0 0.0
    %3431 = vmatpush2.msra.mxu0 0.0
    %3432 = vmatprep.subr.mxu0 0.0
    %3433 = vmatpush2.msra.mxu0 0.0
    %3434 = vmatprep.subr.mxu0 0.0
    %3435 = vmatpush2.msra.mxu0 0.0
    %3436 = vmatprep.subr.mxu0 0.0
    %3437 = vmatpush2.msra.mxu0 0.0
    %3438 = vmatprep.subr.mxu0 0.0
    %3439 = vmatpush2.msra.mxu0 0.0
    %3440 = vmatprep.subr.mxu0 0.0
    %3441 = vmatpush2.msra.mxu0 0.0
    %3442 = vmatprep.subr.mxu0 0.0
    %3443 = vmatpush2.msra.mxu0 0.0
    %3444 = vmatprep.subr.mxu0 0.0
    %3445 = vmatpush2.msra.mxu0 0.0
    %3446 = vmatprep.subr.mxu0 0.0
    %3447 = vmatpush2.msra.mxu0 0.0
    %3448 = vmatprep.subr.mxu0 0.0
    %3449 = vmatpush2.msra.mxu0 0.0
    %3450 = vmatprep.mubr.f32.mxu0 0.0
    %3451 = vmatmul.mubr.f32.gmra.mxu0 %v3384
    %v3452 = vpop.f32.mrf.mxu0
    %v3453 = vadd.f32 0.0, %v3452
    %v3454 = vpop.f32.mrf.mxu0
    %3455 = vdwg.mxu0
    %v3456 = vadd.f32 %v3361, %v3453
    %v3457 = vld [vmem:[#allocation3 + $0x12] sm:$0x1]
    %v3458 = vld [vmem:[#allocation3 + $0x32] sm:$0x1]
    %s3459 = scalar_lea.vmem [#allocation2], 2304
    %v3460 = vld [vmem:[%s3459] sm:$0xff]
    %v3461 = vld [vmem:[%s3459 + $0x8] sm:$0xff]
    %v3462 = vld [vmem:[%s3459 + $0x10] sm:$0xff]
    %v3463 = vld [vmem:[%s3459 + $0x18] sm:$0xff]
    %v3464 = vld [vmem:[%s3459 + $0x20] sm:$0xff]
    %v3465 = vld [vmem:[%s3459 + $0x28] sm:$0xff]
    %v3466 = vld [vmem:[%s3459 + $0x30] sm:$0xff]
    %v3467 = vld [vmem:[%s3459 + $0x38] sm:$0xff]
    %v3468 = vld [vmem:[%s3459 + $0x40] sm:$0xff]
    %v3469 = vld [vmem:[%s3459 + $0x48] sm:$0xff]
    %v3470 = vld [vmem:[%s3459 + $0x50] sm:$0xff]
    %v3471 = vld [vmem:[%s3459 + $0x58] sm:$0xff]
    %v3472 = vld [vmem:[%s3459 + $0x60] sm:$0xff]
    %v3473 = vld [vmem:[%s3459 + $0x68] sm:$0xff]
    %v3474 = vld [vmem:[%s3459 + $0x70] sm:$0xff]
    %v3475 = vld [vmem:[%s3459 + $0x78] sm:$0xff]
    %v3478 = vrot.slane %v3458, 7
    %v3479 = vsel %vm1789, %v3478, %v3457
    %3481 = vmatprep.subr.mxu0 0.0
    %3482 = vmatpush1.msra.mxu0 %v3475
    %3483 = vmatprep.subr.mxu0 0.0
    %3484 = vmatpush1.msra.mxu0 %v3474
    %3485 = vmatprep.subr.mxu0 0.0
    %3486 = vmatpush1.msra.mxu0 %v3473
    %3487 = vmatprep.subr.mxu0 0.0
    %3488 = vmatpush1.msra.mxu0 %v3472
    %3489 = vmatprep.subr.mxu0 0.0
    %3490 = vmatpush1.msra.mxu0 %v3471
    %3491 = vmatprep.subr.mxu0 0.0
    %3492 = vmatpush1.msra.mxu0 %v3470
    %3493 = vmatprep.subr.mxu0 0.0
    %3494 = vmatpush1.msra.mxu0 %v3469
    %3495 = vmatprep.subr.mxu0 0.0
    %3496 = vmatpush1.msra.mxu0 %v3468
    %3497 = vmatprep.subr.mxu0 0.0
    %3498 = vmatpush1.msra.mxu0 %v3467
    %3499 = vmatprep.subr.mxu0 0.0
    %3500 = vmatpush1.msra.mxu0 %v3466
    %3501 = vmatprep.subr.mxu0 0.0
    %3502 = vmatpush1.msra.mxu0 %v3465
    %3503 = vmatprep.subr.mxu0 0.0
    %3504 = vmatpush1.msra.mxu0 %v3464
    %3505 = vmatprep.subr.mxu0 0.0
    %3506 = vmatpush1.msra.mxu0 %v3463
    %3507 = vmatprep.subr.mxu0 0.0
    %3508 = vmatpush1.msra.mxu0 %v3462
    %3509 = vmatprep.subr.mxu0 0.0
    %3510 = vmatpush1.msra.mxu0 %v3461
    %3511 = vmatprep.subr.mxu0 0.0
    %3512 = vmatpush1.msra.mxu0 %v3460
    %3513 = vmatprep.subr.mxu0 0.0
    %3514 = vmatpush2.msra.mxu0 0.0
    %3515 = vmatprep.subr.mxu0 0.0
    %3516 = vmatpush2.msra.mxu0 0.0
    %3517 = vmatprep.subr.mxu0 0.0
    %3518 = vmatpush2.msra.mxu0 0.0
    %3519 = vmatprep.subr.mxu0 0.0
    %3520 = vmatpush2.msra.mxu0 0.0
    %3521 = vmatprep.subr.mxu0 0.0
    %3522 = vmatpush2.msra.mxu0 0.0
    %3523 = vmatprep.subr.mxu0 0.0
    %3524 = vmatpush2.msra.mxu0 0.0
    %3525 = vmatprep.subr.mxu0 0.0
    %3526 = vmatpush2.msra.mxu0 0.0
    %3527 = vmatprep.subr.mxu0 0.0
    %3528 = vmatpush2.msra.mxu0 0.0
    %3529 = vmatprep.subr.mxu0 0.0
    %3530 = vmatpush2.msra.mxu0 0.0
    %3531 = vmatprep.subr.mxu0 0.0
    %3532 = vmatpush2.msra.mxu0 0.0
    %3533 = vmatprep.subr.mxu0 0.0
    %3534 = vmatpush2.msra.mxu0 0.0
    %3535 = vmatprep.subr.mxu0 0.0
    %3536 = vmatpush2.msra.mxu0 0.0
    %3537 = vmatprep.subr.mxu0 0.0
    %3538 = vmatpush2.msra.mxu0 0.0
    %3539 = vmatprep.subr.mxu0 0.0
    %3540 = vmatpush2.msra.mxu0 0.0
    %3541 = vmatprep.subr.mxu0 0.0
    %3542 = vmatpush2.msra.mxu0 0.0
    %3543 = vmatprep.subr.mxu0 0.0
    %3544 = vmatpush2.msra.mxu0 0.0
    %3545 = vmatprep.mubr.f32.mxu0 0.0
    %3546 = vmatmul.mubr.f32.gmra.mxu0 %v3479
    %v3547 = vpop.f32.mrf.mxu0
    %v3548 = vadd.f32 0.0, %v3547
    %v3549 = vpop.f32.mrf.mxu0
    %3550 = vdwg.mxu0
    %v3551 = vadd.f32 %v3456, %v3548
    %v3552 = vld [vmem:[#allocation3 + $0x13] sm:$0x1]
    %v3553 = vld [vmem:[#allocation3 + $0x33] sm:$0x1]
    %s3554 = scalar_lea.vmem [#allocation2], 2432
    %v3555 = vld [vmem:[%s3554] sm:$0xff]
    %v3556 = vld [vmem:[%s3554 + $0x8] sm:$0xff]
    %v3557 = vld [vmem:[%s3554 + $0x10] sm:$0xff]
    %v3558 = vld [vmem:[%s3554 + $0x18] sm:$0xff]
    %v3559 = vld [vmem:[%s3554 + $0x20] sm:$0xff]
    %v3560 = vld [vmem:[%s3554 + $0x28] sm:$0xff]
    %v3561 = vld [vmem:[%s3554 + $0x30] sm:$0xff]
    %v3562 = vld [vmem:[%s3554 + $0x38] sm:$0xff]
    %v3563 = vld [vmem:[%s3554 + $0x40] sm:$0xff]
    %v3564 = vld [vmem:[%s3554 + $0x48] sm:$0xff]
    %v3565 = vld [vmem:[%s3554 + $0x50] sm:$0xff]
    %v3566 = vld [vmem:[%s3554 + $0x58] sm:$0xff]
    %v3567 = vld [vmem:[%s3554 + $0x60] sm:$0xff]
    %v3568 = vld [vmem:[%s3554 + $0x68] sm:$0xff]
    %v3569 = vld [vmem:[%s3554 + $0x70] sm:$0xff]
    %v3570 = vld [vmem:[%s3554 + $0x78] sm:$0xff]
    %v3573 = vrot.slane %v3553, 7
    %v3574 = vsel %vm1789, %v3573, %v3552
    %3576 = vmatprep.subr.mxu0 0.0
    %3577 = vmatpush1.msra.mxu0 %v3570
    %3578 = vmatprep.subr.mxu0 0.0
    %3579 = vmatpush1.msra.mxu0 %v3569
    %3580 = vmatprep.subr.mxu0 0.0
    %3581 = vmatpush1.msra.mxu0 %v3568
    %3582 = vmatprep.subr.mxu0 0.0
    %3583 = vmatpush1.msra.mxu0 %v3567
    %3584 = vmatprep.subr.mxu0 0.0
    %3585 = vmatpush1.msra.mxu0 %v3566
    %3586 = vmatprep.subr.mxu0 0.0
    %3587 = vmatpush1.msra.mxu0 %v3565
    %3588 = vmatprep.subr.mxu0 0.0
    %3589 = vmatpush1.msra.mxu0 %v3564
    %3590 = vmatprep.subr.mxu0 0.0
    %3591 = vmatpush1.msra.mxu0 %v3563
    %3592 = vmatprep.subr.mxu0 0.0
    %3593 = vmatpush1.msra.mxu0 %v3562
    %3594 = vmatprep.subr.mxu0 0.0
    %3595 = vmatpush1.msra.mxu0 %v3561
    %3596 = vmatprep.subr.mxu0 0.0
    %3597 = vmatpush1.msra.mxu0 %v3560
    %3598 = vmatprep.subr.mxu0 0.0
    %3599 = vmatpush1.msra.mxu0 %v3559
    %3600 = vmatprep.subr.mxu0 0.0
    %3601 = vmatpush1.msra.mxu0 %v3558
    %3602 = vmatprep.subr.mxu0 0.0
    %3603 = vmatpush1.msra.mxu0 %v3557
    %3604 = vmatprep.subr.mxu0 0.0
    %3605 = vmatpush1.msra.mxu0 %v3556
    %3606 = vmatprep.subr.mxu0 0.0
    %3607 = vmatpush1.msra.mxu0 %v3555
    %3608 = vmatprep.subr.mxu0 0.0
    %3609 = vmatpush2.msra.mxu0 0.0
    %3610 = vmatprep.subr.mxu0 0.0
    %3611 = vmatpush2.msra.mxu0 0.0
    %3612 = vmatprep.subr.mxu0 0.0
    %3613 = vmatpush2.msra.mxu0 0.0
    %3614 = vmatprep.subr.mxu0 0.0
    %3615 = vmatpush2.msra.mxu0 0.0
    %3616 = vmatprep.subr.mxu0 0.0
    %3617 = vmatpush2.msra.mxu0 0.0
    %3618 = vmatprep.subr.mxu0 0.0
    %3619 = vmatpush2.msra.mxu0 0.0
    %3620 = vmatprep.subr.mxu0 0.0
    %3621 = vmatpush2.msra.mxu0 0.0
    %3622 = vmatprep.subr.mxu0 0.0
    %3623 = vmatpush2.msra.mxu0 0.0
    %3624 = vmatprep.subr.mxu0 0.0
    %3625 = vmatpush2.msra.mxu0 0.0
    %3626 = vmatprep.subr.mxu0 0.0
    %3627 = vmatpush2.msra.mxu0 0.0
    %3628 = vmatprep.subr.mxu0 0.0
    %3629 = vmatpush2.msra.mxu0 0.0
    %3630 = vmatprep.subr.mxu0 0.0
    %3631 = vmatpush2.msra.mxu0 0.0
    %3632 = vmatprep.subr.mxu0 0.0
    %3633 = vmatpush2.msra.mxu0 0.0
    %3634 = vmatprep.subr.mxu0 0.0
    %3635 = vmatpush2.msra.mxu0 0.0
    %3636 = vmatprep.subr.mxu0 0.0
    %3637 = vmatpush2.msra.mxu0 0.0
    %3638 = vmatprep.subr.mxu0 0.0
    %3639 = vmatpush2.msra.mxu0 0.0
    %3640 = vmatprep.mubr.f32.mxu0 0.0
    %3641 = vmatmul.mubr.f32.gmra.mxu0 %v3574
    %v3642 = vpop.f32.mrf.mxu0
    %v3643 = vadd.f32 0.0, %v3642
    %v3644 = vpop.f32.mrf.mxu0
    %3645 = vdwg.mxu0
    %v3646 = vadd.f32 %v3551, %v3643
    %v3647 = vld [vmem:[#allocation3 + $0x14] sm:$0x1]
    %v3648 = vld [vmem:[#allocation3 + $0x34] sm:$0x1]
    %s3649 = scalar_lea.vmem [#allocation2], 2560
    %v3650 = vld [vmem:[%s3649] sm:$0xff]
    %v3651 = vld [vmem:[%s3649 + $0x8] sm:$0xff]
    %v3652 = vld [vmem:[%s3649 + $0x10] sm:$0xff]
    %v3653 = vld [vmem:[%s3649 + $0x18] sm:$0xff]
    %v3654 = vld [vmem:[%s3649 + $0x20] sm:$0xff]
    %v3655 = vld [vmem:[%s3649 + $0x28] sm:$0xff]
    %v3656 = vld [vmem:[%s3649 + $0x30] sm:$0xff]
    %v3657 = vld [vmem:[%s3649 + $0x38] sm:$0xff]
    %v3658 = vld [vmem:[%s3649 + $0x40] sm:$0xff]
    %v3659 = vld [vmem:[%s3649 + $0x48] sm:$0xff]
    %v3660 = vld [vmem:[%s3649 + $0x50] sm:$0xff]
    %v3661 = vld [vmem:[%s3649 + $0x58] sm:$0xff]
    %v3662 = vld [vmem:[%s3649 + $0x60] sm:$0xff]
    %v3663 = vld [vmem:[%s3649 + $0x68] sm:$0xff]
    %v3664 = vld [vmem:[%s3649 + $0x70] sm:$0xff]
    %v3665 = vld [vmem:[%s3649 + $0x78] sm:$0xff]
    %v3668 = vrot.slane %v3648, 7
    %v3669 = vsel %vm1789, %v3668, %v3647
    %3671 = vmatprep.subr.mxu0 0.0
    %3672 = vmatpush1.msra.mxu0 %v3665
    %3673 = vmatprep.subr.mxu0 0.0
    %3674 = vmatpush1.msra.mxu0 %v3664
    %3675 = vmatprep.subr.mxu0 0.0
    %3676 = vmatpush1.msra.mxu0 %v3663
    %3677 = vmatprep.subr.mxu0 0.0
    %3678 = vmatpush1.msra.mxu0 %v3662
    %3679 = vmatprep.subr.mxu0 0.0
    %3680 = vmatpush1.msra.mxu0 %v3661
    %3681 = vmatprep.subr.mxu0 0.0
    %3682 = vmatpush1.msra.mxu0 %v3660
    %3683 = vmatprep.subr.mxu0 0.0
    %3684 = vmatpush1.msra.mxu0 %v3659
    %3685 = vmatprep.subr.mxu0 0.0
    %3686 = vmatpush1.msra.mxu0 %v3658
    %3687 = vmatprep.subr.mxu0 0.0
    %3688 = vmatpush1.msra.mxu0 %v3657
    %3689 = vmatprep.subr.mxu0 0.0
    %3690 = vmatpush1.msra.mxu0 %v3656
    %3691 = vmatprep.subr.mxu0 0.0
    %3692 = vmatpush1.msra.mxu0 %v3655
    %3693 = vmatprep.subr.mxu0 0.0
    %3694 = vmatpush1.msra.mxu0 %v3654
    %3695 = vmatprep.subr.mxu0 0.0
    %3696 = vmatpush1.msra.mxu0 %v3653
    %3697 = vmatprep.subr.mxu0 0.0
    %3698 = vmatpush1.msra.mxu0 %v3652
    %3699 = vmatprep.subr.mxu0 0.0
    %3700 = vmatpush1.msra.mxu0 %v3651
    %3701 = vmatprep.subr.mxu0 0.0
    %3702 = vmatpush1.msra.mxu0 %v3650
    %3703 = vmatprep.subr.mxu0 0.0
    %3704 = vmatpush2.msra.mxu0 0.0
    %3705 = vmatprep.subr.mxu0 0.0
    %3706 = vmatpush2.msra.mxu0 0.0
    %3707 = vmatprep.subr.mxu0 0.0
    %3708 = vmatpush2.msra.mxu0 0.0
    %3709 = vmatprep.subr.mxu0 0.0
    %3710 = vmatpush2.msra.mxu0 0.0
    %3711 = vmatprep.subr.mxu0 0.0
    %3712 = vmatpush2.msra.mxu0 0.0
    %3713 = vmatprep.subr.mxu0 0.0
    %3714 = vmatpush2.msra.mxu0 0.0
    %3715 = vmatprep.subr.mxu0 0.0
    %3716 = vmatpush2.msra.mxu0 0.0
    %3717 = vmatprep.subr.mxu0 0.0
    %3718 = vmatpush2.msra.mxu0 0.0
    %3719 = vmatprep.subr.mxu0 0.0
    %3720 = vmatpush2.msra.mxu0 0.0
    %3721 = vmatprep.subr.mxu0 0.0
    %3722 = vmatpush2.msra.mxu0 0.0
    %3723 = vmatprep.subr.mxu0 0.0
    %3724 = vmatpush2.msra.mxu0 0.0
    %3725 = vmatprep.subr.mxu0 0.0
    %3726 = vmatpush2.msra.mxu0 0.0
    %3727 = vmatprep.subr.mxu0 0.0
    %3728 = vmatpush2.msra.mxu0 0.0
    %3729 = vmatprep.subr.mxu0 0.0
    %3730 = vmatpush2.msra.mxu0 0.0
    %3731 = vmatprep.subr.mxu0 0.0
    %3732 = vmatpush2.msra.mxu0 0.0
    %3733 = vmatprep.subr.mxu0 0.0
    %3734 = vmatpush2.msra.mxu0 0.0
    %3735 = vmatprep.mubr.f32.mxu0 0.0
    %3736 = vmatmul.mubr.f32.gmra.mxu0 %v3669
    %v3737 = vpop.f32.mrf.mxu0
    %v3738 = vadd.f32 0.0, %v3737
    %v3739 = vpop.f32.mrf.mxu0
    %3740 = vdwg.mxu0
    %v3741 = vadd.f32 %v3646, %v3738
    %v3742 = vld [vmem:[#allocation3 + $0x15] sm:$0x1]
    %v3743 = vld [vmem:[#allocation3 + $0x35] sm:$0x1]
    %s3744 = scalar_lea.vmem [#allocation2], 2688
    %v3745 = vld [vmem:[%s3744] sm:$0xff]
    %v3746 = vld [vmem:[%s3744 + $0x8] sm:$0xff]
    %v3747 = vld [vmem:[%s3744 + $0x10] sm:$0xff]
    %v3748 = vld [vmem:[%s3744 + $0x18] sm:$0xff]
    %v3749 = vld [vmem:[%s3744 + $0x20] sm:$0xff]
    %v3750 = vld [vmem:[%s3744 + $0x28] sm:$0xff]
    %v3751 = vld [vmem:[%s3744 + $0x30] sm:$0xff]
    %v3752 = vld [vmem:[%s3744 + $0x38] sm:$0xff]
    %v3753 = vld [vmem:[%s3744 + $0x40] sm:$0xff]
    %v3754 = vld [vmem:[%s3744 + $0x48] sm:$0xff]
    %v3755 = vld [vmem:[%s3744 + $0x50] sm:$0xff]
    %v3756 = vld [vmem:[%s3744 + $0x58] sm:$0xff]
    %v3757 = vld [vmem:[%s3744 + $0x60] sm:$0xff]
    %v3758 = vld [vmem:[%s3744 + $0x68] sm:$0xff]
    %v3759 = vld [vmem:[%s3744 + $0x70] sm:$0xff]
    %v3760 = vld [vmem:[%s3744 + $0x78] sm:$0xff]
    %v3763 = vrot.slane %v3743, 7
    %v3764 = vsel %vm1789, %v3763, %v3742
    %3766 = vmatprep.subr.mxu0 0.0
    %3767 = vmatpush1.msra.mxu0 %v3760
    %3768 = vmatprep.subr.mxu0 0.0
    %3769 = vmatpush1.msra.mxu0 %v3759
    %3770 = vmatprep.subr.mxu0 0.0
    %3771 = vmatpush1.msra.mxu0 %v3758
    %3772 = vmatprep.subr.mxu0 0.0
    %3773 = vmatpush1.msra.mxu0 %v3757
    %3774 = vmatprep.subr.mxu0 0.0
    %3775 = vmatpush1.msra.mxu0 %v3756
    %3776 = vmatprep.subr.mxu0 0.0
    %3777 = vmatpush1.msra.mxu0 %v3755
    %3778 = vmatprep.subr.mxu0 0.0
    %3779 = vmatpush1.msra.mxu0 %v3754
    %3780 = vmatprep.subr.mxu0 0.0
    %3781 = vmatpush1.msra.mxu0 %v3753
    %3782 = vmatprep.subr.mxu0 0.0
    %3783 = vmatpush1.msra.mxu0 %v3752
    %3784 = vmatprep.subr.mxu0 0.0
    %3785 = vmatpush1.msra.mxu0 %v3751
    %3786 = vmatprep.subr.mxu0 0.0
    %3787 = vmatpush1.msra.mxu0 %v3750
    %3788 = vmatprep.subr.mxu0 0.0
    %3789 = vmatpush1.msra.mxu0 %v3749
    %3790 = vmatprep.subr.mxu0 0.0
    %3791 = vmatpush1.msra.mxu0 %v3748
    %3792 = vmatprep.subr.mxu0 0.0
    %3793 = vmatpush1.msra.mxu0 %v3747
    %3794 = vmatprep.subr.mxu0 0.0
    %3795 = vmatpush1.msra.mxu0 %v3746
    %3796 = vmatprep.subr.mxu0 0.0
    %3797 = vmatpush1.msra.mxu0 %v3745
    %3798 = vmatprep.subr.mxu0 0.0
    %3799 = vmatpush2.msra.mxu0 0.0
    %3800 = vmatprep.subr.mxu0 0.0
    %3801 = vmatpush2.msra.mxu0 0.0
    %3802 = vmatprep.subr.mxu0 0.0
    %3803 = vmatpush2.msra.mxu0 0.0
    %3804 = vmatprep.subr.mxu0 0.0
    %3805 = vmatpush2.msra.mxu0 0.0
    %3806 = vmatprep.subr.mxu0 0.0
    %3807 = vmatpush2.msra.mxu0 0.0
    %3808 = vmatprep.subr.mxu0 0.0
    %3809 = vmatpush2.msra.mxu0 0.0
    %3810 = vmatprep.subr.mxu0 0.0
    %3811 = vmatpush2.msra.mxu0 0.0
    %3812 = vmatprep.subr.mxu0 0.0
    %3813 = vmatpush2.msra.mxu0 0.0
    %3814 = vmatprep.subr.mxu0 0.0
    %3815 = vmatpush2.msra.mxu0 0.0
    %3816 = vmatprep.subr.mxu0 0.0
    %3817 = vmatpush2.msra.mxu0 0.0
    %3818 = vmatprep.subr.mxu0 0.0
    %3819 = vmatpush2.msra.mxu0 0.0
    %3820 = vmatprep.subr.mxu0 0.0
    %3821 = vmatpush2.msra.mxu0 0.0
    %3822 = vmatprep.subr.mxu0 0.0
    %3823 = vmatpush2.msra.mxu0 0.0
    %3824 = vmatprep.subr.mxu0 0.0
    %3825 = vmatpush2.msra.mxu0 0.0
    %3826 = vmatprep.subr.mxu0 0.0
    %3827 = vmatpush2.msra.mxu0 0.0
    %3828 = vmatprep.subr.mxu0 0.0
    %3829 = vmatpush2.msra.mxu0 0.0
    %3830 = vmatprep.mubr.f32.mxu0 0.0
    %3831 = vmatmul.mubr.f32.gmra.mxu0 %v3764
    %v3832 = vpop.f32.mrf.mxu0
    %v3833 = vadd.f32 0.0, %v3832
    %v3834 = vpop.f32.mrf.mxu0
    %3835 = vdwg.mxu0
    %v3836 = vadd.f32 %v3741, %v3833
    %v3837 = vld [vmem:[#allocation3 + $0x16] sm:$0x1]
    %v3838 = vld [vmem:[#allocation3 + $0x36] sm:$0x1]
    %s3839 = scalar_lea.vmem [#allocation2], 2816
    %v3840 = vld [vmem:[%s3839] sm:$0xff]
    %v3841 = vld [vmem:[%s3839 + $0x8] sm:$0xff]
    %v3842 = vld [vmem:[%s3839 + $0x10] sm:$0xff]
    %v3843 = vld [vmem:[%s3839 + $0x18] sm:$0xff]
    %v3844 = vld [vmem:[%s3839 + $0x20] sm:$0xff]
    %v3845 = vld [vmem:[%s3839 + $0x28] sm:$0xff]
    %v3846 = vld [vmem:[%s3839 + $0x30] sm:$0xff]
    %v3847 = vld [vmem:[%s3839 + $0x38] sm:$0xff]
    %v3848 = vld [vmem:[%s3839 + $0x40] sm:$0xff]
    %v3849 = vld [vmem:[%s3839 + $0x48] sm:$0xff]
    %v3850 = vld [vmem:[%s3839 + $0x50] sm:$0xff]
    %v3851 = vld [vmem:[%s3839 + $0x58] sm:$0xff]
    %v3852 = vld [vmem:[%s3839 + $0x60] sm:$0xff]
    %v3853 = vld [vmem:[%s3839 + $0x68] sm:$0xff]
    %v3854 = vld [vmem:[%s3839 + $0x70] sm:$0xff]
    %v3855 = vld [vmem:[%s3839 + $0x78] sm:$0xff]
    %v3858 = vrot.slane %v3838, 7
    %v3859 = vsel %vm1789, %v3858, %v3837
    %3861 = vmatprep.subr.mxu0 0.0
    %3862 = vmatpush1.msra.mxu0 %v3855
    %3863 = vmatprep.subr.mxu0 0.0
    %3864 = vmatpush1.msra.mxu0 %v3854
    %3865 = vmatprep.subr.mxu0 0.0
    %3866 = vmatpush1.msra.mxu0 %v3853
    %3867 = vmatprep.subr.mxu0 0.0
    %3868 = vmatpush1.msra.mxu0 %v3852
    %3869 = vmatprep.subr.mxu0 0.0
    %3870 = vmatpush1.msra.mxu0 %v3851
    %3871 = vmatprep.subr.mxu0 0.0
    %3872 = vmatpush1.msra.mxu0 %v3850
    %3873 = vmatprep.subr.mxu0 0.0
    %3874 = vmatpush1.msra.mxu0 %v3849
    %3875 = vmatprep.subr.mxu0 0.0
    %3876 = vmatpush1.msra.mxu0 %v3848
    %3877 = vmatprep.subr.mxu0 0.0
    %3878 = vmatpush1.msra.mxu0 %v3847
    %3879 = vmatprep.subr.mxu0 0.0
    %3880 = vmatpush1.msra.mxu0 %v3846
    %3881 = vmatprep.subr.mxu0 0.0
    %3882 = vmatpush1.msra.mxu0 %v3845
    %3883 = vmatprep.subr.mxu0 0.0
    %3884 = vmatpush1.msra.mxu0 %v3844
    %3885 = vmatprep.subr.mxu0 0.0
    %3886 = vmatpush1.msra.mxu0 %v3843
    %3887 = vmatprep.subr.mxu0 0.0
    %3888 = vmatpush1.msra.mxu0 %v3842
    %3889 = vmatprep.subr.mxu0 0.0
    %3890 = vmatpush1.msra.mxu0 %v3841
    %3891 = vmatprep.subr.mxu0 0.0
    %3892 = vmatpush1.msra.mxu0 %v3840
    %3893 = vmatprep.subr.mxu0 0.0
    %3894 = vmatpush2.msra.mxu0 0.0
    %3895 = vmatprep.subr.mxu0 0.0
    %3896 = vmatpush2.msra.mxu0 0.0
    %3897 = vmatprep.subr.mxu0 0.0
    %3898 = vmatpush2.msra.mxu0 0.0
    %3899 = vmatprep.subr.mxu0 0.0
    %3900 = vmatpush2.msra.mxu0 0.0
    %3901 = vmatprep.subr.mxu0 0.0
    %3902 = vmatpush2.msra.mxu0 0.0
    %3903 = vmatprep.subr.mxu0 0.0
    %3904 = vmatpush2.msra.mxu0 0.0
    %3905 = vmatprep.subr.mxu0 0.0
    %3906 = vmatpush2.msra.mxu0 0.0
    %3907 = vmatprep.subr.mxu0 0.0
    %3908 = vmatpush2.msra.mxu0 0.0
    %3909 = vmatprep.subr.mxu0 0.0
    %3910 = vmatpush2.msra.mxu0 0.0
    %3911 = vmatprep.subr.mxu0 0.0
    %3912 = vmatpush2.msra.mxu0 0.0
    %3913 = vmatprep.subr.mxu0 0.0
    %3914 = vmatpush2.msra.mxu0 0.0
    %3915 = vmatprep.subr.mxu0 0.0
    %3916 = vmatpush2.msra.mxu0 0.0
    %3917 = vmatprep.subr.mxu0 0.0
    %3918 = vmatpush2.msra.mxu0 0.0
    %3919 = vmatprep.subr.mxu0 0.0
    %3920 = vmatpush2.msra.mxu0 0.0
    %3921 = vmatprep.subr.mxu0 0.0
    %3922 = vmatpush2.msra.mxu0 0.0
    %3923 = vmatprep.subr.mxu0 0.0
    %3924 = vmatpush2.msra.mxu0 0.0
    %3925 = vmatprep.mubr.f32.mxu0 0.0
    %3926 = vmatmul.mubr.f32.gmra.mxu0 %v3859
    %v3927 = vpop.f32.mrf.mxu0
    %v3928 = vadd.f32 0.0, %v3927
    %v3929 = vpop.f32.mrf.mxu0
    %3930 = vdwg.mxu0
    %v3931 = vadd.f32 %v3836, %v3928
    %v3932 = vld [vmem:[#allocation3 + $0x17] sm:$0x1]
    %v3933 = vld [vmem:[#allocation3 + $0x37] sm:$0x1]
    %s3934 = scalar_lea.vmem [#allocation2], 2944
    %v3935 = vld [vmem:[%s3934] sm:$0xff]
    %v3936 = vld [vmem:[%s3934 + $0x8] sm:$0xff]
    %v3937 = vld [vmem:[%s3934 + $0x10] sm:$0xff]
    %v3938 = vld [vmem:[%s3934 + $0x18] sm:$0xff]
    %v3939 = vld [vmem:[%s3934 + $0x20] sm:$0xff]
    %v3940 = vld [vmem:[%s3934 + $0x28] sm:$0xff]
    %v3941 = vld [vmem:[%s3934 + $0x30] sm:$0xff]
    %v3942 = vld [vmem:[%s3934 + $0x38] sm:$0xff]
    %v3943 = vld [vmem:[%s3934 + $0x40] sm:$0xff]
    %v3944 = vld [vmem:[%s3934 + $0x48] sm:$0xff]
    %v3945 = vld [vmem:[%s3934 + $0x50] sm:$0xff]
    %v3946 = vld [vmem:[%s3934 + $0x58] sm:$0xff]
    %v3947 = vld [vmem:[%s3934 + $0x60] sm:$0xff]
    %v3948 = vld [vmem:[%s3934 + $0x68] sm:$0xff]
    %v3949 = vld [vmem:[%s3934 + $0x70] sm:$0xff]
    %v3950 = vld [vmem:[%s3934 + $0x78] sm:$0xff]
    %v3953 = vrot.slane %v3933, 7
    %v3954 = vsel %vm1789, %v3953, %v3932
    %3956 = vmatprep.subr.mxu0 0.0
    %3957 = vmatpush1.msra.mxu0 %v3950
    %3958 = vmatprep.subr.mxu0 0.0
    %3959 = vmatpush1.msra.mxu0 %v3949
    %3960 = vmatprep.subr.mxu0 0.0
    %3961 = vmatpush1.msra.mxu0 %v3948
    %3962 = vmatprep.subr.mxu0 0.0
    %3963 = vmatpush1.msra.mxu0 %v3947
    %3964 = vmatprep.subr.mxu0 0.0
    %3965 = vmatpush1.msra.mxu0 %v3946
    %3966 = vmatprep.subr.mxu0 0.0
    %3967 = vmatpush1.msra.mxu0 %v3945
    %3968 = vmatprep.subr.mxu0 0.0
    %3969 = vmatpush1.msra.mxu0 %v3944
    %3970 = vmatprep.subr.mxu0 0.0
    %3971 = vmatpush1.msra.mxu0 %v3943
    %3972 = vmatprep.subr.mxu0 0.0
    %3973 = vmatpush1.msra.mxu0 %v3942
    %3974 = vmatprep.subr.mxu0 0.0
    %3975 = vmatpush1.msra.mxu0 %v3941
    %3976 = vmatprep.subr.mxu0 0.0
    %3977 = vmatpush1.msra.mxu0 %v3940
    %3978 = vmatprep.subr.mxu0 0.0
    %3979 = vmatpush1.msra.mxu0 %v3939
    %3980 = vmatprep.subr.mxu0 0.0
    %3981 = vmatpush1.msra.mxu0 %v3938
    %3982 = vmatprep.subr.mxu0 0.0
    %3983 = vmatpush1.msra.mxu0 %v3937
    %3984 = vmatprep.subr.mxu0 0.0
    %3985 = vmatpush1.msra.mxu0 %v3936
    %3986 = vmatprep.subr.mxu0 0.0
    %3987 = vmatpush1.msra.mxu0 %v3935
    %3988 = vmatprep.subr.mxu0 0.0
    %3989 = vmatpush2.msra.mxu0 0.0
    %3990 = vmatprep.subr.mxu0 0.0
    %3991 = vmatpush2.msra.mxu0 0.0
    %3992 = vmatprep.subr.mxu0 0.0
    %3993 = vmatpush2.msra.mxu0 0.0
    %3994 = vmatprep.subr.mxu0 0.0
    %3995 = vmatpush2.msra.mxu0 0.0
    %3996 = vmatprep.subr.mxu0 0.0
    %3997 = vmatpush2.msra.mxu0 0.0
    %3998 = vmatprep.subr.mxu0 0.0
    %3999 = vmatpush2.msra.mxu0 0.0
    %4000 = vmatprep.subr.mxu0 0.0
    %4001 = vmatpush2.msra.mxu0 0.0
    %4002 = vmatprep.subr.mxu0 0.0
    %4003 = vmatpush2.msra.mxu0 0.0
    %4004 = vmatprep.subr.mxu0 0.0
    %4005 = vmatpush2.msra.mxu0 0.0
    %4006 = vmatprep.subr.mxu0 0.0
    %4007 = vmatpush2.msra.mxu0 0.0
    %4008 = vmatprep.subr.mxu0 0.0
    %4009 = vmatpush2.msra.mxu0 0.0
    %4010 = vmatprep.subr.mxu0 0.0
    %4011 = vmatpush2.msra.mxu0 0.0
    %4012 = vmatprep.subr.mxu0 0.0
    %4013 = vmatpush2.msra.mxu0 0.0
    %4014 = vmatprep.subr.mxu0 0.0
    %4015 = vmatpush2.msra.mxu0 0.0
    %4016 = vmatprep.subr.mxu0 0.0
    %4017 = vmatpush2.msra.mxu0 0.0
    %4018 = vmatprep.subr.mxu0 0.0
    %4019 = vmatpush2.msra.mxu0 0.0
    %4020 = vmatprep.mubr.f32.mxu0 0.0
    %4021 = vmatmul.mubr.f32.gmra.mxu0 %v3954
    %v4022 = vpop.f32.mrf.mxu0
    %v4023 = vadd.f32 0.0, %v4022
    %v4024 = vpop.f32.mrf.mxu0
    %4025 = vdwg.mxu0
    %v4026 = vadd.f32 %v3931, %v4023
    %v4027 = vld [vmem:[#allocation3 + $0x18] sm:$0x1]
    %v4028 = vld [vmem:[#allocation3 + $0x38] sm:$0x1]
    %s4029 = scalar_lea.vmem [#allocation2], 3072
    %v4030 = vld [vmem:[%s4029] sm:$0xff]
    %v4031 = vld [vmem:[%s4029 + $0x8] sm:$0xff]
    %v4032 = vld [vmem:[%s4029 + $0x10] sm:$0xff]
    %v4033 = vld [vmem:[%s4029 + $0x18] sm:$0xff]
    %v4034 = vld [vmem:[%s4029 + $0x20] sm:$0xff]
    %v4035 = vld [vmem:[%s4029 + $0x28] sm:$0xff]
    %v4036 = vld [vmem:[%s4029 + $0x30] sm:$0xff]
    %v4037 = vld [vmem:[%s4029 + $0x38] sm:$0xff]
    %v4038 = vld [vmem:[%s4029 + $0x40] sm:$0xff]
    %v4039 = vld [vmem:[%s4029 + $0x48] sm:$0xff]
    %v4040 = vld [vmem:[%s4029 + $0x50] sm:$0xff]
    %v4041 = vld [vmem:[%s4029 + $0x58] sm:$0xff]
    %v4042 = vld [vmem:[%s4029 + $0x60] sm:$0xff]
    %v4043 = vld [vmem:[%s4029 + $0x68] sm:$0xff]
    %v4044 = vld [vmem:[%s4029 + $0x70] sm:$0xff]
    %v4045 = vld [vmem:[%s4029 + $0x78] sm:$0xff]
    %v4048 = vrot.slane %v4028, 7
    %v4049 = vsel %vm1789, %v4048, %v4027
    %4051 = vmatprep.subr.mxu0 0.0
    %4052 = vmatpush1.msra.mxu0 %v4045
    %4053 = vmatprep.subr.mxu0 0.0
    %4054 = vmatpush1.msra.mxu0 %v4044
    %4055 = vmatprep.subr.mxu0 0.0
    %4056 = vmatpush1.msra.mxu0 %v4043
    %4057 = vmatprep.subr.mxu0 0.0
    %4058 = vmatpush1.msra.mxu0 %v4042
    %4059 = vmatprep.subr.mxu0 0.0
    %4060 = vmatpush1.msra.mxu0 %v4041
    %4061 = vmatprep.subr.mxu0 0.0
    %4062 = vmatpush1.msra.mxu0 %v4040
    %4063 = vmatprep.subr.mxu0 0.0
    %4064 = vmatpush1.msra.mxu0 %v4039
    %4065 = vmatprep.subr.mxu0 0.0
    %4066 = vmatpush1.msra.mxu0 %v4038
    %4067 = vmatprep.subr.mxu0 0.0
    %4068 = vmatpush1.msra.mxu0 %v4037
    %4069 = vmatprep.subr.mxu0 0.0
    %4070 = vmatpush1.msra.mxu0 %v4036
    %4071 = vmatprep.subr.mxu0 0.0
    %4072 = vmatpush1.msra.mxu0 %v4035
    %4073 = vmatprep.subr.mxu0 0.0
    %4074 = vmatpush1.msra.mxu0 %v4034
    %4075 = vmatprep.subr.mxu0 0.0
    %4076 = vmatpush1.msra.mxu0 %v4033
    %4077 = vmatprep.subr.mxu0 0.0
    %4078 = vmatpush1.msra.mxu0 %v4032
    %4079 = vmatprep.subr.mxu0 0.0
    %4080 = vmatpush1.msra.mxu0 %v4031
    %4081 = vmatprep.subr.mxu0 0.0
    %4082 = vmatpush1.msra.mxu0 %v4030
    %4083 = vmatprep.subr.mxu0 0.0
    %4084 = vmatpush2.msra.mxu0 0.0
    %4085 = vmatprep.subr.mxu0 0.0
    %4086 = vmatpush2.msra.mxu0 0.0
    %4087 = vmatprep.subr.mxu0 0.0
    %4088 = vmatpush2.msra.mxu0 0.0
    %4089 = vmatprep.subr.mxu0 0.0
    %4090 = vmatpush2.msra.mxu0 0.0
    %4091 = vmatprep.subr.mxu0 0.0
    %4092 = vmatpush2.msra.mxu0 0.0
    %4093 = vmatprep.subr.mxu0 0.0
    %4094 = vmatpush2.msra.mxu0 0.0
    %4095 = vmatprep.subr.mxu0 0.0
    %4096 = vmatpush2.msra.mxu0 0.0
    %4097 = vmatprep.subr.mxu0 0.0
    %4098 = vmatpush2.msra.mxu0 0.0
    %4099 = vmatprep.subr.mxu0 0.0
    %4100 = vmatpush2.msra.mxu0 0.0
    %4101 = vmatprep.subr.mxu0 0.0
    %4102 = vmatpush2.msra.mxu0 0.0
    %4103 = vmatprep.subr.mxu0 0.0
    %4104 = vmatpush2.msra.mxu0 0.0
    %4105 = vmatprep.subr.mxu0 0.0
    %4106 = vmatpush2.msra.mxu0 0.0
    %4107 = vmatprep.subr.mxu0 0.0
    %4108 = vmatpush2.msra.mxu0 0.0
    %4109 = vmatprep.subr.mxu0 0.0
    %4110 = vmatpush2.msra.mxu0 0.0
    %4111 = vmatprep.subr.mxu0 0.0
    %4112 = vmatpush2.msra.mxu0 0.0
    %4113 = vmatprep.subr.mxu0 0.0
    %4114 = vmatpush2.msra.mxu0 0.0
    %4115 = vmatprep.mubr.f32.mxu0 0.0
    %4116 = vmatmul.mubr.f32.gmra.mxu0 %v4049
    %v4117 = vpop.f32.mrf.mxu0
    %v4118 = vadd.f32 0.0, %v4117
    %v4119 = vpop.f32.mrf.mxu0
    %4120 = vdwg.mxu0
    %v4121 = vadd.f32 %v4026, %v4118
    %v4122 = vld [vmem:[#allocation3 + $0x19] sm:$0x1]
    %v4123 = vld [vmem:[#allocation3 + $0x39] sm:$0x1]
    %s4124 = scalar_lea.vmem [#allocation2], 3200
    %v4125 = vld [vmem:[%s4124] sm:$0xff]
    %v4126 = vld [vmem:[%s4124 + $0x8] sm:$0xff]
    %v4127 = vld [vmem:[%s4124 + $0x10] sm:$0xff]
    %v4128 = vld [vmem:[%s4124 + $0x18] sm:$0xff]
    %v4129 = vld [vmem:[%s4124 + $0x20] sm:$0xff]
    %v4130 = vld [vmem:[%s4124 + $0x28] sm:$0xff]
    %v4131 = vld [vmem:[%s4124 + $0x30] sm:$0xff]
    %v4132 = vld [vmem:[%s4124 + $0x38] sm:$0xff]
    %v4133 = vld [vmem:[%s4124 + $0x40] sm:$0xff]
    %v4134 = vld [vmem:[%s4124 + $0x48] sm:$0xff]
    %v4135 = vld [vmem:[%s4124 + $0x50] sm:$0xff]
    %v4136 = vld [vmem:[%s4124 + $0x58] sm:$0xff]
    %v4137 = vld [vmem:[%s4124 + $0x60] sm:$0xff]
    %v4138 = vld [vmem:[%s4124 + $0x68] sm:$0xff]
    %v4139 = vld [vmem:[%s4124 + $0x70] sm:$0xff]
    %v4140 = vld [vmem:[%s4124 + $0x78] sm:$0xff]
    %v4143 = vrot.slane %v4123, 7
    %v4144 = vsel %vm1789, %v4143, %v4122
    %4146 = vmatprep.subr.mxu0 0.0
    %4147 = vmatpush1.msra.mxu0 %v4140
    %4148 = vmatprep.subr.mxu0 0.0
    %4149 = vmatpush1.msra.mxu0 %v4139
    %4150 = vmatprep.subr.mxu0 0.0
    %4151 = vmatpush1.msra.mxu0 %v4138
    %4152 = vmatprep.subr.mxu0 0.0
    %4153 = vmatpush1.msra.mxu0 %v4137
    %4154 = vmatprep.subr.mxu0 0.0
    %4155 = vmatpush1.msra.mxu0 %v4136
    %4156 = vmatprep.subr.mxu0 0.0
    %4157 = vmatpush1.msra.mxu0 %v4135
    %4158 = vmatprep.subr.mxu0 0.0
    %4159 = vmatpush1.msra.mxu0 %v4134
    %4160 = vmatprep.subr.mxu0 0.0
    %4161 = vmatpush1.msra.mxu0 %v4133
    %4162 = vmatprep.subr.mxu0 0.0
    %4163 = vmatpush1.msra.mxu0 %v4132
    %4164 = vmatprep.subr.mxu0 0.0
    %4165 = vmatpush1.msra.mxu0 %v4131
    %4166 = vmatprep.subr.mxu0 0.0
    %4167 = vmatpush1.msra.mxu0 %v4130
    %4168 = vmatprep.subr.mxu0 0.0
    %4169 = vmatpush1.msra.mxu0 %v4129
    %4170 = vmatprep.subr.mxu0 0.0
    %4171 = vmatpush1.msra.mxu0 %v4128
    %4172 = vmatprep.subr.mxu0 0.0
    %4173 = vmatpush1.msra.mxu0 %v4127
    %4174 = vmatprep.subr.mxu0 0.0
    %4175 = vmatpush1.msra.mxu0 %v4126
    %4176 = vmatprep.subr.mxu0 0.0
    %4177 = vmatpush1.msra.mxu0 %v4125
    %4178 = vmatprep.subr.mxu0 0.0
    %4179 = vmatpush2.msra.mxu0 0.0
    %4180 = vmatprep.subr.mxu0 0.0
    %4181 = vmatpush2.msra.mxu0 0.0
    %4182 = vmatprep.subr.mxu0 0.0
    %4183 = vmatpush2.msra.mxu0 0.0
    %4184 = vmatprep.subr.mxu0 0.0
    %4185 = vmatpush2.msra.mxu0 0.0
    %4186 = vmatprep.subr.mxu0 0.0
    %4187 = vmatpush2.msra.mxu0 0.0
    %4188 = vmatprep.subr.mxu0 0.0
    %4189 = vmatpush2.msra.mxu0 0.0
    %4190 = vmatprep.subr.mxu0 0.0
    %4191 = vmatpush2.msra.mxu0 0.0
    %4192 = vmatprep.subr.mxu0 0.0
    %4193 = vmatpush2.msra.mxu0 0.0
    %4194 = vmatprep.subr.mxu0 0.0
    %4195 = vmatpush2.msra.mxu0 0.0
    %4196 = vmatprep.subr.mxu0 0.0
    %4197 = vmatpush2.msra.mxu0 0.0
    %4198 = vmatprep.subr.mxu0 0.0
    %4199 = vmatpush2.msra.mxu0 0.0
    %4200 = vmatprep.subr.mxu0 0.0
    %4201 = vmatpush2.msra.mxu0 0.0
    %4202 = vmatprep.subr.mxu0 0.0
    %4203 = vmatpush2.msra.mxu0 0.0
    %4204 = vmatprep.subr.mxu0 0.0
    %4205 = vmatpush2.msra.mxu0 0.0
    %4206 = vmatprep.subr.mxu0 0.0
    %4207 = vmatpush2.msra.mxu0 0.0
    %4208 = vmatprep.subr.mxu0 0.0
    %4209 = vmatpush2.msra.mxu0 0.0
    %4210 = vmatprep.mubr.f32.mxu0 0.0
    %4211 = vmatmul.mubr.f32.gmra.mxu0 %v4144
    %v4212 = vpop.f32.mrf.mxu0
    %v4213 = vadd.f32 0.0, %v4212
    %v4214 = vpop.f32.mrf.mxu0
    %4215 = vdwg.mxu0
    %v4216 = vadd.f32 %v4121, %v4213
    %v4217 = vld [vmem:[#allocation3 + $0x1a] sm:$0x1]
    %v4218 = vld [vmem:[#allocation3 + $0x3a] sm:$0x1]
    %s4219 = scalar_lea.vmem [#allocation2], 3328
    %v4220 = vld [vmem:[%s4219] sm:$0xff]
    %v4221 = vld [vmem:[%s4219 + $0x8] sm:$0xff]
    %v4222 = vld [vmem:[%s4219 + $0x10] sm:$0xff]
    %v4223 = vld [vmem:[%s4219 + $0x18] sm:$0xff]
    %v4224 = vld [vmem:[%s4219 + $0x20] sm:$0xff]
    %v4225 = vld [vmem:[%s4219 + $0x28] sm:$0xff]
    %v4226 = vld [vmem:[%s4219 + $0x30] sm:$0xff]
    %v4227 = vld [vmem:[%s4219 + $0x38] sm:$0xff]
    %v4228 = vld [vmem:[%s4219 + $0x40] sm:$0xff]
    %v4229 = vld [vmem:[%s4219 + $0x48] sm:$0xff]
    %v4230 = vld [vmem:[%s4219 + $0x50] sm:$0xff]
    %v4231 = vld [vmem:[%s4219 + $0x58] sm:$0xff]
    %v4232 = vld [vmem:[%s4219 + $0x60] sm:$0xff]
    %v4233 = vld [vmem:[%s4219 + $0x68] sm:$0xff]
    %v4234 = vld [vmem:[%s4219 + $0x70] sm:$0xff]
    %v4235 = vld [vmem:[%s4219 + $0x78] sm:$0xff]
    %v4238 = vrot.slane %v4218, 7
    %v4239 = vsel %vm1789, %v4238, %v4217
    %4241 = vmatprep.subr.mxu0 0.0
    %4242 = vmatpush1.msra.mxu0 %v4235
    %4243 = vmatprep.subr.mxu0 0.0
    %4244 = vmatpush1.msra.mxu0 %v4234
    %4245 = vmatprep.subr.mxu0 0.0
    %4246 = vmatpush1.msra.mxu0 %v4233
    %4247 = vmatprep.subr.mxu0 0.0
    %4248 = vmatpush1.msra.mxu0 %v4232
    %4249 = vmatprep.subr.mxu0 0.0
    %4250 = vmatpush1.msra.mxu0 %v4231
    %4251 = vmatprep.subr.mxu0 0.0
    %4252 = vmatpush1.msra.mxu0 %v4230
    %4253 = vmatprep.subr.mxu0 0.0
    %4254 = vmatpush1.msra.mxu0 %v4229
    %4255 = vmatprep.subr.mxu0 0.0
    %4256 = vmatpush1.msra.mxu0 %v4228
    %4257 = vmatprep.subr.mxu0 0.0
    %4258 = vmatpush1.msra.mxu0 %v4227
    %4259 = vmatprep.subr.mxu0 0.0
    %4260 = vmatpush1.msra.mxu0 %v4226
    %4261 = vmatprep.subr.mxu0 0.0
    %4262 = vmatpush1.msra.mxu0 %v4225
    %4263 = vmatprep.subr.mxu0 0.0
    %4264 = vmatpush1.msra.mxu0 %v4224
    %4265 = vmatprep.subr.mxu0 0.0
    %4266 = vmatpush1.msra.mxu0 %v4223
    %4267 = vmatprep.subr.mxu0 0.0
    %4268 = vmatpush1.msra.mxu0 %v4222
    %4269 = vmatprep.subr.mxu0 0.0
    %4270 = vmatpush1.msra.mxu0 %v4221
    %4271 = vmatprep.subr.mxu0 0.0
    %4272 = vmatpush1.msra.mxu0 %v4220
    %4273 = vmatprep.subr.mxu0 0.0
    %4274 = vmatpush2.msra.mxu0 0.0
    %4275 = vmatprep.subr.mxu0 0.0
    %4276 = vmatpush2.msra.mxu0 0.0
    %4277 = vmatprep.subr.mxu0 0.0
    %4278 = vmatpush2.msra.mxu0 0.0
    %4279 = vmatprep.subr.mxu0 0.0
    %4280 = vmatpush2.msra.mxu0 0.0
    %4281 = vmatprep.subr.mxu0 0.0
    %4282 = vmatpush2.msra.mxu0 0.0
    %4283 = vmatprep.subr.mxu0 0.0
    %4284 = vmatpush2.msra.mxu0 0.0
    %4285 = vmatprep.subr.mxu0 0.0
    %4286 = vmatpush2.msra.mxu0 0.0
    %4287 = vmatprep.subr.mxu0 0.0
    %4288 = vmatpush2.msra.mxu0 0.0
    %4289 = vmatprep.subr.mxu0 0.0
    %4290 = vmatpush2.msra.mxu0 0.0
    %4291 = vmatprep.subr.mxu0 0.0
    %4292 = vmatpush2.msra.mxu0 0.0
    %4293 = vmatprep.subr.mxu0 0.0
    %4294 = vmatpush2.msra.mxu0 0.0
    %4295 = vmatprep.subr.mxu0 0.0
    %4296 = vmatpush2.msra.mxu0 0.0
    %4297 = vmatprep.subr.mxu0 0.0
    %4298 = vmatpush2.msra.mxu0 0.0
    %4299 = vmatprep.subr.mxu0 0.0
    %4300 = vmatpush2.msra.mxu0 0.0
    %4301 = vmatprep.subr.mxu0 0.0
    %4302 = vmatpush2.msra.mxu0 0.0
    %4303 = vmatprep.subr.mxu0 0.0
    %4304 = vmatpush2.msra.mxu0 0.0
    %4305 = vmatprep.mubr.f32.mxu0 0.0
    %4306 = vmatmul.mubr.f32.gmra.mxu0 %v4239
    %v4307 = vpop.f32.mrf.mxu0
    %v4308 = vadd.f32 0.0, %v4307
    %v4309 = vpop.f32.mrf.mxu0
    %4310 = vdwg.mxu0
    %v4311 = vadd.f32 %v4216, %v4308
    %v4312 = vld [vmem:[#allocation3 + $0x1b] sm:$0x1]
    %v4313 = vld [vmem:[#allocation3 + $0x3b] sm:$0x1]
    %s4314 = scalar_lea.vmem [#allocation2], 3456
    %v4315 = vld [vmem:[%s4314] sm:$0xff]
    %v4316 = vld [vmem:[%s4314 + $0x8] sm:$0xff]
    %v4317 = vld [vmem:[%s4314 + $0x10] sm:$0xff]
    %v4318 = vld [vmem:[%s4314 + $0x18] sm:$0xff]
    %v4319 = vld [vmem:[%s4314 + $0x20] sm:$0xff]
    %v4320 = vld [vmem:[%s4314 + $0x28] sm:$0xff]
    %v4321 = vld [vmem:[%s4314 + $0x30] sm:$0xff]
    %v4322 = vld [vmem:[%s4314 + $0x38] sm:$0xff]
    %v4323 = vld [vmem:[%s4314 + $0x40] sm:$0xff]
    %v4324 = vld [vmem:[%s4314 + $0x48] sm:$0xff]
    %v4325 = vld [vmem:[%s4314 + $0x50] sm:$0xff]
    %v4326 = vld [vmem:[%s4314 + $0x58] sm:$0xff]
    %v4327 = vld [vmem:[%s4314 + $0x60] sm:$0xff]
    %v4328 = vld [vmem:[%s4314 + $0x68] sm:$0xff]
    %v4329 = vld [vmem:[%s4314 + $0x70] sm:$0xff]
    %v4330 = vld [vmem:[%s4314 + $0x78] sm:$0xff]
    %v4333 = vrot.slane %v4313, 7
    %v4334 = vsel %vm1789, %v4333, %v4312
    %4336 = vmatprep.subr.mxu0 0.0
    %4337 = vmatpush1.msra.mxu0 %v4330
    %4338 = vmatprep.subr.mxu0 0.0
    %4339 = vmatpush1.msra.mxu0 %v4329
    %4340 = vmatprep.subr.mxu0 0.0
    %4341 = vmatpush1.msra.mxu0 %v4328
    %4342 = vmatprep.subr.mxu0 0.0
    %4343 = vmatpush1.msra.mxu0 %v4327
    %4344 = vmatprep.subr.mxu0 0.0
    %4345 = vmatpush1.msra.mxu0 %v4326
    %4346 = vmatprep.subr.mxu0 0.0
    %4347 = vmatpush1.msra.mxu0 %v4325
    %4348 = vmatprep.subr.mxu0 0.0
    %4349 = vmatpush1.msra.mxu0 %v4324
    %4350 = vmatprep.subr.mxu0 0.0
    %4351 = vmatpush1.msra.mxu0 %v4323
    %4352 = vmatprep.subr.mxu0 0.0
    %4353 = vmatpush1.msra.mxu0 %v4322
    %4354 = vmatprep.subr.mxu0 0.0
    %4355 = vmatpush1.msra.mxu0 %v4321
    %4356 = vmatprep.subr.mxu0 0.0
    %4357 = vmatpush1.msra.mxu0 %v4320
    %4358 = vmatprep.subr.mxu0 0.0
    %4359 = vmatpush1.msra.mxu0 %v4319
    %4360 = vmatprep.subr.mxu0 0.0
    %4361 = vmatpush1.msra.mxu0 %v4318
    %4362 = vmatprep.subr.mxu0 0.0
    %4363 = vmatpush1.msra.mxu0 %v4317
    %4364 = vmatprep.subr.mxu0 0.0
    %4365 = vmatpush1.msra.mxu0 %v4316
    %4366 = vmatprep.subr.mxu0 0.0
    %4367 = vmatpush1.msra.mxu0 %v4315
    %4368 = vmatprep.subr.mxu0 0.0
    %4369 = vmatpush2.msra.mxu0 0.0
    %4370 = vmatprep.subr.mxu0 0.0
    %4371 = vmatpush2.msra.mxu0 0.0
    %4372 = vmatprep.subr.mxu0 0.0
    %4373 = vmatpush2.msra.mxu0 0.0
    %4374 = vmatprep.subr.mxu0 0.0
    %4375 = vmatpush2.msra.mxu0 0.0
    %4376 = vmatprep.subr.mxu0 0.0
    %4377 = vmatpush2.msra.mxu0 0.0
    %4378 = vmatprep.subr.mxu0 0.0
    %4379 = vmatpush2.msra.mxu0 0.0
    %4380 = vmatprep.subr.mxu0 0.0
    %4381 = vmatpush2.msra.mxu0 0.0
    %4382 = vmatprep.subr.mxu0 0.0
    %4383 = vmatpush2.msra.mxu0 0.0
    %4384 = vmatprep.subr.mxu0 0.0
    %4385 = vmatpush2.msra.mxu0 0.0
    %4386 = vmatprep.subr.mxu0 0.0
    %4387 = vmatpush2.msra.mxu0 0.0
    %4388 = vmatprep.subr.mxu0 0.0
    %4389 = vmatpush2.msra.mxu0 0.0
    %4390 = vmatprep.subr.mxu0 0.0
    %4391 = vmatpush2.msra.mxu0 0.0
    %4392 = vmatprep.subr.mxu0 0.0
    %4393 = vmatpush2.msra.mxu0 0.0
    %4394 = vmatprep.subr.mxu0 0.0
    %4395 = vmatpush2.msra.mxu0 0.0
    %4396 = vmatprep.subr.mxu0 0.0
    %4397 = vmatpush2.msra.mxu0 0.0
    %4398 = vmatprep.subr.mxu0 0.0
    %4399 = vmatpush2.msra.mxu0 0.0
    %4400 = vmatprep.mubr.f32.mxu0 0.0
    %4401 = vmatmul.mubr.f32.gmra.mxu0 %v4334
    %v4402 = vpop.f32.mrf.mxu0
    %v4403 = vadd.f32 0.0, %v4402
    %v4404 = vpop.f32.mrf.mxu0
    %4405 = vdwg.mxu0
    %v4406 = vadd.f32 %v4311, %v4403
    %v4407 = vld [vmem:[#allocation3 + $0x1c] sm:$0x1]
    %v4408 = vld [vmem:[#allocation3 + $0x3c] sm:$0x1]
    %s4409 = scalar_lea.vmem [#allocation2], 3584
    %v4410 = vld [vmem:[%s4409] sm:$0xff]
    %v4411 = vld [vmem:[%s4409 + $0x8] sm:$0xff]
    %v4412 = vld [vmem:[%s4409 + $0x10] sm:$0xff]
    %v4413 = vld [vmem:[%s4409 + $0x18] sm:$0xff]
    %v4414 = vld [vmem:[%s4409 + $0x20] sm:$0xff]
    %v4415 = vld [vmem:[%s4409 + $0x28] sm:$0xff]
    %v4416 = vld [vmem:[%s4409 + $0x30] sm:$0xff]
    %v4417 = vld [vmem:[%s4409 + $0x38] sm:$0xff]
    %v4418 = vld [vmem:[%s4409 + $0x40] sm:$0xff]
    %v4419 = vld [vmem:[%s4409 + $0x48] sm:$0xff]
    %v4420 = vld [vmem:[%s4409 + $0x50] sm:$0xff]
    %v4421 = vld [vmem:[%s4409 + $0x58] sm:$0xff]
    %v4422 = vld [vmem:[%s4409 + $0x60] sm:$0xff]
    %v4423 = vld [vmem:[%s4409 + $0x68] sm:$0xff]
    %v4424 = vld [vmem:[%s4409 + $0x70] sm:$0xff]
    %v4425 = vld [vmem:[%s4409 + $0x78] sm:$0xff]
    %v4428 = vrot.slane %v4408, 7
    %v4429 = vsel %vm1789, %v4428, %v4407
    %4431 = vmatprep.subr.mxu0 0.0
    %4432 = vmatpush1.msra.mxu0 %v4425
    %4433 = vmatprep.subr.mxu0 0.0
    %4434 = vmatpush1.msra.mxu0 %v4424
    %4435 = vmatprep.subr.mxu0 0.0
    %4436 = vmatpush1.msra.mxu0 %v4423
    %4437 = vmatprep.subr.mxu0 0.0
    %4438 = vmatpush1.msra.mxu0 %v4422
    %4439 = vmatprep.subr.mxu0 0.0
    %4440 = vmatpush1.msra.mxu0 %v4421
    %4441 = vmatprep.subr.mxu0 0.0
    %4442 = vmatpush1.msra.mxu0 %v4420
    %4443 = vmatprep.subr.mxu0 0.0
    %4444 = vmatpush1.msra.mxu0 %v4419
    %4445 = vmatprep.subr.mxu0 0.0
    %4446 = vmatpush1.msra.mxu0 %v4418
    %4447 = vmatprep.subr.mxu0 0.0
    %4448 = vmatpush1.msra.mxu0 %v4417
    %4449 = vmatprep.subr.mxu0 0.0
    %4450 = vmatpush1.msra.mxu0 %v4416
    %4451 = vmatprep.subr.mxu0 0.0
    %4452 = vmatpush1.msra.mxu0 %v4415
    %4453 = vmatprep.subr.mxu0 0.0
    %4454 = vmatpush1.msra.mxu0 %v4414
    %4455 = vmatprep.subr.mxu0 0.0
    %4456 = vmatpush1.msra.mxu0 %v4413
    %4457 = vmatprep.subr.mxu0 0.0
    %4458 = vmatpush1.msra.mxu0 %v4412
    %4459 = vmatprep.subr.mxu0 0.0
    %4460 = vmatpush1.msra.mxu0 %v4411
    %4461 = vmatprep.subr.mxu0 0.0
    %4462 = vmatpush1.msra.mxu0 %v4410
    %4463 = vmatprep.subr.mxu0 0.0
    %4464 = vmatpush2.msra.mxu0 0.0
    %4465 = vmatprep.subr.mxu0 0.0
    %4466 = vmatpush2.msra.mxu0 0.0
    %4467 = vmatprep.subr.mxu0 0.0
    %4468 = vmatpush2.msra.mxu0 0.0
    %4469 = vmatprep.subr.mxu0 0.0
    %4470 = vmatpush2.msra.mxu0 0.0
    %4471 = vmatprep.subr.mxu0 0.0
    %4472 = vmatpush2.msra.mxu0 0.0
    %4473 = vmatprep.subr.mxu0 0.0
    %4474 = vmatpush2.msra.mxu0 0.0
    %4475 = vmatprep.subr.mxu0 0.0
    %4476 = vmatpush2.msra.mxu0 0.0
    %4477 = vmatprep.subr.mxu0 0.0
    %4478 = vmatpush2.msra.mxu0 0.0
    %4479 = vmatprep.subr.mxu0 0.0
    %4480 = vmatpush2.msra.mxu0 0.0
    %4481 = vmatprep.subr.mxu0 0.0
    %4482 = vmatpush2.msra.mxu0 0.0
    %4483 = vmatprep.subr.mxu0 0.0
    %4484 = vmatpush2.msra.mxu0 0.0
    %4485 = vmatprep.subr.mxu0 0.0
    %4486 = vmatpush2.msra.mxu0 0.0
    %4487 = vmatprep.subr.mxu0 0.0
    %4488 = vmatpush2.msra.mxu0 0.0
    %4489 = vmatprep.subr.mxu0 0.0
    %4490 = vmatpush2.msra.mxu0 0.0
    %4491 = vmatprep.subr.mxu0 0.0
    %4492 = vmatpush2.msra.mxu0 0.0
    %4493 = vmatprep.subr.mxu0 0.0
    %4494 = vmatpush2.msra.mxu0 0.0
    %4495 = vmatprep.mubr.f32.mxu0 0.0
    %4496 = vmatmul.mubr.f32.gmra.mxu0 %v4429
    %v4497 = vpop.f32.mrf.mxu0
    %v4498 = vadd.f32 0.0, %v4497
    %v4499 = vpop.f32.mrf.mxu0
    %4500 = vdwg.mxu0
    %v4501 = vadd.f32 %v4406, %v4498
    %v4502 = vld [vmem:[#allocation3 + $0x1d] sm:$0x1]
    %v4503 = vld [vmem:[#allocation3 + $0x3d] sm:$0x1]
    %s4504 = scalar_lea.vmem [#allocation2], 3712
    %v4505 = vld [vmem:[%s4504] sm:$0xff]
    %v4506 = vld [vmem:[%s4504 + $0x8] sm:$0xff]
    %v4507 = vld [vmem:[%s4504 + $0x10] sm:$0xff]
    %v4508 = vld [vmem:[%s4504 + $0x18] sm:$0xff]
    %v4509 = vld [vmem:[%s4504 + $0x20] sm:$0xff]
    %v4510 = vld [vmem:[%s4504 + $0x28] sm:$0xff]
    %v4511 = vld [vmem:[%s4504 + $0x30] sm:$0xff]
    %v4512 = vld [vmem:[%s4504 + $0x38] sm:$0xff]
    %v4513 = vld [vmem:[%s4504 + $0x40] sm:$0xff]
    %v4514 = vld [vmem:[%s4504 + $0x48] sm:$0xff]
    %v4515 = vld [vmem:[%s4504 + $0x50] sm:$0xff]
    %v4516 = vld [vmem:[%s4504 + $0x58] sm:$0xff]
    %v4517 = vld [vmem:[%s4504 + $0x60] sm:$0xff]
    %v4518 = vld [vmem:[%s4504 + $0x68] sm:$0xff]
    %v4519 = vld [vmem:[%s4504 + $0x70] sm:$0xff]
    %v4520 = vld [vmem:[%s4504 + $0x78] sm:$0xff]
    %v4523 = vrot.slane %v4503, 7
    %v4524 = vsel %vm1789, %v4523, %v4502
    %4526 = vmatprep.subr.mxu0 0.0
    %4527 = vmatpush1.msra.mxu0 %v4520
    %4528 = vmatprep.subr.mxu0 0.0
    %4529 = vmatpush1.msra.mxu0 %v4519
    %4530 = vmatprep.subr.mxu0 0.0
    %4531 = vmatpush1.msra.mxu0 %v4518
    %4532 = vmatprep.subr.mxu0 0.0
    %4533 = vmatpush1.msra.mxu0 %v4517
    %4534 = vmatprep.subr.mxu0 0.0
    %4535 = vmatpush1.msra.mxu0 %v4516
    %4536 = vmatprep.subr.mxu0 0.0
    %4537 = vmatpush1.msra.mxu0 %v4515
    %4538 = vmatprep.subr.mxu0 0.0
    %4539 = vmatpush1.msra.mxu0 %v4514
    %4540 = vmatprep.subr.mxu0 0.0
    %4541 = vmatpush1.msra.mxu0 %v4513
    %4542 = vmatprep.subr.mxu0 0.0
    %4543 = vmatpush1.msra.mxu0 %v4512
    %4544 = vmatprep.subr.mxu0 0.0
    %4545 = vmatpush1.msra.mxu0 %v4511
    %4546 = vmatprep.subr.mxu0 0.0
    %4547 = vmatpush1.msra.mxu0 %v4510
    %4548 = vmatprep.subr.mxu0 0.0
    %4549 = vmatpush1.msra.mxu0 %v4509
    %4550 = vmatprep.subr.mxu0 0.0
    %4551 = vmatpush1.msra.mxu0 %v4508
    %4552 = vmatprep.subr.mxu0 0.0
    %4553 = vmatpush1.msra.mxu0 %v4507
    %4554 = vmatprep.subr.mxu0 0.0
    %4555 = vmatpush1.msra.mxu0 %v4506
    %4556 = vmatprep.subr.mxu0 0.0
    %4557 = vmatpush1.msra.mxu0 %v4505
    %4558 = vmatprep.subr.mxu0 0.0
    %4559 = vmatpush2.msra.mxu0 0.0
    %4560 = vmatprep.subr.mxu0 0.0
    %4561 = vmatpush2.msra.mxu0 0.0
    %4562 = vmatprep.subr.mxu0 0.0
    %4563 = vmatpush2.msra.mxu0 0.0
    %4564 = vmatprep.subr.mxu0 0.0
    %4565 = vmatpush2.msra.mxu0 0.0
    %4566 = vmatprep.subr.mxu0 0.0
    %4567 = vmatpush2.msra.mxu0 0.0
    %4568 = vmatprep.subr.mxu0 0.0
    %4569 = vmatpush2.msra.mxu0 0.0
    %4570 = vmatprep.subr.mxu0 0.0
    %4571 = vmatpush2.msra.mxu0 0.0
    %4572 = vmatprep.subr.mxu0 0.0
    %4573 = vmatpush2.msra.mxu0 0.0
    %4574 = vmatprep.subr.mxu0 0.0
    %4575 = vmatpush2.msra.mxu0 0.0
    %4576 = vmatprep.subr.mxu0 0.0
    %4577 = vmatpush2.msra.mxu0 0.0
    %4578 = vmatprep.subr.mxu0 0.0
    %4579 = vmatpush2.msra.mxu0 0.0
    %4580 = vmatprep.subr.mxu0 0.0
    %4581 = vmatpush2.msra.mxu0 0.0
    %4582 = vmatprep.subr.mxu0 0.0
    %4583 = vmatpush2.msra.mxu0 0.0
    %4584 = vmatprep.subr.mxu0 0.0
    %4585 = vmatpush2.msra.mxu0 0.0
    %4586 = vmatprep.subr.mxu0 0.0
    %4587 = vmatpush2.msra.mxu0 0.0
    %4588 = vmatprep.subr.mxu0 0.0
    %4589 = vmatpush2.msra.mxu0 0.0
    %4590 = vmatprep.mubr.f32.mxu0 0.0
    %4591 = vmatmul.mubr.f32.gmra.mxu0 %v4524
    %v4592 = vpop.f32.mrf.mxu0
    %v4593 = vadd.f32 0.0, %v4592
    %v4594 = vpop.f32.mrf.mxu0
    %4595 = vdwg.mxu0
    %v4596 = vadd.f32 %v4501, %v4593
    %v4597 = vld [vmem:[#allocation3 + $0x1e] sm:$0x1]
    %v4598 = vld [vmem:[#allocation3 + $0x3e] sm:$0x1]
    %s4599 = scalar_lea.vmem [#allocation2], 3840
    %v4600 = vld [vmem:[%s4599] sm:$0xff]
    %v4601 = vld [vmem:[%s4599 + $0x8] sm:$0xff]
    %v4602 = vld [vmem:[%s4599 + $0x10] sm:$0xff]
    %v4603 = vld [vmem:[%s4599 + $0x18] sm:$0xff]
    %v4604 = vld [vmem:[%s4599 + $0x20] sm:$0xff]
    %v4605 = vld [vmem:[%s4599 + $0x28] sm:$0xff]
    %v4606 = vld [vmem:[%s4599 + $0x30] sm:$0xff]
    %v4607 = vld [vmem:[%s4599 + $0x38] sm:$0xff]
    %v4608 = vld [vmem:[%s4599 + $0x40] sm:$0xff]
    %v4609 = vld [vmem:[%s4599 + $0x48] sm:$0xff]
    %v4610 = vld [vmem:[%s4599 + $0x50] sm:$0xff]
    %v4611 = vld [vmem:[%s4599 + $0x58] sm:$0xff]
    %v4612 = vld [vmem:[%s4599 + $0x60] sm:$0xff]
    %v4613 = vld [vmem:[%s4599 + $0x68] sm:$0xff]
    %v4614 = vld [vmem:[%s4599 + $0x70] sm:$0xff]
    %v4615 = vld [vmem:[%s4599 + $0x78] sm:$0xff]
    %v4618 = vrot.slane %v4598, 7
    %v4619 = vsel %vm1789, %v4618, %v4597
    %4621 = vmatprep.subr.mxu0 0.0
    %4622 = vmatpush1.msra.mxu0 %v4615
    %4623 = vmatprep.subr.mxu0 0.0
    %4624 = vmatpush1.msra.mxu0 %v4614
    %4625 = vmatprep.subr.mxu0 0.0
    %4626 = vmatpush1.msra.mxu0 %v4613
    %4627 = vmatprep.subr.mxu0 0.0
    %4628 = vmatpush1.msra.mxu0 %v4612
    %4629 = vmatprep.subr.mxu0 0.0
    %4630 = vmatpush1.msra.mxu0 %v4611
    %4631 = vmatprep.subr.mxu0 0.0
    %4632 = vmatpush1.msra.mxu0 %v4610
    %4633 = vmatprep.subr.mxu0 0.0
    %4634 = vmatpush1.msra.mxu0 %v4609
    %4635 = vmatprep.subr.mxu0 0.0
    %4636 = vmatpush1.msra.mxu0 %v4608
    %4637 = vmatprep.subr.mxu0 0.0
    %4638 = vmatpush1.msra.mxu0 %v4607
    %4639 = vmatprep.subr.mxu0 0.0
    %4640 = vmatpush1.msra.mxu0 %v4606
    %4641 = vmatprep.subr.mxu0 0.0
    %4642 = vmatpush1.msra.mxu0 %v4605
    %4643 = vmatprep.subr.mxu0 0.0
    %4644 = vmatpush1.msra.mxu0 %v4604
    %4645 = vmatprep.subr.mxu0 0.0
    %4646 = vmatpush1.msra.mxu0 %v4603
    %4647 = vmatprep.subr.mxu0 0.0
    %4648 = vmatpush1.msra.mxu0 %v4602
    %4649 = vmatprep.subr.mxu0 0.0
    %4650 = vmatpush1.msra.mxu0 %v4601
    %4651 = vmatprep.subr.mxu0 0.0
    %4652 = vmatpush1.msra.mxu0 %v4600
    %4653 = vmatprep.subr.mxu0 0.0
    %4654 = vmatpush2.msra.mxu0 0.0
    %4655 = vmatprep.subr.mxu0 0.0
    %4656 = vmatpush2.msra.mxu0 0.0
    %4657 = vmatprep.subr.mxu0 0.0
    %4658 = vmatpush2.msra.mxu0 0.0
    %4659 = vmatprep.subr.mxu0 0.0
    %4660 = vmatpush2.msra.mxu0 0.0
    %4661 = vmatprep.subr.mxu0 0.0
    %4662 = vmatpush2.msra.mxu0 0.0
    %4663 = vmatprep.subr.mxu0 0.0
    %4664 = vmatpush2.msra.mxu0 0.0
    %4665 = vmatprep.subr.mxu0 0.0
    %4666 = vmatpush2.msra.mxu0 0.0
    %4667 = vmatprep.subr.mxu0 0.0
    %4668 = vmatpush2.msra.mxu0 0.0
    %4669 = vmatprep.subr.mxu0 0.0
    %4670 = vmatpush2.msra.mxu0 0.0
    %4671 = vmatprep.subr.mxu0 0.0
    %4672 = vmatpush2.msra.mxu0 0.0
    %4673 = vmatprep.subr.mxu0 0.0
    %4674 = vmatpush2.msra.mxu0 0.0
    %4675 = vmatprep.subr.mxu0 0.0
    %4676 = vmatpush2.msra.mxu0 0.0
    %4677 = vmatprep.subr.mxu0 0.0
    %4678 = vmatpush2.msra.mxu0 0.0
    %4679 = vmatprep.subr.mxu0 0.0
    %4680 = vmatpush2.msra.mxu0 0.0
    %4681 = vmatprep.subr.mxu0 0.0
    %4682 = vmatpush2.msra.mxu0 0.0
    %4683 = vmatprep.subr.mxu0 0.0
    %4684 = vmatpush2.msra.mxu0 0.0
    %4685 = vmatprep.mubr.f32.mxu0 0.0
    %4686 = vmatmul.mubr.f32.gmra.mxu0 %v4619
    %v4687 = vpop.f32.mrf.mxu0
    %v4688 = vadd.f32 0.0, %v4687
    %v4689 = vpop.f32.mrf.mxu0
    %4690 = vdwg.mxu0
    %v4691 = vadd.f32 %v4596, %v4688
    %v4692 = vld [vmem:[#allocation3 + $0x1f] sm:$0x1]
    %v4693 = vld [vmem:[#allocation3 + $0x3f] sm:$0x1]
    %s4694 = scalar_lea.vmem [#allocation2], 3968
    %v4695 = vld [vmem:[%s4694] sm:$0xff]
    %v4696 = vld [vmem:[%s4694 + $0x8] sm:$0xff]
    %v4697 = vld [vmem:[%s4694 + $0x10] sm:$0xff]
    %v4698 = vld [vmem:[%s4694 + $0x18] sm:$0xff]
    %v4699 = vld [vmem:[%s4694 + $0x20] sm:$0xff]
    %v4700 = vld [vmem:[%s4694 + $0x28] sm:$0xff]
    %v4701 = vld [vmem:[%s4694 + $0x30] sm:$0xff]
    %v4702 = vld [vmem:[%s4694 + $0x38] sm:$0xff]
    %v4703 = vld [vmem:[%s4694 + $0x40] sm:$0xff]
    %v4704 = vld [vmem:[%s4694 + $0x48] sm:$0xff]
    %v4705 = vld [vmem:[%s4694 + $0x50] sm:$0xff]
    %v4706 = vld [vmem:[%s4694 + $0x58] sm:$0xff]
    %v4707 = vld [vmem:[%s4694 + $0x60] sm:$0xff]
    %v4708 = vld [vmem:[%s4694 + $0x68] sm:$0xff]
    %v4709 = vld [vmem:[%s4694 + $0x70] sm:$0xff]
    %v4710 = vld [vmem:[%s4694 + $0x78] sm:$0xff]
    %v4713 = vrot.slane %v4693, 7
    %v4714 = vsel %vm1789, %v4713, %v4692
    %4716 = vmatprep.subr.mxu0 0.0
    %4717 = vmatpush1.msra.mxu0 %v4710
    %4718 = vmatprep.subr.mxu0 0.0
    %4719 = vmatpush1.msra.mxu0 %v4709
    %4720 = vmatprep.subr.mxu0 0.0
    %4721 = vmatpush1.msra.mxu0 %v4708
    %4722 = vmatprep.subr.mxu0 0.0
    %4723 = vmatpush1.msra.mxu0 %v4707
    %4724 = vmatprep.subr.mxu0 0.0
    %4725 = vmatpush1.msra.mxu0 %v4706
    %4726 = vmatprep.subr.mxu0 0.0
    %4727 = vmatpush1.msra.mxu0 %v4705
    %4728 = vmatprep.subr.mxu0 0.0
    %4729 = vmatpush1.msra.mxu0 %v4704
    %4730 = vmatprep.subr.mxu0 0.0
    %4731 = vmatpush1.msra.mxu0 %v4703
    %4732 = vmatprep.subr.mxu0 0.0
    %4733 = vmatpush1.msra.mxu0 %v4702
    %4734 = vmatprep.subr.mxu0 0.0
    %4735 = vmatpush1.msra.mxu0 %v4701
    %4736 = vmatprep.subr.mxu0 0.0
    %4737 = vmatpush1.msra.mxu0 %v4700
    %4738 = vmatprep.subr.mxu0 0.0
    %4739 = vmatpush1.msra.mxu0 %v4699
    %4740 = vmatprep.subr.mxu0 0.0
    %4741 = vmatpush1.msra.mxu0 %v4698
    %4742 = vmatprep.subr.mxu0 0.0
    %4743 = vmatpush1.msra.mxu0 %v4697
    %4744 = vmatprep.subr.mxu0 0.0
    %4745 = vmatpush1.msra.mxu0 %v4696
    %4746 = vmatprep.subr.mxu0 0.0
    %4747 = vmatpush1.msra.mxu0 %v4695
    %4748 = vmatprep.subr.mxu0 0.0
    %4749 = vmatpush2.msra.mxu0 0.0
    %4750 = vmatprep.subr.mxu0 0.0
    %4751 = vmatpush2.msra.mxu0 0.0
    %4752 = vmatprep.subr.mxu0 0.0
    %4753 = vmatpush2.msra.mxu0 0.0
    %4754 = vmatprep.subr.mxu0 0.0
    %4755 = vmatpush2.msra.mxu0 0.0
    %4756 = vmatprep.subr.mxu0 0.0
    %4757 = vmatpush2.msra.mxu0 0.0
    %4758 = vmatprep.subr.mxu0 0.0
    %4759 = vmatpush2.msra.mxu0 0.0
    %4760 = vmatprep.subr.mxu0 0.0
    %4761 = vmatpush2.msra.mxu0 0.0
    %4762 = vmatprep.subr.mxu0 0.0
    %4763 = vmatpush2.msra.mxu0 0.0
    %4764 = vmatprep.subr.mxu0 0.0
    %4765 = vmatpush2.msra.mxu0 0.0
    %4766 = vmatprep.subr.mxu0 0.0
    %4767 = vmatpush2.msra.mxu0 0.0
    %4768 = vmatprep.subr.mxu0 0.0
    %4769 = vmatpush2.msra.mxu0 0.0
    %4770 = vmatprep.subr.mxu0 0.0
    %4771 = vmatpush2.msra.mxu0 0.0
    %4772 = vmatprep.subr.mxu0 0.0
    %4773 = vmatpush2.msra.mxu0 0.0
    %4774 = vmatprep.subr.mxu0 0.0
    %4775 = vmatpush2.msra.mxu0 0.0
    %4776 = vmatprep.subr.mxu0 0.0
    %4777 = vmatpush2.msra.mxu0 0.0
    %4778 = vmatprep.subr.mxu0 0.0
    %4779 = vmatpush2.msra.mxu0 0.0
    %4780 = vmatprep.mubr.f32.mxu0 0.0
    %4781 = vmatmul.mubr.f32.gmra.mxu0 %v4714
    %v4782 = vpop.f32.mrf.mxu0
    %v4783 = vadd.f32 0.0, %v4782
    %v4784 = vpop.f32.mrf.mxu0
    %4785 = vdwg.mxu0
    %v4786 = vadd.f32 %v4691, %v4783
    %v4787 = vld [vmem:[#allocation13] sm:$0x1]
    %v4789 = vlaneseq
    %v4790 = vshrl.u32 %v4789, 7
    %v4791 = vsub.s32 0, %v4790
    %v4792 = vrot.slane %v4787, %v4791
    %v4794 = vadd.f32 %v4786, %v4792
    %vm4795 = vcmp.gt.f32.partialorder %v4794, 0.0
    %v4796 = vmul.f32 %v4794, 0.01
    %v4797 = vsel %vm4795, %v4794, %v4796
    %v4798 = vld [vmem:[#allocation14] sm:$0xff]
    %v4799 = vld [vmem:[#allocation14 + $0x8] sm:$0xff]
    %v4800 = vld [vmem:[#allocation14 + $0x10] sm:$0xff]
    %v4801 = vld [vmem:[#allocation14 + $0x18] sm:$0xff]
    %v4802 = vld [vmem:[#allocation14 + $0x20] sm:$0xff]
    %v4803 = vld [vmem:[#allocation14 + $0x28] sm:$0xff]
    %v4804 = vld [vmem:[#allocation14 + $0x30] sm:$0xff]
    %v4805 = vld [vmem:[#allocation14 + $0x38] sm:$0xff]
    %v4806 = vld [vmem:[#allocation14 + $0x40] sm:$0xff]
    %v4807 = vld [vmem:[#allocation14 + $0x48] sm:$0xff]
    %v4808 = vld [vmem:[#allocation14 + $0x50] sm:$0xff]
    %v4809 = vld [vmem:[#allocation14 + $0x58] sm:$0xff]
    %v4810 = vld [vmem:[#allocation14 + $0x60] sm:$0xff]
    %v4811 = vld [vmem:[#allocation14 + $0x68] sm:$0xff]
    %v4812 = vld [vmem:[#allocation14 + $0x70] sm:$0xff]
    %v4813 = vld [vmem:[#allocation14 + $0x78] sm:$0xff]
    %v4814 = vld [vmem:[#allocation16] sm:$0x1]
    %v4816 = vlaneseq
    %v4817 = vshrl.u32 %v4816, 7
    %v4818 = vsub.s32 0, %v4817
    %v4819 = vrot.slane %v4814, %v4818
    %4821 = vmatprep.subr.mxu0 0.0
    %4822 = vmatpush1.msra.mxu0 %v4813
    %4823 = vmatprep.subr.mxu0 0.0
    %4824 = vmatpush1.msra.mxu0 %v4812
    %4825 = vmatprep.subr.mxu0 0.0
    %4826 = vmatpush1.msra.mxu0 %v4811
    %4827 = vmatprep.subr.mxu0 0.0
    %4828 = vmatpush1.msra.mxu0 %v4810
    %4829 = vmatprep.subr.mxu0 0.0
    %4830 = vmatpush1.msra.mxu0 %v4809
    %4831 = vmatprep.subr.mxu0 0.0
    %4832 = vmatpush1.msra.mxu0 %v4808
    %4833 = vmatprep.subr.mxu0 0.0
    %4834 = vmatpush1.msra.mxu0 %v4807
    %4835 = vmatprep.subr.mxu0 0.0
    %4836 = vmatpush1.msra.mxu0 %v4806
    %4837 = vmatprep.subr.mxu0 0.0
    %4838 = vmatpush1.msra.mxu0 %v4805
    %4839 = vmatprep.subr.mxu0 0.0
    %4840 = vmatpush1.msra.mxu0 %v4804
    %4841 = vmatprep.subr.mxu0 0.0
    %4842 = vmatpush1.msra.mxu0 %v4803
    %4843 = vmatprep.subr.mxu0 0.0
    %4844 = vmatpush1.msra.mxu0 %v4802
    %4845 = vmatprep.subr.mxu0 0.0
    %4846 = vmatpush1.msra.mxu0 %v4801
    %4847 = vmatprep.subr.mxu0 0.0
    %4848 = vmatpush1.msra.mxu0 %v4800
    %4849 = vmatprep.subr.mxu0 0.0
    %4850 = vmatpush1.msra.mxu0 %v4799
    %4851 = vmatprep.subr.mxu0 0.0
    %4852 = vmatpush1.msra.mxu0 %v4798
    %4853 = vmatprep.subr.mxu0 0.0
    %4854 = vmatpush2.msra.mxu0 0.0
    %4855 = vmatprep.subr.mxu0 0.0
    %4856 = vmatpush2.msra.mxu0 0.0
    %4857 = vmatprep.subr.mxu0 0.0
    %4858 = vmatpush2.msra.mxu0 0.0
    %4859 = vmatprep.subr.mxu0 0.0
    %4860 = vmatpush2.msra.mxu0 0.0
    %4861 = vmatprep.subr.mxu0 0.0
    %4862 = vmatpush2.msra.mxu0 0.0
    %4863 = vmatprep.subr.mxu0 0.0
    %4864 = vmatpush2.msra.mxu0 0.0
    %4865 = vmatprep.subr.mxu0 0.0
    %4866 = vmatpush2.msra.mxu0 0.0
    %4867 = vmatprep.subr.mxu0 0.0
    %4868 = vmatpush2.msra.mxu0 0.0
    %4869 = vmatprep.subr.mxu0 0.0
    %4870 = vmatpush2.msra.mxu0 0.0
    %4871 = vmatprep.subr.mxu0 0.0
    %4872 = vmatpush2.msra.mxu0 0.0
    %4873 = vmatprep.subr.mxu0 0.0
    %4874 = vmatpush2.msra.mxu0 0.0
    %4875 = vmatprep.subr.mxu0 0.0
    %4876 = vmatpush2.msra.mxu0 0.0
    %4877 = vmatprep.subr.mxu0 0.0
    %4878 = vmatpush2.msra.mxu0 0.0
    %4879 = vmatprep.subr.mxu0 0.0
    %4880 = vmatpush2.msra.mxu0 0.0
    %4881 = vmatprep.subr.mxu0 0.0
    %4882 = vmatpush2.msra.mxu0 0.0
    %4883 = vmatprep.subr.mxu0 0.0
    %4884 = vmatpush2.msra.mxu0 0.0
    %4885 = vmatprep.mubr.f32.mxu0 0.0
    %4886 = vmatmul.mubr.f32.gmra.mxu0 %v4797
    %v4887 = vpop.f32.mrf.mxu0
    %v4888 = vadd.f32 %v4819, %v4887
    %v4889 = vpop.f32.mrf.mxu0
    %4890 = vdwg.mxu0
    %v4891 = vmax.f32 %v4888, 0.0
    %4892 = vst [vmem:[#allocation17] sm:$0x3] %v4891
    // Predicated region
    $region66: #{conv_po_nsc_forward.1} parent=1 // pred_check
      _
    $region67: #{conv_po_nsc_forward.1} parent=1 // pred_check_branch
      %4894 = sbr.rel (0) target = $region69
    $region68: #{conv_po_nsc_forward.1} parent=1 // pred_region
      %s4896 = ssub.s32 32, 32
      %4897 = vsyncadd [#allocation7], %s4896
      %s4899 = sshll.u32 [#allocation17], 4
      %s4900 = int_to_ptr.vmem [resolvable:$true] %s4899
      %4902 = dma.vmem_to_hbm [thread:$0]  %s4900, 32, %s9, [#allocation7]
    $region69: #{conv_po_nsc_forward.1} parent=1 // pred_fallthru
      _
    // Predicated region
    $region70: #{conv_po_nsc_forward.1} parent=1 // pred_check
      _
    $region71: #{conv_po_nsc_forward.1} parent=1 // pred_check_branch
      %4904 = sbr.rel (0) target = $region73
    $region72: #{conv_po_nsc_forward.1} parent=1 // pred_region
      %4905 = dma.done [#allocation7], 32
    $region73: #{conv_po_nsc_forward.1} parent=1 // pred_fallthru
      _
    %4906 = vsyncpa [#allocation6], 1
    %4907 = vsyncpa [#allocation9], 1
    %4908 = vsyncpa [#allocation12], 1
    %4909 = vsyncpa [#allocation15], 1
    %4910 = vsyncpa [#allocation7], 1
  %4911 = vsyncmov [#allocation4]
  %s4912 = vpop.sfrf %4911
  %p4913 = scmp.eq.s32.totalorder %s4912, 0
  %p4914 = pneg %p4913
  %4916 = shalt.err (%p4914)

</llo_original>
